<compile_context>
chip_gen: v7x
topology: tpu7x:2x2x1
jax: 0.10.0
libtpu: 0.0.40
codegen_flags: <defaults>
</compile_context>

<pallas_src>
import functools

import jax
import jax.numpy as jnp
from jax import lax
from jax.experimental import pallas as pl
from jax.experimental.pallas import tpu as pltpu


def _round_up(a: int, b: int) -> int:
    return ((a + b - 1) // b) * b


def _cdiv(a: int, b: int) -> int:
    return (a + b - 1) // b


def _rbf_gram_kernel(x_ref, yt_ref, xsqc_ref, ysqc_ref, o_ref):
    """One (tn, tm) tile of exp(-||x_i - y_j||^2 / (2 sigma^2)).

    x_ref    : VMEM (tn, D)   (1/sigma^2) * X row tile (scale pre-folded)
    yt_ref   : VMEM (D, tm)   Y^T column tile (lane-dense, native MXU RHS)
    xsqc_ref : VMEM (tn, 1)   c * ||x_i||^2,  c = 1/(2 sigma^2)
    ysqc_ref : VMEM (1, tm)   c * ||y_j||^2
    o_ref    : VMEM (tn, tm)  output tile

    exp argument: -c*||x-y||^2 = 2c*<x,y> - c*||x||^2 - c*||y||^2; the 2c factor
    is folded into x_ref, so arg = dot - xsq - ysq, clamped to <= 0 (the true
    squared distance is non-negative; the clamp kills cancellation noise).
    """
    xy = jnp.dot(x_ref[...], yt_ref[...], preferred_element_type=jnp.float32)
    arg = jnp.minimum(xy - xsqc_ref[...] - ysqc_ref[...], 0.0)
    o_ref[...] = jnp.exp(arg).astype(o_ref.dtype)


def _rbf_gram_ridge_kernel(lam_ref, x_ref, yt_ref, xsqc_ref, ysqc_ref, o_ref):
    """Same as _rbf_gram_kernel plus a fused `+ lam` on the global diagonal.

    Used for K = gram(x, x) + lam * I so XLA never materializes eye(N) nor does
    an N^2 read-modify-write pass over K.
    """
    tn, tm = o_ref.shape
    xy = jnp.dot(x_ref[...], yt_ref[...], preferred_element_type=jnp.float32)
    arg = jnp.minimum(xy - xsqc_ref[...] - ysqc_ref[...], 0.0)
    val = jnp.exp(arg)
    o_ref[...] = val.astype(o_ref.dtype)

    i = pl.program_id(0)
    j = pl.program_id(1)

    # Only tiles whose [i*tn,(i+1)*tn) x [j*tm,(j+1)*tm) window intersects the
    # global diagonal pay for the iota mask; others keep the plain store above.
    @pl.when((i * tn < (j + 1) * tm) & (j * tm < (i + 1) * tn))
    def _():
        row = i * tn + lax.broadcasted_iota(jnp.int32, (tn, tm), 0)
        col = j * tm + lax.broadcasted_iota(jnp.int32, (tn, tm), 1)
        diag = jnp.where(row == col, lam_ref[0], 0.0)
        o_ref[...] = (val + diag).astype(o_ref.dtype)


def _pick_tiles(N: int, M: int, tn: int, tm: int):
    """Clamp tiles to the problem and keep >= 4 grid blocks when possible
    (>= 2 blocks per TensorCore on v7x; lets writeback overlap the next block)."""
    tn = min(tn, _round_up(N, 8))
    tm = min(tm, _round_up(M, 128))
    while _cdiv(N, tn) * _cdiv(M, tm) < 4 and tn > 256:
        tn = _round_up(max(256, tn // 2), 8)
    while _cdiv(N, tn) * _cdiv(M, tm) < 4 and tm > 256:
        tm = _round_up(max(256, tm // 2), 128)
    return tn, tm


@functools.partial(jax.jit, static_argnames=("tn", "tm", "out_dtype"))
def matern_gram(x, y, log_sigma, ridge=None, *, tn=512, tm=512,
                out_dtype=jnp.float32):
    """RBF / Matern(p=inf) gram matrix: exp(-||x_i - y_j||^2 / (2 sigma^2)).

    x: (N, D), y: (M, D) -> (N, M).  Arbitrary N, M via padding.
    ridge (optional, traced scalar): adds `ridge` on the global diagonal
    (fused +lam*I for the K path).  out_dtype=bfloat16 halves writeback bytes
    (exp stays f32; the cast happens only at the store) — use for G, not K.
    """
    N, D = x.shape
    M, Dy = y.shape
    assert D == Dy, "feature dims must match"

    x = x.astype(jnp.float32)
    y = y.astype(jnp.float32)
    log_sigma = jnp.asarray(log_sigma, jnp.float32)

    tn, tm = _pick_tiles(N, M, tn, tm)
    n_pad = _round_up(N, tn)
    m_pad = _round_up(M, tm)

    # Hoisted sigma math: 2c = 1/sigma^2 folded into X; row norms precomputed
    # and pre-scaled by c = 1/(2 sigma^2)  (O(N*D + M*D) once, outside kernel).
    two_c = jnp.exp(-2.0 * log_sigma)                      # 1/sigma^2
    c = 0.5 * two_c                                        # 1/(2 sigma^2)
    x_scaled = two_c * x                                   # (N, D)
    y_t = y.T                                              # (D, M) lane-dense RHS
    x_sq_c = c * jnp.sum(x * x, axis=-1, keepdims=True)    # (N, 1)
    y_sq_c = (c * jnp.sum(y * y, axis=-1))[None, :]        # (1, M)

    if n_pad != N:
        x_scaled = jnp.pad(x_scaled, ((0, n_pad - N), (0, 0)))
        x_sq_c = jnp.pad(x_sq_c, ((0, n_pad - N), (0, 0)))
    if m_pad != M:
        y_t = jnp.pad(y_t, ((0, 0), (0, m_pad - M)))
        y_sq_c = jnp.pad(y_sq_c, ((0, 0), (0, m_pad - M)))

    gi, gj = n_pad // tn, m_pad // tm
    out_itemsize = jnp.dtype(out_dtype).itemsize
    cost = pl.CostEstimate(
        flops=2 * n_pad * m_pad * D + 4 * n_pad * m_pad,
        transcendentals=n_pad * m_pad,
        bytes_accessed=(n_pad * m_pad * out_itemsize       # output writeback
                        + 4 * n_pad * (D + 1)              # X / x_sq (once)
                        + 4 * gi * m_pad * (D + 1)))       # Y^T / y_sq restream

    data_specs = [
        pl.BlockSpec((tn, D), lambda i, j: (i, 0)),        # (2c)*X tile
        pl.BlockSpec((D, tm), lambda i, j: (0, j)),        # Y^T tile (lane-dense)
        pl.BlockSpec((tn, 1), lambda i, j: (i, 0)),        # c*||x||^2
        pl.BlockSpec((1, tm), lambda i, j: (0, j)),        # c*||y||^2
    ]
    data_args = (x_scaled, y_t, x_sq_c, y_sq_c)

    if ridge is None:
        kernel = _rbf_gram_kernel
        in_specs = data_specs
        args = data_args
    else:
        kernel = _rbf_gram_ridge_kernel
        lam = jnp.reshape(jnp.asarray(ridge, jnp.float32), (1,))
        in_specs = [pl.BlockSpec(memory_space=pltpu.SMEM)] + data_specs
        args = (lam,) + data_args

    out = pl.pallas_call(
        kernel,
        out_shape=jax.ShapeDtypeStruct((n_pad, m_pad), out_dtype),
        grid=(gi, gj),
        in_specs=in_specs,
        out_specs=pl.BlockSpec((tn, tm), lambda i, j: (i, j)),
        compiler_params=pltpu.CompilerParams(
            dimension_semantics=("parallel", "parallel")),
        cost_estimate=cost,
    )(*args)

    return out[:N, :M]


def matern_gram_ref(x, y, log_sigma):
    """Pure-JAX mirror of the PyTorch 'stable' l2_distance + exp path."""
    fk = jnp.sum((x[:, None, :] - y[None, :, :]) ** 2, axis=-1)
    sigma = jnp.exp(jnp.asarray(log_sigma, jnp.float32))
    return jnp.exp(-fk / (2.0 * sigma ** 2))


def estimate_median_distance(x, max_points=256):
    """JAX version of estimate_median_distance (median pairwise distance)."""
    xs = x[:max_points]
    d2 = jnp.sum((xs[:, None, :] - xs[None, :, :]) ** 2, axis=-1)
    iu, ju = jnp.triu_indices(xs.shape[0], k=1)
    return jnp.median(jnp.sqrt(d2[iu, ju]))


def krr_forward(x_query, x_train, out_train, log_sigma, log_lam,
                *, g_dtype=jnp.bfloat16):
    """KernelRidgeRegressor.forward_krr for one step k (gram matrices in Pallas).

    G = kernel(x_train, x_query)          (bf16 store: halves HBM writeback)
    K = kernel(x_train, x_train) + lam*I  (ridge fused in-kernel; f32 for solve)
    return solve(K, G).T @ out_train
    """
    G = matern_gram(x_train, x_query, log_sigma, out_dtype=g_dtype)
    K = matern_gram(x_train, x_train, log_sigma,
                    ridge=jnp.exp(jnp.asarray(log_lam, jnp.float32)))
    # TODO(synk): torch.linalg.solve and the PolynomialRegressor linear model
    # (plus the host-side fit()/Adam loop) have no clean Pallas equivalent; the
    # ridge solve stays in XLA and the linear-model term is omitted.
    return jnp.linalg.solve(K, G.astype(jnp.float32)).T @ out_train


def krr_forward_ref(x_query, x_train, out_train, log_sigma, log_lam,
                    g_dtype=jnp.float32):
    n = x_train.shape[0]
    G = matern_gram_ref(x_train, x_query, log_sigma)
    G = G.astype(g_dtype).astype(jnp.float32)
    K = matern_gram_ref(x_train, x_train, log_sigma)
    K = K + jnp.exp(jnp.asarray(log_lam, jnp.float32)) * jnp.eye(n, dtype=jnp.float32)
    return jnp.linalg.solve(K, G).T @ out_train


if __name__ == "__main__":
    key = jax.random.PRNGKey(0)
    kx, kq, ko = jax.random.split(key, 3)

    N_TRAIN, N_QUERY, D, Y_DIM = 1024, 256, 32, 4
    x_train = jax.random.normal(kx, (N_TRAIN, D), dtype=jnp.float32)
    x_query = jax.random.normal(kq, (N_QUERY, D), dtype=jnp.float32)
    out_train = jax.random.normal(ko, (N_TRAIN, Y_DIM), dtype=jnp.float32)

    # fit(): log_sigma <- log(median pairwise distance of x_train); lam fixed.
    log_sigma = jnp.log(estimate_median_distance(x_train))
    log_lam = jnp.asarray(0.0, jnp.float32)                # lam = 1.0
    lam = jnp.exp(log_lam)

    # 1) Plain gram kernel, aligned square shapes (2x2 grid of 512x512 tiles).
    G_tt = jax.block_until_ready(matern_gram(x_train, x_train, log_sigma))
    ref_tt = matern_gram_ref(x_train, x_train, log_sigma)
    assert G_tt.shape == (N_TRAIN, N_TRAIN)
    assert jnp.allclose(G_tt, ref_tt, atol=1e-5, rtol=1e-5), (
        f"gram max abs err {jnp.max(jnp.abs(G_tt - ref_tt))}")

    # 2) Fused-ridge gram (K path), aligned and padded/odd shapes.
    K_tt = jax.block_until_ready(
        matern_gram(x_train, x_train, log_sigma, ridge=lam))
    ref_K = ref_tt + lam * jnp.eye(N_TRAIN, dtype=jnp.float32)
    assert jnp.allclose(K_tt, ref_K, atol=1e-5, rtol=1e-5), (
        f"ridge gram max abs err {jnp.max(jnp.abs(K_tt - ref_K))}")

    K_odd = jax.block_until_ready(
        matern_gram(x_train[:1000], x_train[:1000], log_sigma, ridge=lam))
    ref_K_odd = (matern_gram_ref(x_train[:1000], x_train[:1000], log_sigma)
                 + lam * jnp.eye(1000, dtype=jnp.float32))
    assert K_odd.shape == (1000, 1000)
    assert jnp.allclose(K_odd, ref_K_odd, atol=1e-5, rtol=1e-5), (
        f"ridge gram (padded) max abs err {jnp.max(jnp.abs(K_odd - ref_K_odd))}")

    # 3) Rectangular, non-tile-aligned + bfloat16 output (G path).
    G_bf16 = jax.block_until_ready(
        matern_gram(x_train[:1000], x_query[:200], log_sigma,
                    out_dtype=jnp.bfloat16))
    ref_odd = matern_gram_ref(x_train[:1000], x_query[:200], log_sigma)
    assert G_bf16.shape == (1000, 200) and G_bf16.dtype == jnp.bfloat16
    assert jnp.allclose(G_bf16.astype(jnp.float32), ref_odd,
                        atol=1e-2, rtol=1e-2), (
        f"bf16 gram max abs err "
        f"{jnp.max(jnp.abs(G_bf16.astype(jnp.float32) - ref_odd))}")

    # 4) forward_krr, f32-G path: tight check vs the pure-JAX reference.
    krr_f32 = jax.block_until_ready(
        krr_forward(x_query, x_train, out_train, log_sigma, log_lam,
                    g_dtype=jnp.float32))
    krr_ref_f32 = krr_forward_ref(x_query, x_train, out_train, log_sigma, log_lam)
    assert krr_f32.shape == (N_QUERY, Y_DIM)
    rel_err = (jnp.max(jnp.abs(krr_f32 - krr_ref_f32))
               / (jnp.max(jnp.abs(krr_ref_f32)) + 1e-6))
    assert rel_err < 1e-2, f"krr (f32 G) rel err {rel_err}"

    # 5) forward_krr, production bf16-G path vs a bf16-quantized-G reference.
    krr_bf16 = jax.block_until_ready(
        krr_forward(x_query, x_train, out_train, log_sigma, log_lam))
    krr_ref_bf16 = krr_forward_ref(x_query, x_train, out_train, log_sigma,
                                   log_lam, g_dtype=jnp.bfloat16)
    assert krr_bf16.shape == (N_QUERY, Y_DIM)
    assert bool(jnp.all(jnp.isfinite(krr_bf16)))
    rel_err_b = (jnp.max(jnp.abs(krr_bf16 - krr_ref_bf16))
                 / (jnp.max(jnp.abs(krr_ref_bf16)) + 1e-6))
    assert rel_err_b < 2e-2, f"krr (bf16 G) rel err {rel_err_b}"

    print("KERNEL_OK")
</pallas_src>

<mosaic_0001>
module attributes {stable_mosaic.version = 11 : i64} {
  func.func @_rbf_gram_kernel(%arg0: i32, %arg1: i32, %arg2: memref<512x32xf32, #tpu.memory_space<vmem>>, %arg3: memref<32x512xf32, #tpu.memory_space<vmem>>, %arg4: memref<512x1xf32, #tpu.memory_space<vmem>>, %arg5: memref<1x512xf32, #tpu.memory_space<vmem>>, %arg6: memref<512x512xf32, #tpu.memory_space<vmem>>) attributes {dimension_semantics = [#tpu.dimension_semantics<parallel>, #tpu.dimension_semantics<parallel>], iteration_bounds = array<i64: 2, 2>, scalar_prefetch = 0 : i64, scratch_operands = 0 : i64, tpu.core_type = #tpu.core_type<tc>, window_params = [{transform_indices = @transform_0, window_bounds = array<i64: 512, 32>}, {transform_indices = @transform_1, window_bounds = array<i64: 32, 512>}, {transform_indices = @transform_2, window_bounds = array<i64: 512, 1>}, {transform_indices = @transform_3, window_bounds = array<i64: 1, 512>}, {transform_indices = @transform_4, window_bounds = array<i64: 512, 512>}]} {
    %c0 = arith.constant 0 : index
    %c0_0 = arith.constant 0 : index
    %0 = vector.load %arg2[%c0, %c0_0] : memref<512x32xf32, #tpu.memory_space<vmem>>, vector<512x32xf32>
    %c0_1 = arith.constant 0 : index
    %c0_2 = arith.constant 0 : index
    %1 = vector.load %arg3[%c0_1, %c0_2] : memref<32x512xf32, #tpu.memory_space<vmem>>, vector<32x512xf32>
    %cst = arith.constant dense<0.000000e+00> : vector<512x512xf32>
    %2 = tpu.matmul %0, %1, %cst {dimension_numbers = #tpu.dot_dimension_numbers<[1], [0], [0], [1], [0, 0, 1, 1], [], []>} : vector<512x32xf32>, vector<32x512xf32>, vector<512x512xf32> -> vector<512x512xf32>
    %c0_3 = arith.constant 0 : index
    %c0_4 = arith.constant 0 : index
    %3 = vector.load %arg4[%c0_3, %c0_4] : memref<512x1xf32, #tpu.memory_space<vmem>>, vector<512x1xf32>
    %4 = vector.broadcast %3 : vector<512x1xf32> to vector<512x512xf32>
    %5 = arith.subf %2, %4 : vector<512x512xf32>
    %c0_5 = arith.constant 0 : index
    %c0_6 = arith.constant 0 : index
    %6 = vector.load %arg5[%c0_5, %c0_6] : memref<1x512xf32, #tpu.memory_space<vmem>>, vector<1x512xf32>
    %7 = vector.broadcast %6 : vector<1x512xf32> to vector<512x512xf32>
    %8 = arith.subf %5, %7 : vector<512x512xf32>
    %cst_7 = arith.constant 0.000000e+00 : f32
    %9 = vector.broadcast %cst_7 : f32 to vector<512x512xf32>
    %10 = arith.minimumf %8, %9 : vector<512x512xf32>
    %11 = math.exp %10 : vector<512x512xf32>
    %c0_8 = arith.constant 0 : index
    %c0_9 = arith.constant 0 : index
    %12 = vector.load %arg6[%c0_8, %c0_9] : memref<512x512xf32, #tpu.memory_space<vmem>>, vector<512x512xf32>
    tpu.vector_store %arg6[%c0_8, %c0_9], %11 {strides = array<i32>} : memref<512x512xf32, #tpu.memory_space<vmem>>, vector<512x512xf32>,
    return
  }
  func.func @transform_0(%arg0: i32, %arg1: i32) -> (i32, i32) {
    %c0_i32 = arith.constant 0 : i32
    %c0_i32_0 = arith.constant 0 : i32
    return %arg0, %c0_i32 : i32, i32
  }
  func.func @transform_1(%arg0: i32, %arg1: i32) -> (i32, i32) {
    %c0_i32 = arith.constant 0 : i32
    %c0_i32_0 = arith.constant 0 : i32
    return %c0_i32, %arg1 : i32, i32
  }
  func.func @transform_2(%arg0: i32, %arg1: i32) -> (i32, i32) {
    %c0_i32 = arith.constant 0 : i32
    %c0_i32_0 = arith.constant 0 : i32
    return %arg0, %c0_i32 : i32, i32
  }
  func.func @transform_3(%arg0: i32, %arg1: i32) -> (i32, i32) {
    %c0_i32 = arith.constant 0 : i32
    %c0_i32_0 = arith.constant 0 : i32
    return %c0_i32, %arg1 : i32, i32
  }
  func.func @transform_4(%arg0: i32, %arg1: i32) -> (i32, i32) {
    %c0_i32 = arith.constant 0 : i32
    return %arg0, %arg1 : i32, i32
  }
}

</mosaic_0001>

<llo_original>
// kernel: matern_gram.1
$region0: #{matern_gram.1}
  #allocation0 [shape = 'u32[]', space=smem, size = 0x4, offset = 0x4, fixed_abs, tag = 'smem constant byte address 0x4 - core index']
  #allocation1 [shape = 'u32[144,128]{1,0:T(1,128)}', space=vmem, size = 0x12000, scoped, tag = 'internal scratch']
  %s0 = inlined_call_operand.vmem [shape: f32[1024,32], index: 0, kind: input, shape index: {}]
  %s1 = inlined_call_operand.hbm [shape: f32[32,1024], index: 1, kind: input, shape index: {}]
  %s2 = inlined_call_operand.vmem [shape: f32[1024,1], index: 2, kind: input, shape index: {}]
  %s3 = inlined_call_operand.vmem [shape: f32[1,1024], index: 3, kind: input, shape index: {}]
  %s4 = inlined_call_operand.hbm [shape: f32[1024,1024], index: 4, kind: output, shape index: {}]
  %s5 = sld [smem:[#allocation0]]
  $region53: #{matern_gram.1} parent=0
    _
  %s7 = ssub.s32 1, %s5
  %s8 = scalar_select 0, %s7, %s5
  $region1: #{matern_gram.1} parent=0
    #allocation2 [shape = 'u8[131072]{0}', space=vmem, size = 0x20000, scoped, tag = 'input window, operand 1']
    #allocation3 [shape = 's32[2]{0}', space=sflag, size = 0x8, scoped, tag = 'scoped memory for matern_gram.1']
    #allocation4 [shape = 's32[2]{0}', space=sflag, size = 0x8, scoped, tag = 'scoped memory for matern_gram.1']
    #allocation5 [shape = 'u8[2097152]{0}', space=vmem, size = 0x200000, scoped, tag = 'output window, operand 0']
    %9 = vsyncpa [#allocation3], 0
    %s10 = scalar_lea.sflag [#allocation3], 1
    %11 = vsyncpa %s10, 0
    %12 = vsyncpa [#allocation4], 0
    %s13 = scalar_lea.sflag [#allocation4], 1
    %14 = vsyncpa %s13, 0
    loop: start=0, step=1, limit=6
    $region2: #{matern_gram.1} parent=1 // loop_pre_header
      _
    $region3: #{matern_gram.1} parent=1 // loop_header
      %s16 = sphi 0, %s20
      %p17 = scmp.ge.s32.totalorder %s16, 6
      %s23 = sphi 0, %s35
      %s24 = sphi 0, %s31
      %s25 = sphi 0, %s23
      %s26 = sphi 0, %s24
      %s27 = sphi 0, %s25
      %s28 = sphi 0, %s26
      %s38 = sphi 0, %s40
      %s41 = sphi 0, %s38
      %s42 = sphi 0, %s41
      %s58 = sphi 0, %s42
      %s64 = sphi 0, %s66
      %s67 = sphi 0, %s64
      %s68 = sphi 0, %s67
      %s84 = sphi 0, %s68
      %s90 = sphi 0, %s92
      %s93 = sphi 0, %s90
      %s94 = sphi 0, %s93
      %s110 = sphi 0, %s94
      %s116 = sphi 0, %s118
      %s119 = sphi 0, %s116
      %s120 = sphi 0, %s119
      %s136 = sphi 0, %s120
      %s144 = sphi 0, %s146
      %s147 = sphi 0, %s144
      %s148 = sphi 0, %s147
      %s164 = sphi 0, %s148
    $region4: #{matern_gram.1} parent=1 // loop_header_branch
      %19 = sbr.rel (%p17) target = $region8
    $region5: #{matern_gram.1} parent=1 // loop_body
      %s21 = ssub.s32 %s16, 1
      %s22 = ssub.s32 %s16, 2
      %s29 = sadd.s32 1, %s24
      %p30 = scmp.ge.s32.totalorder %s29, 2
      %s31 = scalar_select %p30, 0, %s29
      %s32 = sadd.s32 1, %s23
      %s33 = scalar_select %p30, %s32, %s23
      %p34 = scmp.ge.s32.totalorder %s33, 2
      %s35 = scalar_select %p34, 0, %s33
      %s36 = ssub.s32 %s23, %s35
      %p37 = scmp.eq.s32.totalorder %s36, 0
      %s39 = sadd.s32 %s38, 1
      %s40 = scalar_select %p37, %s38, %s39
      %p43 = pneg %p37
      %p44 = scmp.eq.s32.totalorder %s16, 3
      %p45 = por %p43, %p44
      %p46 = scmp.ne.s32.totalorder %s38, %s41
      %p47 = scmp.eq.s32.totalorder %s16, 0
      %p48 = por %p46, %p47
      %p49 = scmp.ne.s32.totalorder %s38, %s41
      %p50 = scmp.eq.s32.totalorder %s21, 3
      %p51 = por %p49, %p50
      %p52 = scmp.ne.s32.totalorder %s41, %s42
      %p53 = scmp.eq.s32.totalorder %s21, 0
      %p54 = por %p52, %p53
      %p55 = scmp.ne.s32.totalorder %s41, %s42
      %p56 = scmp.eq.s32.totalorder %s22, 3
      %p57 = por %p55, %p56
      %p59 = scmp.ne.s32.totalorder %s42, %s58
      %p60 = scmp.eq.s32.totalorder %s22, 0
      %p61 = por %p59, %p60
      %s62 = ssub.s32 %s24, %s31
      %p63 = scmp.eq.s32.totalorder %s62, 0
      %s65 = sadd.s32 %s64, 1
      %s66 = scalar_select %p63, %s64, %s65
      %p69 = pneg %p63
      %p70 = scmp.eq.s32.totalorder %s16, 3
      %p71 = por %p69, %p70
      %p72 = scmp.ne.s32.totalorder %s64, %s67
      %p73 = scmp.eq.s32.totalorder %s16, 0
      %p74 = por %p72, %p73
      %p75 = scmp.ne.s32.totalorder %s64, %s67
      %p76 = scmp.eq.s32.totalorder %s21, 3
      %p77 = por %p75, %p76
      %p78 = scmp.ne.s32.totalorder %s67, %s68
      %p79 = scmp.eq.s32.totalorder %s21, 0
      %p80 = por %p78, %p79
      %p81 = scmp.ne.s32.totalorder %s67, %s68
      %p82 = scmp.eq.s32.totalorder %s22, 3
      %p83 = por %p81, %p82
      %p85 = scmp.ne.s32.totalorder %s68, %s84
      %p86 = scmp.eq.s32.totalorder %s22, 0
      %p87 = por %p85, %p86
      %s88 = ssub.s32 %s23, %s35
      %p89 = scmp.eq.s32.totalorder %s88, 0
      %s91 = sadd.s32 %s90, 1
      %s92 = scalar_select %p89, %s90, %s91
      %p95 = pneg %p89
      %p96 = scmp.eq.s32.totalorder %s16, 3
      %p97 = por %p95, %p96
      %p98 = scmp.ne.s32.totalorder %s90, %s93
      %p99 = scmp.eq.s32.totalorder %s16, 0
      %p100 = por %p98, %p99
      %p101 = scmp.ne.s32.totalorder %s90, %s93
      %p102 = scmp.eq.s32.totalorder %s21, 3
      %p103 = por %p101, %p102
      %p104 = scmp.ne.s32.totalorder %s93, %s94
      %p105 = scmp.eq.s32.totalorder %s21, 0
      %p106 = por %p104, %p105
      %p107 = scmp.ne.s32.totalorder %s93, %s94
      %p108 = scmp.eq.s32.totalorder %s22, 3
      %p109 = por %p107, %p108
      %p111 = scmp.ne.s32.totalorder %s94, %s110
      %p112 = scmp.eq.s32.totalorder %s22, 0
      %p113 = por %p111, %p112
      %s114 = ssub.s32 %s24, %s31
      %p115 = scmp.eq.s32.totalorder %s114, 0
      %s117 = sadd.s32 %s116, 1
      %s118 = scalar_select %p115, %s116, %s117
      %p121 = pneg %p115
      %p122 = scmp.eq.s32.totalorder %s16, 3
      %p123 = por %p121, %p122
      %p124 = scmp.ne.s32.totalorder %s116, %s119
      %p125 = scmp.eq.s32.totalorder %s16, 0
      %p126 = por %p124, %p125
      %p127 = scmp.ne.s32.totalorder %s116, %s119
      %p128 = scmp.eq.s32.totalorder %s21, 3
      %p129 = por %p127, %p128
      %p130 = scmp.ne.s32.totalorder %s119, %s120
      %p131 = scmp.eq.s32.totalorder %s21, 0
      %p132 = por %p130, %p131
      %p133 = scmp.ne.s32.totalorder %s119, %s120
      %p134 = scmp.eq.s32.totalorder %s22, 3
      %p135 = por %p133, %p134
      %p137 = scmp.ne.s32.totalorder %s120, %s136
      %p138 = scmp.eq.s32.totalorder %s22, 0
      %p139 = por %p137, %p138
      %s140 = ssub.s32 %s23, %s35
      %s141 = ssub.s32 %s24, %s31
      %s142 = sor.u32 %s140, %s141
      %p143 = scmp.eq.s32.totalorder %s142, 0
      %s145 = sadd.s32 %s144, 1
      %s146 = scalar_select %p143, %s144, %s145
      %p149 = pneg %p143
      %p150 = scmp.eq.s32.totalorder %s16, 3
      %p151 = por %p149, %p150
      %p152 = scmp.ne.s32.totalorder %s144, %s147
      %p153 = scmp.eq.s32.totalorder %s16, 0
      %p154 = por %p152, %p153
      %p155 = scmp.ne.s32.totalorder %s144, %s147
      %p156 = scmp.eq.s32.totalorder %s21, 3
      %p157 = por %p155, %p156
      %p158 = scmp.ne.s32.totalorder %s147, %s148
      %p159 = scmp.eq.s32.totalorder %s21, 0
      %p160 = por %p158, %p159
      %p161 = scmp.ne.s32.totalorder %s147, %s148
      %p162 = scmp.eq.s32.totalorder %s22, 3
      %p163 = por %p161, %p162
      %p165 = scmp.ne.s32.totalorder %s148, %s164
      %p166 = scmp.eq.s32.totalorder %s22, 0
      %p167 = por %p165, %p166
      %p168 = scmp.le.s32.totalorder 1, %s16
      %p169 = scmp.lt.s32.totalorder %s16, 5
      %p170 = pnand %p168, %p169
      %p171 = pneg %p170
      // Predicated region
      $region9: #{matern_gram.1} parent=5 // pred_check
        _
      $region10: #{matern_gram.1} parent=5 // pred_check_branch
        %173 = sbr.rel (%p170) target = $region12
      $region11: #{matern_gram.1} parent=5 // pred_region
        %s174 = ssub.s32 %s16, 1
      $region12: #{matern_gram.1} parent=5 // pred_fallthru
        _
      %p175 = scmp.lt.s32.totalorder %s16, 4
      // Predicated region
      $region13: #{matern_gram.1} parent=5 // pred_check
        %p176 = pneg %p175
      $region14: #{matern_gram.1} parent=5 // pred_check_branch
        %178 = sbr.rel (%p176) target = $region16
      $region15: #{matern_gram.1} parent=5 // pred_region
        // Predicated region
        $region17: #{matern_gram.1} parent=15 // pred_check
          %p179 = pneg %p48
        $region18: #{matern_gram.1} parent=15 // pred_check_branch
          %181 = sbr.rel (%p179) target = $region20
        $region19: #{matern_gram.1} parent=15 // pred_region
          %s182 = smul.u32 64, %s23
          %p183 = scmp.lt.s32.totalorder %s182, 127
          %s184 = scalar_select %p183, %s182, 127
          %s185 = smul.addr %s184, 8
          %s186 = scalar_lea.vmem %s0, %s185
          %s187 = smul.u32 64, %s23
        $region20: #{matern_gram.1} parent=15 // pred_fallthru
          _
        // Predicated region
        $region21: #{matern_gram.1} parent=15 // pred_check
          %p188 = pneg %p74
        $region22: #{matern_gram.1} parent=15 // pred_check_branch
          %190 = sbr.rel (%p188) target = $region24
        $region23: #{matern_gram.1} parent=15 // pred_region
          %s191 = sand.u32 %s64, 1
          %s192 = scalar_lea.sflag [#allocation3], %s191
          %s193 = sand.u32 %s64, 1
          %s194 = smul.addr %s193, 128
          %s195 = scalar_lea.vmem [#allocation2], %s194
          %s196 = smul.u32 4, %s24
          %s198 = ssub.s32 2048, 2048
          %199 = vsyncadd %s192, %s198
          %s200 = smul.addr %s196, 128
          %s201 = scalar_lea.hbm %s1, %s200
          %s202 = sshll.u32 %s195, 4
          %s203 = int_to_ptr.vmem [resolvable:$true] %s202
          %208 = dma.hbm_to_vmem [thread:$0]  %s201, 2048, %s203, %s192, 1024, 512, 32
        $region24: #{matern_gram.1} parent=15 // pred_fallthru
          _
        // Predicated region
        $region25: #{matern_gram.1} parent=15 // pred_check
          %p209 = pneg %p100
        $region26: #{matern_gram.1} parent=15 // pred_check_branch
          %211 = sbr.rel (%p209) target = $region28
        $region27: #{matern_gram.1} parent=15 // pred_region
          %s212 = smul.u32 64, %s23
          %p213 = scmp.lt.s32.totalorder %s212, 127
          %s214 = scalar_select %p213, %s212, 127
          %s215 = smul.addr %s214, 8
          %s216 = scalar_lea.vmem %s2, %s215
          %s217 = smul.u32 64, %s23
        $region28: #{matern_gram.1} parent=15 // pred_fallthru
          _
        // Predicated region
        $region29: #{matern_gram.1} parent=15 // pred_check
          %p218 = pneg %p126
        $region30: #{matern_gram.1} parent=15 // pred_check_branch
          %220 = sbr.rel (%p218) target = $region32
        $region31: #{matern_gram.1} parent=15 // pred_region
          %s221 = smul.u32 4, %s24
          %p222 = scmp.lt.s32.totalorder %s221, 7
          %s223 = scalar_select %p222, %s221, 7
          %s224 = scalar_lea.vmem %s3, %s223
          %s225 = smul.u32 4, %s24
        $region32: #{matern_gram.1} parent=15 // pred_fallthru
          _
      $region16: #{matern_gram.1} parent=5 // pred_fallthru
        _
      %p226 = scmp.le.s32.totalorder 1, %s16
      %p227 = scmp.lt.s32.totalorder %s16, 5
      %p228 = pnand %p226, %p227
      %p229 = pneg %p228
      // Predicated region
      $region33: #{matern_gram.1} parent=5 // pred_check
        _
      $region34: #{matern_gram.1} parent=5 // pred_check_branch
        %231 = sbr.rel (%p228) target = $region36
      $region35: #{matern_gram.1} parent=5 // pred_region
        %s232 = ssub.s32 %s16, 1
        %s233 = sand.u32 %s67, 1
        %s234 = scalar_lea.sflag [#allocation3], %s233
        %s235 = sand.u32 %s67, 1
        %s236 = smul.addr %s235, 128
        %s237 = scalar_lea.vmem [#allocation2], %s236
        // Predicated region
        $region37: #{matern_gram.1} parent=35 // pred_check
          %p238 = pneg %p80
        $region38: #{matern_gram.1} parent=35 // pred_check_branch
          %240 = sbr.rel (%p238) target = $region40
        $region39: #{matern_gram.1} parent=35 // pred_region
          %241 = dma.done %s234, 2048
        $region40: #{matern_gram.1} parent=35 // pred_fallthru
          _
        %s242 = smul.u32 64, %s25
        %p243 = scmp.lt.s32.totalorder %s242, 127
        %s244 = scalar_select %p243, %s242, 127
        %s245 = smul.addr %s244, 8
        %s246 = scalar_lea.vmem %s0, %s245
        %p247 = pneg %p54
        %p248 = pneg %p51
        %s249 = sand.u32 %s67, 1
        %s250 = scalar_lea.sflag [#allocation3], %s249
        %s251 = sand.u32 %s67, 1
        %s252 = smul.addr %s251, 128
        %s253 = scalar_lea.vmem [#allocation2], %s252
        %p254 = pneg %p80
        %p255 = pneg %p77
        %s256 = smul.u32 64, %s25
        %p257 = scmp.lt.s32.totalorder %s256, 127
        %s258 = scalar_select %p257, %s256, 127
        %s259 = smul.addr %s258, 8
        %s260 = scalar_lea.vmem %s2, %s259
        %p261 = pneg %p106
        %p262 = pneg %p103
        %s263 = smul.u32 4, %s26
        %p264 = scmp.lt.s32.totalorder %s263, 7
        %s265 = scalar_select %p264, %s263, 7
        %s266 = scalar_lea.vmem %s3, %s265
        %p267 = pneg %p132
        %p268 = pneg %p129
        %p269 = pneg %p160
        %p270 = pneg %p157
        %s271 = sand.u32 %s147, 1
        %s272 = scalar_lea.sflag [#allocation4], %s271
        %s273 = sand.u32 %s147, 1
        %s274 = smul.addr %s273, 2048
        %s275 = scalar_lea.vmem [#allocation5], %s274
        %s276 = smul.u32 64, %s25
        %p277 = scmp.lt.s32.totalorder %s276, 127
        %s278 = scalar_select %p277, %s276, 127
        %s279 = smul.addr %s278, 8
        %s280 = scalar_lea.vmem %s0, %s279
        %s281 = smul.u32 64, %s25
        %s282 = smul.u32 4, %s26
        %s283 = smul.u32 64, %s25
        %p284 = scmp.lt.s32.totalorder %s283, 127
        %s285 = scalar_select %p284, %s283, 127
        %s286 = smul.addr %s285, 8
        %s287 = scalar_lea.vmem %s2, %s286
        %s288 = smul.u32 64, %s25
        %s289 = smul.u32 4, %s26
        %p290 = scmp.lt.s32.totalorder %s289, 7
        %s291 = scalar_select %p290, %s289, 7
        %s292 = scalar_lea.vmem %s3, %s291
        %s293 = smul.u32 4, %s26
        %s294 = smul.u32 64, %s25
        %s295 = smul.u32 4, %s26
        %v296 = vld [vmem:[%s280] sm:$0xff]
        %v297 = vld [vmem:[%s280 + $0x8] sm:$0xff]
        %v298 = vld [vmem:[%s280 + $0x10] sm:$0xff]
        %v299 = vld [vmem:[%s280 + $0x18] sm:$0xff]
        %v300 = vld [vmem:[%s280 + $0x20] sm:$0xff]
        %v301 = vld [vmem:[%s280 + $0x28] sm:$0xff]
        %v302 = vld [vmem:[%s280 + $0x30] sm:$0xff]
        %v303 = vld [vmem:[%s280 + $0x38] sm:$0xff]
        %v304 = vld [vmem:[%s280 + $0x40] sm:$0xff]
        %v305 = vld [vmem:[%s280 + $0x48] sm:$0xff]
        %v306 = vld [vmem:[%s280 + $0x50] sm:$0xff]
        %v307 = vld [vmem:[%s280 + $0x58] sm:$0xff]
        %v308 = vld [vmem:[%s280 + $0x60] sm:$0xff]
        %v309 = vld [vmem:[%s280 + $0x68] sm:$0xff]
        %v310 = vld [vmem:[%s280 + $0x70] sm:$0xff]
        %v311 = vld [vmem:[%s280 + $0x78] sm:$0xff]
        %v312 = vld [vmem:[%s280 + $0x80] sm:$0xff]
        %v313 = vld [vmem:[%s280 + $0x88] sm:$0xff]
        %v314 = vld [vmem:[%s280 + $0x90] sm:$0xff]
        %v315 = vld [vmem:[%s280 + $0x98] sm:$0xff]
        %v316 = vld [vmem:[%s280 + $0xa0] sm:$0xff]
        %v317 = vld [vmem:[%s280 + $0xa8] sm:$0xff]
        %v318 = vld [vmem:[%s280 + $0xb0] sm:$0xff]
        %v319 = vld [vmem:[%s280 + $0xb8] sm:$0xff]
        %v320 = vld [vmem:[%s280 + $0xc0] sm:$0xff]
        %v321 = vld [vmem:[%s280 + $0xc8] sm:$0xff]
        %v322 = vld [vmem:[%s280 + $0xd0] sm:$0xff]
        %v323 = vld [vmem:[%s280 + $0xd8] sm:$0xff]
        %v324 = vld [vmem:[%s280 + $0xe0] sm:$0xff]
        %v325 = vld [vmem:[%s280 + $0xe8] sm:$0xff]
        %v326 = vld [vmem:[%s280 + $0xf0] sm:$0xff]
        %v327 = vld [vmem:[%s280 + $0xf8] sm:$0xff]
        %v328 = vld [vmem:[%s280 + $0x100] sm:$0xff]
        %v329 = vld [vmem:[%s280 + $0x108] sm:$0xff]
        %v330 = vld [vmem:[%s280 + $0x110] sm:$0xff]
        %v331 = vld [vmem:[%s280 + $0x118] sm:$0xff]
        %v332 = vld [vmem:[%s280 + $0x120] sm:$0xff]
        %v333 = vld [vmem:[%s280 + $0x128] sm:$0xff]
        %v334 = vld [vmem:[%s280 + $0x130] sm:$0xff]
        %v335 = vld [vmem:[%s280 + $0x138] sm:$0xff]
        %v336 = vld [vmem:[%s280 + $0x140] sm:$0xff]
        %v337 = vld [vmem:[%s280 + $0x148] sm:$0xff]
        %v338 = vld [vmem:[%s280 + $0x150] sm:$0xff]
        %v339 = vld [vmem:[%s280 + $0x158] sm:$0xff]
        %v340 = vld [vmem:[%s280 + $0x160] sm:$0xff]
        %v341 = vld [vmem:[%s280 + $0x168] sm:$0xff]
        %v342 = vld [vmem:[%s280 + $0x170] sm:$0xff]
        %v343 = vld [vmem:[%s280 + $0x178] sm:$0xff]
        %v344 = vld [vmem:[%s280 + $0x180] sm:$0xff]
        %v345 = vld [vmem:[%s280 + $0x188] sm:$0xff]
        %v346 = vld [vmem:[%s280 + $0x190] sm:$0xff]
        %v347 = vld [vmem:[%s280 + $0x198] sm:$0xff]
        %v348 = vld [vmem:[%s280 + $0x1a0] sm:$0xff]
        %v349 = vld [vmem:[%s280 + $0x1a8] sm:$0xff]
        %v350 = vld [vmem:[%s280 + $0x1b0] sm:$0xff]
        %v351 = vld [vmem:[%s280 + $0x1b8] sm:$0xff]
        %v352 = vld [vmem:[%s280 + $0x1c0] sm:$0xff]
        %v353 = vld [vmem:[%s280 + $0x1c8] sm:$0xff]
        %v354 = vld [vmem:[%s280 + $0x1d0] sm:$0xff]
        %v355 = vld [vmem:[%s280 + $0x1d8] sm:$0xff]
        %v356 = vld [vmem:[%s280 + $0x1e0] sm:$0xff]
        %v357 = vld [vmem:[%s280 + $0x1e8] sm:$0xff]
        %v358 = vld [vmem:[%s280 + $0x1f0] sm:$0xff]
        %v359 = vld [vmem:[%s280 + $0x1f8] sm:$0xff]
        %v360 = vld [vmem:[%s237] sm:$0xff]
        %v361 = vld [vmem:[%s237 + $0x8] sm:$0xff]
        %v362 = vld [vmem:[%s237 + $0x10] sm:$0xff]
        %v363 = vld [vmem:[%s237 + $0x18] sm:$0xff]
        %v364 = vld [vmem:[%s237 + $0x20] sm:$0xff]
        %v365 = vld [vmem:[%s237 + $0x28] sm:$0xff]
        %v366 = vld [vmem:[%s237 + $0x30] sm:$0xff]
        %v367 = vld [vmem:[%s237 + $0x38] sm:$0xff]
        %v368 = vld [vmem:[%s237 + $0x40] sm:$0xff]
        %v369 = vld [vmem:[%s237 + $0x48] sm:$0xff]
        %v370 = vld [vmem:[%s237 + $0x50] sm:$0xff]
        %v371 = vld [vmem:[%s237 + $0x58] sm:$0xff]
        %v372 = vld [vmem:[%s237 + $0x60] sm:$0xff]
        %v373 = vld [vmem:[%s237 + $0x68] sm:$0xff]
        %v374 = vld [vmem:[%s237 + $0x70] sm:$0xff]
        %v375 = vld [vmem:[%s237 + $0x78] sm:$0xff]
        %vm376 = vcmask 261120
        %v378 = vsel %vm376, %v296, 0
        %v381 = vsel %vm376, %v297, 0
        %v384 = vsel %vm376, %v298, 0
        %v387 = vsel %vm376, %v299, 0
        %v390 = vsel %vm376, %v300, 0
        %v393 = vsel %vm376, %v301, 0
        %v396 = vsel %vm376, %v302, 0
        %v399 = vsel %vm376, %v303, 0
        %v402 = vsel %vm376, %v304, 0
        %v405 = vsel %vm376, %v305, 0
        %v408 = vsel %vm376, %v306, 0
        %v411 = vsel %vm376, %v307, 0
        %v414 = vsel %vm376, %v308, 0
        %v417 = vsel %vm376, %v309, 0
        %v420 = vsel %vm376, %v310, 0
        %v423 = vsel %vm376, %v311, 0
        %v426 = vsel %vm376, %v312, 0
        %v429 = vsel %vm376, %v313, 0
        %v432 = vsel %vm376, %v314, 0
        %v435 = vsel %vm376, %v315, 0
        %v438 = vsel %vm376, %v316, 0
        %v441 = vsel %vm376, %v317, 0
        %v444 = vsel %vm376, %v318, 0
        %v447 = vsel %vm376, %v319, 0
        %v450 = vsel %vm376, %v320, 0
        %v453 = vsel %vm376, %v321, 0
        %v456 = vsel %vm376, %v322, 0
        %v459 = vsel %vm376, %v323, 0
        %v462 = vsel %vm376, %v324, 0
        %v465 = vsel %vm376, %v325, 0
        %v468 = vsel %vm376, %v326, 0
        %v471 = vsel %vm376, %v327, 0
        %v474 = vsel %vm376, %v328, 0
        %v477 = vsel %vm376, %v329, 0
        %v480 = vsel %vm376, %v330, 0
        %v483 = vsel %vm376, %v331, 0
        %v486 = vsel %vm376, %v332, 0
        %v489 = vsel %vm376, %v333, 0
        %v492 = vsel %vm376, %v334, 0
        %v495 = vsel %vm376, %v335, 0
        %v498 = vsel %vm376, %v336, 0
        %v501 = vsel %vm376, %v337, 0
        %v504 = vsel %vm376, %v338, 0
        %v507 = vsel %vm376, %v339, 0
        %v510 = vsel %vm376, %v340, 0
        %v513 = vsel %vm376, %v341, 0
        %v516 = vsel %vm376, %v342, 0
        %v519 = vsel %vm376, %v343, 0
        %v522 = vsel %vm376, %v344, 0
        %v525 = vsel %vm376, %v345, 0
        %v528 = vsel %vm376, %v346, 0
        %v531 = vsel %vm376, %v347, 0
        %v534 = vsel %vm376, %v348, 0
        %v537 = vsel %vm376, %v349, 0
        %v540 = vsel %vm376, %v350, 0
        %v543 = vsel %vm376, %v351, 0
        %v546 = vsel %vm376, %v352, 0
        %v549 = vsel %vm376, %v353, 0
        %v552 = vsel %vm376, %v354, 0
        %v555 = vsel %vm376, %v355, 0
        %v558 = vsel %vm376, %v356, 0
        %v561 = vsel %vm376, %v357, 0
        %v564 = vsel %vm376, %v358, 0
        %v567 = vsel %vm376, %v359, 0
        %569 = vmatprep.subr.mxu0 %v361
        %570 = vmatpush1.msra.mxu0 %v360
        %571 = vmatprep.subr.mxu0 %v365
        %572 = vmatpush1.msra.mxu0 %v364
        %573 = vmatprep.subr.mxu0 %v369
        %574 = vmatpush1.msra.mxu0 %v368
        %575 = vmatprep.subr.mxu0 %v373
        %576 = vmatpush1.msra.mxu0 %v372
        %577 = vmatprep.subr.mxu0 0.0
        %578 = vmatpush1.msra.mxu0 0.0
        %579 = vmatprep.subr.mxu0 0.0
        %580 = vmatpush1.msra.mxu0 0.0
        %581 = vmatprep.subr.mxu0 0.0
        %582 = vmatpush1.msra.mxu0 0.0
        %583 = vmatprep.subr.mxu0 0.0
        %584 = vmatpush1.msra.mxu0 0.0
        %585 = vmatprep.subr.mxu0 0.0
        %586 = vmatpush1.msra.mxu0 0.0
        %587 = vmatprep.subr.mxu0 0.0
        %588 = vmatpush1.msra.mxu0 0.0
        %589 = vmatprep.subr.mxu0 0.0
        %590 = vmatpush1.msra.mxu0 0.0
        %591 = vmatprep.subr.mxu0 0.0
        %592 = vmatpush1.msra.mxu0 0.0
        %593 = vmatprep.subr.mxu0 0.0
        %594 = vmatpush1.msra.mxu0 0.0
        %595 = vmatprep.subr.mxu0 0.0
        %596 = vmatpush1.msra.mxu0 0.0
        %597 = vmatprep.subr.mxu0 0.0
        %598 = vmatpush1.msra.mxu0 0.0
        %599 = vmatprep.subr.mxu0 0.0
        %600 = vmatpush1.msra.mxu0 0.0
        %601 = vmatprep.subr.mxu0 0.0
        %602 = vmatpush1.msra.mxu0 0.0
        %603 = vmatprep.subr.mxu0 0.0
        %604 = vmatpush1.msra.mxu0 0.0
        %605 = vmatprep.subr.mxu0 0.0
        %606 = vmatpush1.msra.mxu0 0.0
        %607 = vmatprep.subr.mxu0 0.0
        %608 = vmatpush1.msra.mxu0 0.0
        %609 = vmatprep.subr.mxu0 0.0
        %610 = vmatpush1.msra.mxu0 0.0
        %611 = vmatprep.subr.mxu0 0.0
        %612 = vmatpush1.msra.mxu0 0.0
        %613 = vmatprep.subr.mxu0 0.0
        %614 = vmatpush1.msra.mxu0 0.0
        %615 = vmatprep.subr.mxu0 0.0
        %616 = vmatpush1.msra.mxu0 0.0
        %617 = vmatprep.subr.mxu0 0.0
        %618 = vmatpush1.msra.mxu0 0.0
        %619 = vmatprep.subr.mxu0 0.0
        %620 = vmatpush1.msra.mxu0 0.0
        %621 = vmatprep.subr.mxu0 0.0
        %622 = vmatpush1.msra.mxu0 0.0
        %623 = vmatprep.subr.mxu0 0.0
        %624 = vmatpush1.msra.mxu0 0.0
        %625 = vmatprep.subr.mxu0 0.0
        %626 = vmatpush1.msra.mxu0 0.0
        %627 = vmatprep.subr.mxu0 0.0
        %628 = vmatpush1.msra.mxu0 0.0
        %629 = vmatprep.subr.mxu0 0.0
        %630 = vmatpush1.msra.mxu0 0.0
        %631 = vmatprep.subr.mxu0 0.0
        %632 = vmatpush1.msra.mxu0 0.0
        %633 = vmatprep.mubr.f32.mxu0 0.0
        %634 = vmatmul.mubr.f32.gmra.mrb[0].mxu0 %v378
        %v635 = vpop.f32.mrb[0].mxu0
        %v636 = vadd.f32 0.0, %v635
        %v637 = vpop.f32.mrb[0].mxu0
        %v638 = vadd.f32 0.0, %v637
        %639 = vmatprep.mubr.f32.mxu0 0.0
        %640 = vmatmul.mubr.f32.gmra.mrb[0].mxu0 %v381
        %v641 = vpop.f32.mrb[0].mxu0
        %v642 = vadd.f32 0.0, %v641
        %v643 = vpop.f32.mrb[0].mxu0
        %v644 = vadd.f32 0.0, %v643
        %645 = vmatprep.mubr.f32.mxu0 0.0
        %646 = vmatmul.mubr.f32.gmra.mrb[0].mxu0 %v384
        %v647 = vpop.f32.mrb[0].mxu0
        %v648 = vadd.f32 0.0, %v647
        %v649 = vpop.f32.mrb[0].mxu0
        %v650 = vadd.f32 0.0, %v649
        %651 = vmatprep.mubr.f32.mxu0 0.0
        %652 = vmatmul.mubr.f32.gmra.mrb[0].mxu0 %v387
        %v653 = vpop.f32.mrb[0].mxu0
        %v654 = vadd.f32 0.0, %v653
        %v655 = vpop.f32.mrb[0].mxu0
        %v656 = vadd.f32 0.0, %v655
        %657 = vmatprep.mubr.f32.mxu0 0.0
        %658 = vmatmul.mubr.f32.gmra.mrb[0].mxu0 %v390
        %v659 = vpop.f32.mrb[0].mxu0
        %v660 = vadd.f32 0.0, %v659
        %v661 = vpop.f32.mrb[0].mxu0
        %v662 = vadd.f32 0.0, %v661
        %663 = vmatprep.mubr.f32.mxu0 0.0
        %664 = vmatmul.mubr.f32.gmra.mrb[0].mxu0 %v393
        %v665 = vpop.f32.mrb[0].mxu0
        %v666 = vadd.f32 0.0, %v665
        %v667 = vpop.f32.mrb[0].mxu0
        %v668 = vadd.f32 0.0, %v667
        %669 = vmatprep.mubr.f32.mxu0 0.0
        %670 = vmatmul.mubr.f32.gmra.mrb[0].mxu0 %v396
        %v671 = vpop.f32.mrb[0].mxu0
        %v672 = vadd.f32 0.0, %v671
        %v673 = vpop.f32.mrb[0].mxu0
        %v674 = vadd.f32 0.0, %v673
        %675 = vmatprep.mubr.f32.mxu0 0.0
        %676 = vmatmul.mubr.f32.gmra.mrb[0].mxu0 %v399
        %v677 = vpop.f32.mrb[0].mxu0
        %v678 = vadd.f32 0.0, %v677
        %v679 = vpop.f32.mrb[0].mxu0
        %v680 = vadd.f32 0.0, %v679
        %681 = vmatprep.mubr.f32.mxu0 0.0
        %682 = vmatmul.mubr.f32.gmra.mrb[0].mxu0 %v402
        %v683 = vpop.f32.mrb[0].mxu0
        %v684 = vadd.f32 0.0, %v683
        %v685 = vpop.f32.mrb[0].mxu0
        %v686 = vadd.f32 0.0, %v685
        %687 = vmatprep.mubr.f32.mxu0 0.0
        %688 = vmatmul.mubr.f32.gmra.mrb[0].mxu0 %v405
        %v689 = vpop.f32.mrb[0].mxu0
        %v690 = vadd.f32 0.0, %v689
        %v691 = vpop.f32.mrb[0].mxu0
        %v692 = vadd.f32 0.0, %v691
        %693 = vmatprep.mubr.f32.mxu0 0.0
        %694 = vmatmul.mubr.f32.gmra.mrb[0].mxu0 %v408
        %v695 = vpop.f32.mrb[0].mxu0
        %v696 = vadd.f32 0.0, %v695
        %v697 = vpop.f32.mrb[0].mxu0
        %v698 = vadd.f32 0.0, %v697
        %699 = vmatprep.mubr.f32.mxu0 0.0
        %700 = vmatmul.mubr.f32.gmra.mrb[0].mxu0 %v411
        %v701 = vpop.f32.mrb[0].mxu0
        %v702 = vadd.f32 0.0, %v701
        %v703 = vpop.f32.mrb[0].mxu0
        %v704 = vadd.f32 0.0, %v703
        %705 = vmatprep.mubr.f32.mxu0 0.0
        %706 = vmatmul.mubr.f32.gmra.mrb[0].mxu0 %v414
        %v707 = vpop.f32.mrb[0].mxu0
        %v708 = vadd.f32 0.0, %v707
        %v709 = vpop.f32.mrb[0].mxu0
        %v710 = vadd.f32 0.0, %v709
        %711 = vmatprep.mubr.f32.mxu0 0.0
        %712 = vmatmul.mubr.f32.gmra.mrb[0].mxu0 %v417
        %v713 = vpop.f32.mrb[0].mxu0
        %v714 = vadd.f32 0.0, %v713
        %v715 = vpop.f32.mrb[0].mxu0
        %v716 = vadd.f32 0.0, %v715
        %717 = vmatprep.mubr.f32.mxu0 0.0
        %718 = vmatmul.mubr.f32.gmra.mrb[0].mxu0 %v420
        %v719 = vpop.f32.mrb[0].mxu0
        %v720 = vadd.f32 0.0, %v719
        %v721 = vpop.f32.mrb[0].mxu0
        %v722 = vadd.f32 0.0, %v721
        %723 = vmatprep.mubr.f32.mxu0 0.0
        %724 = vmatmul.mubr.f32.gmra.mrb[0].mxu0 %v423
        %v725 = vpop.f32.mrb[0].mxu0
        %v726 = vadd.f32 0.0, %v725
        %v727 = vpop.f32.mrb[0].mxu0
        %v728 = vadd.f32 0.0, %v727
        %729 = vmatprep.mubr.f32.mxu0 0.0
        %730 = vmatmul.mubr.f32.gmra.mrb[0].mxu0 %v426
        %v731 = vpop.f32.mrb[0].mxu0
        %v732 = vadd.f32 0.0, %v731
        %v733 = vpop.f32.mrb[0].mxu0
        %v734 = vadd.f32 0.0, %v733
        %735 = vmatprep.mubr.f32.mxu0 0.0
        %736 = vmatmul.mubr.f32.gmra.mrb[0].mxu0 %v429
        %v737 = vpop.f32.mrb[0].mxu0
        %v738 = vadd.f32 0.0, %v737
        %v739 = vpop.f32.mrb[0].mxu0
        %v740 = vadd.f32 0.0, %v739
        %741 = vmatprep.mubr.f32.mxu0 0.0
        %742 = vmatmul.mubr.f32.gmra.mrb[0].mxu0 %v432
        %v743 = vpop.f32.mrb[0].mxu0
        %v744 = vadd.f32 0.0, %v743
        %v745 = vpop.f32.mrb[0].mxu0
        %v746 = vadd.f32 0.0, %v745
        %747 = vmatprep.mubr.f32.mxu0 0.0
        %748 = vmatmul.mubr.f32.gmra.mrb[0].mxu0 %v435
        %v749 = vpop.f32.mrb[0].mxu0
        %v750 = vadd.f32 0.0, %v749
        %v751 = vpop.f32.mrb[0].mxu0
        %v752 = vadd.f32 0.0, %v751
        %753 = vmatprep.mubr.f32.mxu0 0.0
        %754 = vmatmul.mubr.f32.gmra.mrb[0].mxu0 %v438
        %v755 = vpop.f32.mrb[0].mxu0
        %v756 = vadd.f32 0.0, %v755
        %v757 = vpop.f32.mrb[0].mxu0
        %v758 = vadd.f32 0.0, %v757
        %759 = vmatprep.mubr.f32.mxu0 0.0
        %760 = vmatmul.mubr.f32.gmra.mrb[0].mxu0 %v441
        %v761 = vpop.f32.mrb[0].mxu0
        %v762 = vadd.f32 0.0, %v761
        %v763 = vpop.f32.mrb[0].mxu0
        %v764 = vadd.f32 0.0, %v763
        %765 = vmatprep.mubr.f32.mxu0 0.0
        %766 = vmatmul.mubr.f32.gmra.mrb[0].mxu0 %v444
        %v767 = vpop.f32.mrb[0].mxu0
        %v768 = vadd.f32 0.0, %v767
        %v769 = vpop.f32.mrb[0].mxu0
        %v770 = vadd.f32 0.0, %v769
        %771 = vmatprep.mubr.f32.mxu0 0.0
        %772 = vmatmul.mubr.f32.gmra.mrb[0].mxu0 %v447
        %v773 = vpop.f32.mrb[0].mxu0
        %v774 = vadd.f32 0.0, %v773
        %v775 = vpop.f32.mrb[0].mxu0
        %v776 = vadd.f32 0.0, %v775
        %777 = vmatprep.mubr.f32.mxu0 0.0
        %778 = vmatmul.mubr.f32.gmra.mrb[0].mxu0 %v450
        %v779 = vpop.f32.mrb[0].mxu0
        %v780 = vadd.f32 0.0, %v779
        %v781 = vpop.f32.mrb[0].mxu0
        %v782 = vadd.f32 0.0, %v781
        %783 = vmatprep.mubr.f32.mxu0 0.0
        %784 = vmatmul.mubr.f32.gmra.mrb[0].mxu0 %v453
        %v785 = vpop.f32.mrb[0].mxu0
        %v786 = vadd.f32 0.0, %v785
        %v787 = vpop.f32.mrb[0].mxu0
        %v788 = vadd.f32 0.0, %v787
        %789 = vmatprep.mubr.f32.mxu0 0.0
        %790 = vmatmul.mubr.f32.gmra.mrb[0].mxu0 %v456
        %v791 = vpop.f32.mrb[0].mxu0
        %v792 = vadd.f32 0.0, %v791
        %v793 = vpop.f32.mrb[0].mxu0
        %v794 = vadd.f32 0.0, %v793
        %795 = vmatprep.mubr.f32.mxu0 0.0
        %796 = vmatmul.mubr.f32.gmra.mrb[0].mxu0 %v459
        %v797 = vpop.f32.mrb[0].mxu0
        %v798 = vadd.f32 0.0, %v797
        %v799 = vpop.f32.mrb[0].mxu0
        %v800 = vadd.f32 0.0, %v799
        %801 = vmatprep.mubr.f32.mxu0 0.0
        %802 = vmatmul.mubr.f32.gmra.mrb[0].mxu0 %v462
        %v803 = vpop.f32.mrb[0].mxu0
        %v804 = vadd.f32 0.0, %v803
        %v805 = vpop.f32.mrb[0].mxu0
        %v806 = vadd.f32 0.0, %v805
        %807 = vmatprep.mubr.f32.mxu0 0.0
        %808 = vmatmul.mubr.f32.gmra.mrb[0].mxu0 %v465
        %v809 = vpop.f32.mrb[0].mxu0
        %v810 = vadd.f32 0.0, %v809
        %v811 = vpop.f32.mrb[0].mxu0
        %v812 = vadd.f32 0.0, %v811
        %813 = vmatprep.mubr.f32.mxu0 0.0
        %814 = vmatmul.mubr.f32.gmra.mrb[0].mxu0 %v468
        %v815 = vpop.f32.mrb[0].mxu0
        %v816 = vadd.f32 0.0, %v815
        %v817 = vpop.f32.mrb[0].mxu0
        %v818 = vadd.f32 0.0, %v817
        %819 = vmatprep.mubr.f32.mxu0 0.0
        %820 = vmatmul.mubr.f32.gmra.mrb[0].mxu0 %v471
        %v821 = vpop.f32.mrb[0].mxu0
        %v822 = vadd.f32 0.0, %v821
        %v823 = vpop.f32.mrb[0].mxu0
        %v824 = vadd.f32 0.0, %v823
        %825 = vmatprep.mubr.f32.mxu0 0.0
        %826 = vmatmul.mubr.f32.gmra.mrb[0].mxu0 %v474
        %v827 = vpop.f32.mrb[0].mxu0
        %v828 = vadd.f32 0.0, %v827
        %v829 = vpop.f32.mrb[0].mxu0
        %v830 = vadd.f32 0.0, %v829
        %831 = vmatprep.mubr.f32.mxu0 0.0
        %832 = vmatmul.mubr.f32.gmra.mrb[0].mxu0 %v477
        %v833 = vpop.f32.mrb[0].mxu0
        %v834 = vadd.f32 0.0, %v833
        %v835 = vpop.f32.mrb[0].mxu0
        %v836 = vadd.f32 0.0, %v835
        %837 = vmatprep.mubr.f32.mxu0 0.0
        %838 = vmatmul.mubr.f32.gmra.mrb[0].mxu0 %v480
        %v839 = vpop.f32.mrb[0].mxu0
        %v840 = vadd.f32 0.0, %v839
        %v841 = vpop.f32.mrb[0].mxu0
        %v842 = vadd.f32 0.0, %v841
        %843 = vmatprep.mubr.f32.mxu0 0.0
        %844 = vmatmul.mubr.f32.gmra.mrb[0].mxu0 %v483
        %v845 = vpop.f32.mrb[0].mxu0
        %v846 = vadd.f32 0.0, %v845
        %v847 = vpop.f32.mrb[0].mxu0
        %v848 = vadd.f32 0.0, %v847
        %849 = vmatprep.mubr.f32.mxu0 0.0
        %850 = vmatmul.mubr.f32.gmra.mrb[0].mxu0 %v486
        %v851 = vpop.f32.mrb[0].mxu0
        %v852 = vadd.f32 0.0, %v851
        %v853 = vpop.f32.mrb[0].mxu0
        %v854 = vadd.f32 0.0, %v853
        %855 = vmatprep.mubr.f32.mxu0 0.0
        %856 = vmatmul.mubr.f32.gmra.mrb[0].mxu0 %v489
        %v857 = vpop.f32.mrb[0].mxu0
        %v858 = vadd.f32 0.0, %v857
        %v859 = vpop.f32.mrb[0].mxu0
        %v860 = vadd.f32 0.0, %v859
        %861 = vmatprep.mubr.f32.mxu0 0.0
        %862 = vmatmul.mubr.f32.gmra.mrb[0].mxu0 %v492
        %v863 = vpop.f32.mrb[0].mxu0
        %v864 = vadd.f32 0.0, %v863
        %v865 = vpop.f32.mrb[0].mxu0
        %v866 = vadd.f32 0.0, %v865
        %867 = vmatprep.mubr.f32.mxu0 0.0
        %868 = vmatmul.mubr.f32.gmra.mrb[0].mxu0 %v495
        %v869 = vpop.f32.mrb[0].mxu0
        %v870 = vadd.f32 0.0, %v869
        %v871 = vpop.f32.mrb[0].mxu0
        %v872 = vadd.f32 0.0, %v871
        %873 = vmatprep.mubr.f32.mxu0 0.0
        %874 = vmatmul.mubr.f32.gmra.mrb[0].mxu0 %v498
        %v875 = vpop.f32.mrb[0].mxu0
        %v876 = vadd.f32 0.0, %v875
        %v877 = vpop.f32.mrb[0].mxu0
        %v878 = vadd.f32 0.0, %v877
        %879 = vmatprep.mubr.f32.mxu0 0.0
        %880 = vmatmul.mubr.f32.gmra.mrb[0].mxu0 %v501
        %v881 = vpop.f32.mrb[0].mxu0
        %v882 = vadd.f32 0.0, %v881
        %v883 = vpop.f32.mrb[0].mxu0
        %v884 = vadd.f32 0.0, %v883
        %885 = vmatprep.mubr.f32.mxu0 0.0
        %886 = vmatmul.mubr.f32.gmra.mrb[0].mxu0 %v504
        %v887 = vpop.f32.mrb[0].mxu0
        %v888 = vadd.f32 0.0, %v887
        %v889 = vpop.f32.mrb[0].mxu0
        %v890 = vadd.f32 0.0, %v889
        %891 = vmatprep.mubr.f32.mxu0 0.0
        %892 = vmatmul.mubr.f32.gmra.mrb[0].mxu0 %v507
        %v893 = vpop.f32.mrb[0].mxu0
        %v894 = vadd.f32 0.0, %v893
        %v895 = vpop.f32.mrb[0].mxu0
        %v896 = vadd.f32 0.0, %v895
        %897 = vmatprep.mubr.f32.mxu0 0.0
        %898 = vmatmul.mubr.f32.gmra.mrb[0].mxu0 %v510
        %v899 = vpop.f32.mrb[0].mxu0
        %v900 = vadd.f32 0.0, %v899
        %v901 = vpop.f32.mrb[0].mxu0
        %v902 = vadd.f32 0.0, %v901
        %903 = vmatprep.mubr.f32.mxu0 0.0
        %904 = vmatmul.mubr.f32.gmra.mrb[0].mxu0 %v513
        %v905 = vpop.f32.mrb[0].mxu0
        %v906 = vadd.f32 0.0, %v905
        %v907 = vpop.f32.mrb[0].mxu0
        %v908 = vadd.f32 0.0, %v907
        %909 = vmatprep.mubr.f32.mxu0 0.0
        %910 = vmatmul.mubr.f32.gmra.mrb[0].mxu0 %v516
        %v911 = vpop.f32.mrb[0].mxu0
        %v912 = vadd.f32 0.0, %v911
        %v913 = vpop.f32.mrb[0].mxu0
        %v914 = vadd.f32 0.0, %v913
        %915 = vmatprep.mubr.f32.mxu0 0.0
        %916 = vmatmul.mubr.f32.gmra.mrb[0].mxu0 %v519
        %v917 = vpop.f32.mrb[0].mxu0
        %v918 = vadd.f32 0.0, %v917
        %v919 = vpop.f32.mrb[0].mxu0
        %v920 = vadd.f32 0.0, %v919
        %921 = vmatprep.mubr.f32.mxu0 0.0
        %922 = vmatmul.mubr.f32.gmra.mrb[0].mxu0 %v522
        %v923 = vpop.f32.mrb[0].mxu0
        %v924 = vadd.f32 0.0, %v923
        %v925 = vpop.f32.mrb[0].mxu0
        %v926 = vadd.f32 0.0, %v925
        %927 = vmatprep.mubr.f32.mxu0 0.0
        %928 = vmatmul.mubr.f32.gmra.mrb[0].mxu0 %v525
        %v929 = vpop.f32.mrb[0].mxu0
        %v930 = vadd.f32 0.0, %v929
        %v931 = vpop.f32.mrb[0].mxu0
        %v932 = vadd.f32 0.0, %v931
        %933 = vmatprep.mubr.f32.mxu0 0.0
        %934 = vmatmul.mubr.f32.gmra.mrb[0].mxu0 %v528
        %v935 = vpop.f32.mrb[0].mxu0
        %v936 = vadd.f32 0.0, %v935
        %v937 = vpop.f32.mrb[0].mxu0
        %v938 = vadd.f32 0.0, %v937
        %939 = vmatprep.mubr.f32.mxu0 0.0
        %940 = vmatmul.mubr.f32.gmra.mrb[0].mxu0 %v531
        %v941 = vpop.f32.mrb[0].mxu0
        %v942 = vadd.f32 0.0, %v941
        %v943 = vpop.f32.mrb[0].mxu0
        %v944 = vadd.f32 0.0, %v943
        %945 = vmatprep.mubr.f32.mxu0 0.0
        %946 = vmatmul.mubr.f32.gmra.mrb[0].mxu0 %v534
        %v947 = vpop.f32.mrb[0].mxu0
        %v948 = vadd.f32 0.0, %v947
        %v949 = vpop.f32.mrb[0].mxu0
        %v950 = vadd.f32 0.0, %v949
        %951 = vmatprep.mubr.f32.mxu0 0.0
        %952 = vmatmul.mubr.f32.gmra.mrb[0].mxu0 %v537
        %v953 = vpop.f32.mrb[0].mxu0
        %v954 = vadd.f32 0.0, %v953
        %v955 = vpop.f32.mrb[0].mxu0
        %v956 = vadd.f32 0.0, %v955
        %957 = vmatprep.mubr.f32.mxu0 0.0
        %958 = vmatmul.mubr.f32.gmra.mrb[0].mxu0 %v540
        %v959 = vpop.f32.mrb[0].mxu0
        %v960 = vadd.f32 0.0, %v959
        %v961 = vpop.f32.mrb[0].mxu0
        %v962 = vadd.f32 0.0, %v961
        %963 = vmatprep.mubr.f32.mxu0 0.0
        %964 = vmatmul.mubr.f32.gmra.mrb[0].mxu0 %v543
        %v965 = vpop.f32.mrb[0].mxu0
        %v966 = vadd.f32 0.0, %v965
        %v967 = vpop.f32.mrb[0].mxu0
        %v968 = vadd.f32 0.0, %v967
        %969 = vmatprep.mubr.f32.mxu0 0.0
        %970 = vmatmul.mubr.f32.gmra.mrb[0].mxu0 %v546
        %v971 = vpop.f32.mrb[0].mxu0
        %v972 = vadd.f32 0.0, %v971
        %v973 = vpop.f32.mrb[0].mxu0
        %v974 = vadd.f32 0.0, %v973
        %975 = vmatprep.mubr.f32.mxu0 0.0
        %976 = vmatmul.mubr.f32.gmra.mrb[0].mxu0 %v549
        %v977 = vpop.f32.mrb[0].mxu0
        %v978 = vadd.f32 0.0, %v977
        %v979 = vpop.f32.mrb[0].mxu0
        %v980 = vadd.f32 0.0, %v979
        %981 = vmatprep.mubr.f32.mxu0 0.0
        %982 = vmatmul.mubr.f32.gmra.mrb[0].mxu0 %v552
        %v983 = vpop.f32.mrb[0].mxu0
        %v984 = vadd.f32 0.0, %v983
        %v985 = vpop.f32.mrb[0].mxu0
        %v986 = vadd.f32 0.0, %v985
        %987 = vmatprep.mubr.f32.mxu0 0.0
        %988 = vmatmul.mubr.f32.gmra.mrb[0].mxu0 %v555
        %v989 = vpop.f32.mrb[0].mxu0
        %v990 = vadd.f32 0.0, %v989
        %v991 = vpop.f32.mrb[0].mxu0
        %v992 = vadd.f32 0.0, %v991
        %993 = vmatprep.mubr.f32.mxu0 0.0
        %994 = vmatmul.mubr.f32.gmra.mrb[0].mxu0 %v558
        %v995 = vpop.f32.mrb[0].mxu0
        %v996 = vadd.f32 0.0, %v995
        %v997 = vpop.f32.mrb[0].mxu0
        %v998 = vadd.f32 0.0, %v997
        %999 = vmatprep.mubr.f32.mxu0 0.0
        %1000 = vmatmul.mubr.f32.gmra.mrb[0].mxu0 %v561
        %v1001 = vpop.f32.mrb[0].mxu0
        %v1002 = vadd.f32 0.0, %v1001
        %v1003 = vpop.f32.mrb[0].mxu0
        %v1004 = vadd.f32 0.0, %v1003
        %1005 = vmatprep.mubr.f32.mxu0 0.0
        %1006 = vmatmul.mubr.f32.gmra.mrb[0].mxu0 %v564
        %v1007 = vpop.f32.mrb[0].mxu0
        %v1008 = vadd.f32 0.0, %v1007
        %v1009 = vpop.f32.mrb[0].mxu0
        %v1010 = vadd.f32 0.0, %v1009
        %1011 = vmatprep.mubr.f32.mxu0 0.0
        %1012 = vmatmul.mubr.f32.gmra.mrb[0].mxu0 %v567
        %v1013 = vpop.f32.mrb[0].mxu0
        %v1014 = vadd.f32 0.0, %v1013
        %v1015 = vpop.f32.mrb[0].mxu0
        %v1016 = vadd.f32 0.0, %v1015
        %1017 = vdwg.mxu0
        %1018 = vmatprep.subr.mxu0 %v363
        %1019 = vmatpush1.msra.mxu0 %v362
        %1020 = vmatprep.subr.mxu0 %v367
        %1021 = vmatpush1.msra.mxu0 %v366
        %1022 = vmatprep.subr.mxu0 %v371
        %1023 = vmatpush1.msra.mxu0 %v370
        %1024 = vmatprep.subr.mxu0 %v375
        %1025 = vmatpush1.msra.mxu0 %v374
        %1026 = vmatprep.subr.mxu0 0.0
        %1027 = vmatpush1.msra.mxu0 0.0
        %1028 = vmatprep.subr.mxu0 0.0
        %1029 = vmatpush1.msra.mxu0 0.0
        %1030 = vmatprep.subr.mxu0 0.0
        %1031 = vmatpush1.msra.mxu0 0.0
        %1032 = vmatprep.subr.mxu0 0.0
        %1033 = vmatpush1.msra.mxu0 0.0
        %1034 = vmatprep.subr.mxu0 0.0
        %1035 = vmatpush1.msra.mxu0 0.0
        %1036 = vmatprep.subr.mxu0 0.0
        %1037 = vmatpush1.msra.mxu0 0.0
        %1038 = vmatprep.subr.mxu0 0.0
        %1039 = vmatpush1.msra.mxu0 0.0
        %1040 = vmatprep.subr.mxu0 0.0
        %1041 = vmatpush1.msra.mxu0 0.0
        %1042 = vmatprep.subr.mxu0 0.0
        %1043 = vmatpush1.msra.mxu0 0.0
        %1044 = vmatprep.subr.mxu0 0.0
        %1045 = vmatpush1.msra.mxu0 0.0
        %1046 = vmatprep.subr.mxu0 0.0
        %1047 = vmatpush1.msra.mxu0 0.0
        %1048 = vmatprep.subr.mxu0 0.0
        %1049 = vmatpush1.msra.mxu0 0.0
        %1050 = vmatprep.subr.mxu0 0.0
        %1051 = vmatpush1.msra.mxu0 0.0
        %1052 = vmatprep.subr.mxu0 0.0
        %1053 = vmatpush1.msra.mxu0 0.0
        %1054 = vmatprep.subr.mxu0 0.0
        %1055 = vmatpush1.msra.mxu0 0.0
        %1056 = vmatprep.subr.mxu0 0.0
        %1057 = vmatpush1.msra.mxu0 0.0
        %1058 = vmatprep.subr.mxu0 0.0
        %1059 = vmatpush1.msra.mxu0 0.0
        %1060 = vmatprep.subr.mxu0 0.0
        %1061 = vmatpush1.msra.mxu0 0.0
        %1062 = vmatprep.subr.mxu0 0.0
        %1063 = vmatpush1.msra.mxu0 0.0
        %1064 = vmatprep.subr.mxu0 0.0
        %1065 = vmatpush1.msra.mxu0 0.0
        %1066 = vmatprep.subr.mxu0 0.0
        %1067 = vmatpush1.msra.mxu0 0.0
        %1068 = vmatprep.subr.mxu0 0.0
        %1069 = vmatpush1.msra.mxu0 0.0
        %1070 = vmatprep.subr.mxu0 0.0
        %1071 = vmatpush1.msra.mxu0 0.0
        %1072 = vmatprep.subr.mxu0 0.0
        %1073 = vmatpush1.msra.mxu0 0.0
        %1074 = vmatprep.subr.mxu0 0.0
        %1075 = vmatpush1.msra.mxu0 0.0
        %1076 = vmatprep.subr.mxu0 0.0
        %1077 = vmatpush1.msra.mxu0 0.0
        %1078 = vmatprep.subr.mxu0 0.0
        %1079 = vmatpush1.msra.mxu0 0.0
        %1080 = vmatprep.subr.mxu0 0.0
        %1081 = vmatpush1.msra.mxu0 0.0
        %1082 = vmatprep.mubr.f32.mxu0 0.0
        %1083 = vmatmul.mubr.f32.gmra.mrb[0].mxu0 %v378
        %v1084 = vpop.f32.mrb[0].mxu0
        %v1085 = vadd.f32 0.0, %v1084
        %v1086 = vpop.f32.mrb[0].mxu0
        %v1087 = vadd.f32 0.0, %v1086
        %1088 = vmatprep.mubr.f32.mxu0 0.0
        %1089 = vmatmul.mubr.f32.gmra.mrb[0].mxu0 %v381
        %v1090 = vpop.f32.mrb[0].mxu0
        %v1091 = vadd.f32 0.0, %v1090
        %v1092 = vpop.f32.mrb[0].mxu0
        %v1093 = vadd.f32 0.0, %v1092
        %1094 = vmatprep.mubr.f32.mxu0 0.0
        %1095 = vmatmul.mubr.f32.gmra.mrb[0].mxu0 %v384
        %v1096 = vpop.f32.mrb[0].mxu0
        %v1097 = vadd.f32 0.0, %v1096
        %v1098 = vpop.f32.mrb[0].mxu0
        %v1099 = vadd.f32 0.0, %v1098
        %1100 = vmatprep.mubr.f32.mxu0 0.0
        %1101 = vmatmul.mubr.f32.gmra.mrb[0].mxu0 %v387
        %v1102 = vpop.f32.mrb[0].mxu0
        %v1103 = vadd.f32 0.0, %v1102
        %v1104 = vpop.f32.mrb[0].mxu0
        %v1105 = vadd.f32 0.0, %v1104
        %1106 = vmatprep.mubr.f32.mxu0 0.0
        %1107 = vmatmul.mubr.f32.gmra.mrb[0].mxu0 %v390
        %v1108 = vpop.f32.mrb[0].mxu0
        %v1109 = vadd.f32 0.0, %v1108
        %v1110 = vpop.f32.mrb[0].mxu0
        %v1111 = vadd.f32 0.0, %v1110
        %1112 = vmatprep.mubr.f32.mxu0 0.0
        %1113 = vmatmul.mubr.f32.gmra.mrb[0].mxu0 %v393
        %v1114 = vpop.f32.mrb[0].mxu0
        %v1115 = vadd.f32 0.0, %v1114
        %v1116 = vpop.f32.mrb[0].mxu0
        %v1117 = vadd.f32 0.0, %v1116
        %1118 = vmatprep.mubr.f32.mxu0 0.0
        %1119 = vmatmul.mubr.f32.gmra.mrb[0].mxu0 %v396
        %v1120 = vpop.f32.mrb[0].mxu0
        %v1121 = vadd.f32 0.0, %v1120
        %v1122 = vpop.f32.mrb[0].mxu0
        %v1123 = vadd.f32 0.0, %v1122
        %1124 = vmatprep.mubr.f32.mxu0 0.0
        %1125 = vmatmul.mubr.f32.gmra.mrb[0].mxu0 %v399
        %v1126 = vpop.f32.mrb[0].mxu0
        %v1127 = vadd.f32 0.0, %v1126
        %v1128 = vpop.f32.mrb[0].mxu0
        %v1129 = vadd.f32 0.0, %v1128
        %1130 = vmatprep.mubr.f32.mxu0 0.0
        %1131 = vmatmul.mubr.f32.gmra.mrb[0].mxu0 %v402
        %v1132 = vpop.f32.mrb[0].mxu0
        %v1133 = vadd.f32 0.0, %v1132
        %v1134 = vpop.f32.mrb[0].mxu0
        %v1135 = vadd.f32 0.0, %v1134
        %1136 = vmatprep.mubr.f32.mxu0 0.0
        %1137 = vmatmul.mubr.f32.gmra.mrb[0].mxu0 %v405
        %v1138 = vpop.f32.mrb[0].mxu0
        %v1139 = vadd.f32 0.0, %v1138
        %v1140 = vpop.f32.mrb[0].mxu0
        %v1141 = vadd.f32 0.0, %v1140
        %1142 = vmatprep.mubr.f32.mxu0 0.0
        %1143 = vmatmul.mubr.f32.gmra.mrb[0].mxu0 %v408
        %v1144 = vpop.f32.mrb[0].mxu0
        %v1145 = vadd.f32 0.0, %v1144
        %v1146 = vpop.f32.mrb[0].mxu0
        %v1147 = vadd.f32 0.0, %v1146
        %1148 = vmatprep.mubr.f32.mxu0 0.0
        %1149 = vmatmul.mubr.f32.gmra.mrb[0].mxu0 %v411
        %v1150 = vpop.f32.mrb[0].mxu0
        %v1151 = vadd.f32 0.0, %v1150
        %v1152 = vpop.f32.mrb[0].mxu0
        %v1153 = vadd.f32 0.0, %v1152
        %1154 = vmatprep.mubr.f32.mxu0 0.0
        %1155 = vmatmul.mubr.f32.gmra.mrb[0].mxu0 %v414
        %v1156 = vpop.f32.mrb[0].mxu0
        %v1157 = vadd.f32 0.0, %v1156
        %v1158 = vpop.f32.mrb[0].mxu0
        %v1159 = vadd.f32 0.0, %v1158
        %1160 = vmatprep.mubr.f32.mxu0 0.0
        %1161 = vmatmul.mubr.f32.gmra.mrb[0].mxu0 %v417
        %v1162 = vpop.f32.mrb[0].mxu0
        %v1163 = vadd.f32 0.0, %v1162
        %v1164 = vpop.f32.mrb[0].mxu0
        %v1165 = vadd.f32 0.0, %v1164
        %1166 = vmatprep.mubr.f32.mxu0 0.0
        %1167 = vmatmul.mubr.f32.gmra.mrb[0].mxu0 %v420
        %v1168 = vpop.f32.mrb[0].mxu0
        %v1169 = vadd.f32 0.0, %v1168
        %v1170 = vpop.f32.mrb[0].mxu0
        %v1171 = vadd.f32 0.0, %v1170
        %1172 = vmatprep.mubr.f32.mxu0 0.0
        %1173 = vmatmul.mubr.f32.gmra.mrb[0].mxu0 %v423
        %v1174 = vpop.f32.mrb[0].mxu0
        %v1175 = vadd.f32 0.0, %v1174
        %v1176 = vpop.f32.mrb[0].mxu0
        %v1177 = vadd.f32 0.0, %v1176
        %1178 = vmatprep.mubr.f32.mxu0 0.0
        %1179 = vmatmul.mubr.f32.gmra.mrb[0].mxu0 %v426
        %v1180 = vpop.f32.mrb[0].mxu0
        %v1181 = vadd.f32 0.0, %v1180
        %v1182 = vpop.f32.mrb[0].mxu0
        %v1183 = vadd.f32 0.0, %v1182
        %1184 = vmatprep.mubr.f32.mxu0 0.0
        %1185 = vmatmul.mubr.f32.gmra.mrb[0].mxu0 %v429
        %v1186 = vpop.f32.mrb[0].mxu0
        %v1187 = vadd.f32 0.0, %v1186
        %v1188 = vpop.f32.mrb[0].mxu0
        %v1189 = vadd.f32 0.0, %v1188
        %1190 = vmatprep.mubr.f32.mxu0 0.0
        %1191 = vmatmul.mubr.f32.gmra.mrb[0].mxu0 %v432
        %v1192 = vpop.f32.mrb[0].mxu0
        %v1193 = vadd.f32 0.0, %v1192
        %v1194 = vpop.f32.mrb[0].mxu0
        %v1195 = vadd.f32 0.0, %v1194
        %1196 = vmatprep.mubr.f32.mxu0 0.0
        %1197 = vmatmul.mubr.f32.gmra.mrb[0].mxu0 %v435
        %v1198 = vpop.f32.mrb[0].mxu0
        %v1199 = vadd.f32 0.0, %v1198
        %v1200 = vpop.f32.mrb[0].mxu0
        %v1201 = vadd.f32 0.0, %v1200
        %1202 = vmatprep.mubr.f32.mxu0 0.0
        %1203 = vmatmul.mubr.f32.gmra.mrb[0].mxu0 %v438
        %v1204 = vpop.f32.mrb[0].mxu0
        %v1205 = vadd.f32 0.0, %v1204
        %v1206 = vpop.f32.mrb[0].mxu0
        %v1207 = vadd.f32 0.0, %v1206
        %1208 = vmatprep.mubr.f32.mxu0 0.0
        %1209 = vmatmul.mubr.f32.gmra.mrb[0].mxu0 %v441
        %v1210 = vpop.f32.mrb[0].mxu0
        %v1211 = vadd.f32 0.0, %v1210
        %v1212 = vpop.f32.mrb[0].mxu0
        %v1213 = vadd.f32 0.0, %v1212
        %1214 = vmatprep.mubr.f32.mxu0 0.0
        %1215 = vmatmul.mubr.f32.gmra.mrb[0].mxu0 %v444
        %v1216 = vpop.f32.mrb[0].mxu0
        %v1217 = vadd.f32 0.0, %v1216
        %v1218 = vpop.f32.mrb[0].mxu0
        %v1219 = vadd.f32 0.0, %v1218
        %1220 = vmatprep.mubr.f32.mxu0 0.0
        %1221 = vmatmul.mubr.f32.gmra.mrb[0].mxu0 %v447
        %v1222 = vpop.f32.mrb[0].mxu0
        %v1223 = vadd.f32 0.0, %v1222
        %v1224 = vpop.f32.mrb[0].mxu0
        %v1225 = vadd.f32 0.0, %v1224
        %1226 = vmatprep.mubr.f32.mxu0 0.0
        %1227 = vmatmul.mubr.f32.gmra.mrb[0].mxu0 %v450
        %v1228 = vpop.f32.mrb[0].mxu0
        %v1229 = vadd.f32 0.0, %v1228
        %v1230 = vpop.f32.mrb[0].mxu0
        %v1231 = vadd.f32 0.0, %v1230
        %1232 = vmatprep.mubr.f32.mxu0 0.0
        %1233 = vmatmul.mubr.f32.gmra.mrb[0].mxu0 %v453
        %v1234 = vpop.f32.mrb[0].mxu0
        %v1235 = vadd.f32 0.0, %v1234
        %v1236 = vpop.f32.mrb[0].mxu0
        %v1237 = vadd.f32 0.0, %v1236
        %1238 = vmatprep.mubr.f32.mxu0 0.0
        %1239 = vmatmul.mubr.f32.gmra.mrb[0].mxu0 %v456
        %v1240 = vpop.f32.mrb[0].mxu0
        %v1241 = vadd.f32 0.0, %v1240
        %v1242 = vpop.f32.mrb[0].mxu0
        %v1243 = vadd.f32 0.0, %v1242
        %1244 = vmatprep.mubr.f32.mxu0 0.0
        %1245 = vmatmul.mubr.f32.gmra.mrb[0].mxu0 %v459
        %v1246 = vpop.f32.mrb[0].mxu0
        %v1247 = vadd.f32 0.0, %v1246
        %v1248 = vpop.f32.mrb[0].mxu0
        %v1249 = vadd.f32 0.0, %v1248
        %1250 = vmatprep.mubr.f32.mxu0 0.0
        %1251 = vmatmul.mubr.f32.gmra.mrb[0].mxu0 %v462
        %v1252 = vpop.f32.mrb[0].mxu0
        %v1253 = vadd.f32 0.0, %v1252
        %v1254 = vpop.f32.mrb[0].mxu0
        %v1255 = vadd.f32 0.0, %v1254
        %1256 = vmatprep.mubr.f32.mxu0 0.0
        %1257 = vmatmul.mubr.f32.gmra.mrb[0].mxu0 %v465
        %v1258 = vpop.f32.mrb[0].mxu0
        %v1259 = vadd.f32 0.0, %v1258
        %v1260 = vpop.f32.mrb[0].mxu0
        %v1261 = vadd.f32 0.0, %v1260
        %1262 = vmatprep.mubr.f32.mxu0 0.0
        %1263 = vmatmul.mubr.f32.gmra.mrb[0].mxu0 %v468
        %v1264 = vpop.f32.mrb[0].mxu0
        %v1265 = vadd.f32 0.0, %v1264
        %v1266 = vpop.f32.mrb[0].mxu0
        %v1267 = vadd.f32 0.0, %v1266
        %1268 = vmatprep.mubr.f32.mxu0 0.0
        %1269 = vmatmul.mubr.f32.gmra.mrb[0].mxu0 %v471
        %v1270 = vpop.f32.mrb[0].mxu0
        %v1271 = vadd.f32 0.0, %v1270
        %v1272 = vpop.f32.mrb[0].mxu0
        %v1273 = vadd.f32 0.0, %v1272
        %1274 = vmatprep.mubr.f32.mxu0 0.0
        %1275 = vmatmul.mubr.f32.gmra.mrb[0].mxu0 %v474
        %v1276 = vpop.f32.mrb[0].mxu0
        %v1277 = vadd.f32 0.0, %v1276
        %v1278 = vpop.f32.mrb[0].mxu0
        %v1279 = vadd.f32 0.0, %v1278
        %1280 = vmatprep.mubr.f32.mxu0 0.0
        %1281 = vmatmul.mubr.f32.gmra.mrb[0].mxu0 %v477
        %v1282 = vpop.f32.mrb[0].mxu0
        %v1283 = vadd.f32 0.0, %v1282
        %v1284 = vpop.f32.mrb[0].mxu0
        %v1285 = vadd.f32 0.0, %v1284
        %1286 = vmatprep.mubr.f32.mxu0 0.0
        %1287 = vmatmul.mubr.f32.gmra.mrb[0].mxu0 %v480
        %v1288 = vpop.f32.mrb[0].mxu0
        %v1289 = vadd.f32 0.0, %v1288
        %v1290 = vpop.f32.mrb[0].mxu0
        %v1291 = vadd.f32 0.0, %v1290
        %1292 = vmatprep.mubr.f32.mxu0 0.0
        %1293 = vmatmul.mubr.f32.gmra.mrb[0].mxu0 %v483
        %v1294 = vpop.f32.mrb[0].mxu0
        %v1295 = vadd.f32 0.0, %v1294
        %v1296 = vpop.f32.mrb[0].mxu0
        %v1297 = vadd.f32 0.0, %v1296
        %1298 = vmatprep.mubr.f32.mxu0 0.0
        %1299 = vmatmul.mubr.f32.gmra.mrb[0].mxu0 %v486
        %v1300 = vpop.f32.mrb[0].mxu0
        %v1301 = vadd.f32 0.0, %v1300
        %v1302 = vpop.f32.mrb[0].mxu0
        %v1303 = vadd.f32 0.0, %v1302
        %1304 = vmatprep.mubr.f32.mxu0 0.0
        %1305 = vmatmul.mubr.f32.gmra.mrb[0].mxu0 %v489
        %v1306 = vpop.f32.mrb[0].mxu0
        %v1307 = vadd.f32 0.0, %v1306
        %v1308 = vpop.f32.mrb[0].mxu0
        %v1309 = vadd.f32 0.0, %v1308
        %1310 = vmatprep.mubr.f32.mxu0 0.0
        %1311 = vmatmul.mubr.f32.gmra.mrb[0].mxu0 %v492
        %v1312 = vpop.f32.mrb[0].mxu0
        %v1313 = vadd.f32 0.0, %v1312
        %v1314 = vpop.f32.mrb[0].mxu0
        %v1315 = vadd.f32 0.0, %v1314
        %1316 = vmatprep.mubr.f32.mxu0 0.0
        %1317 = vmatmul.mubr.f32.gmra.mrb[0].mxu0 %v495
        %v1318 = vpop.f32.mrb[0].mxu0
        %v1319 = vadd.f32 0.0, %v1318
        %v1320 = vpop.f32.mrb[0].mxu0
        %v1321 = vadd.f32 0.0, %v1320
        %1322 = vmatprep.mubr.f32.mxu0 0.0
        %1323 = vmatmul.mubr.f32.gmra.mrb[0].mxu0 %v498
        %v1324 = vpop.f32.mrb[0].mxu0
        %v1325 = vadd.f32 0.0, %v1324
        %v1326 = vpop.f32.mrb[0].mxu0
        %v1327 = vadd.f32 0.0, %v1326
        %1328 = vmatprep.mubr.f32.mxu0 0.0
        %1329 = vmatmul.mubr.f32.gmra.mrb[0].mxu0 %v501
        %v1330 = vpop.f32.mrb[0].mxu0
        %v1331 = vadd.f32 0.0, %v1330
        %v1332 = vpop.f32.mrb[0].mxu0
        %v1333 = vadd.f32 0.0, %v1332
        %1334 = vmatprep.mubr.f32.mxu0 0.0
        %1335 = vmatmul.mubr.f32.gmra.mrb[0].mxu0 %v504
        %v1336 = vpop.f32.mrb[0].mxu0
        %v1337 = vadd.f32 0.0, %v1336
        %v1338 = vpop.f32.mrb[0].mxu0
        %v1339 = vadd.f32 0.0, %v1338
        %1340 = vmatprep.mubr.f32.mxu0 0.0
        %1341 = vmatmul.mubr.f32.gmra.mrb[0].mxu0 %v507
        %v1342 = vpop.f32.mrb[0].mxu0
        %v1343 = vadd.f32 0.0, %v1342
        %v1344 = vpop.f32.mrb[0].mxu0
        %v1345 = vadd.f32 0.0, %v1344
        %1346 = vmatprep.mubr.f32.mxu0 0.0
        %1347 = vmatmul.mubr.f32.gmra.mrb[0].mxu0 %v510
        %v1348 = vpop.f32.mrb[0].mxu0
        %v1349 = vadd.f32 0.0, %v1348
        %v1350 = vpop.f32.mrb[0].mxu0
        %v1351 = vadd.f32 0.0, %v1350
        %1352 = vmatprep.mubr.f32.mxu0 0.0
        %1353 = vmatmul.mubr.f32.gmra.mrb[0].mxu0 %v513
        %v1354 = vpop.f32.mrb[0].mxu0
        %v1355 = vadd.f32 0.0, %v1354
        %v1356 = vpop.f32.mrb[0].mxu0
        %v1357 = vadd.f32 0.0, %v1356
        %1358 = vmatprep.mubr.f32.mxu0 0.0
        %1359 = vmatmul.mubr.f32.gmra.mrb[0].mxu0 %v516
        %v1360 = vpop.f32.mrb[0].mxu0
        %v1361 = vadd.f32 0.0, %v1360
        %v1362 = vpop.f32.mrb[0].mxu0
        %v1363 = vadd.f32 0.0, %v1362
        %1364 = vmatprep.mubr.f32.mxu0 0.0
        %1365 = vmatmul.mubr.f32.gmra.mrb[0].mxu0 %v519
        %v1366 = vpop.f32.mrb[0].mxu0
        %v1367 = vadd.f32 0.0, %v1366
        %v1368 = vpop.f32.mrb[0].mxu0
        %v1369 = vadd.f32 0.0, %v1368
        %1370 = vmatprep.mubr.f32.mxu0 0.0
        %1371 = vmatmul.mubr.f32.gmra.mrb[0].mxu0 %v522
        %v1372 = vpop.f32.mrb[0].mxu0
        %v1373 = vadd.f32 0.0, %v1372
        %v1374 = vpop.f32.mrb[0].mxu0
        %v1375 = vadd.f32 0.0, %v1374
        %1376 = vmatprep.mubr.f32.mxu0 0.0
        %1377 = vmatmul.mubr.f32.gmra.mrb[0].mxu0 %v525
        %v1378 = vpop.f32.mrb[0].mxu0
        %v1379 = vadd.f32 0.0, %v1378
        %v1380 = vpop.f32.mrb[0].mxu0
        %v1381 = vadd.f32 0.0, %v1380
        %1382 = vmatprep.mubr.f32.mxu0 0.0
        %1383 = vmatmul.mubr.f32.gmra.mrb[0].mxu0 %v528
        %v1384 = vpop.f32.mrb[0].mxu0
        %v1385 = vadd.f32 0.0, %v1384
        %v1386 = vpop.f32.mrb[0].mxu0
        %v1387 = vadd.f32 0.0, %v1386
        %1388 = vmatprep.mubr.f32.mxu0 0.0
        %1389 = vmatmul.mubr.f32.gmra.mrb[0].mxu0 %v531
        %v1390 = vpop.f32.mrb[0].mxu0
        %v1391 = vadd.f32 0.0, %v1390
        %v1392 = vpop.f32.mrb[0].mxu0
        %v1393 = vadd.f32 0.0, %v1392
        %1394 = vmatprep.mubr.f32.mxu0 0.0
        %1395 = vmatmul.mubr.f32.gmra.mrb[0].mxu0 %v534
        %v1396 = vpop.f32.mrb[0].mxu0
        %v1397 = vadd.f32 0.0, %v1396
        %v1398 = vpop.f32.mrb[0].mxu0
        %v1399 = vadd.f32 0.0, %v1398
        %1400 = vmatprep.mubr.f32.mxu0 0.0
        %1401 = vmatmul.mubr.f32.gmra.mrb[0].mxu0 %v537
        %v1402 = vpop.f32.mrb[0].mxu0
        %v1403 = vadd.f32 0.0, %v1402
        %v1404 = vpop.f32.mrb[0].mxu0
        %v1405 = vadd.f32 0.0, %v1404
        %1406 = vmatprep.mubr.f32.mxu0 0.0
        %1407 = vmatmul.mubr.f32.gmra.mrb[0].mxu0 %v540
        %v1408 = vpop.f32.mrb[0].mxu0
        %v1409 = vadd.f32 0.0, %v1408
        %v1410 = vpop.f32.mrb[0].mxu0
        %v1411 = vadd.f32 0.0, %v1410
        %1412 = vmatprep.mubr.f32.mxu0 0.0
        %1413 = vmatmul.mubr.f32.gmra.mrb[0].mxu0 %v543
        %v1414 = vpop.f32.mrb[0].mxu0
        %v1415 = vadd.f32 0.0, %v1414
        %v1416 = vpop.f32.mrb[0].mxu0
        %v1417 = vadd.f32 0.0, %v1416
        %1418 = vmatprep.mubr.f32.mxu0 0.0
        %1419 = vmatmul.mubr.f32.gmra.mrb[0].mxu0 %v546
        %v1420 = vpop.f32.mrb[0].mxu0
        %v1421 = vadd.f32 0.0, %v1420
        %v1422 = vpop.f32.mrb[0].mxu0
        %v1423 = vadd.f32 0.0, %v1422
        %1424 = vmatprep.mubr.f32.mxu0 0.0
        %1425 = vmatmul.mubr.f32.gmra.mrb[0].mxu0 %v549
        %v1426 = vpop.f32.mrb[0].mxu0
        %v1427 = vadd.f32 0.0, %v1426
        %v1428 = vpop.f32.mrb[0].mxu0
        %v1429 = vadd.f32 0.0, %v1428
        %1430 = vmatprep.mubr.f32.mxu0 0.0
        %1431 = vmatmul.mubr.f32.gmra.mrb[0].mxu0 %v552
        %v1432 = vpop.f32.mrb[0].mxu0
        %v1433 = vadd.f32 0.0, %v1432
        %v1434 = vpop.f32.mrb[0].mxu0
        %v1435 = vadd.f32 0.0, %v1434
        %1436 = vmatprep.mubr.f32.mxu0 0.0
        %1437 = vmatmul.mubr.f32.gmra.mrb[0].mxu0 %v555
        %v1438 = vpop.f32.mrb[0].mxu0
        %v1439 = vadd.f32 0.0, %v1438
        %v1440 = vpop.f32.mrb[0].mxu0
        %v1441 = vadd.f32 0.0, %v1440
        %1442 = vmatprep.mubr.f32.mxu0 0.0
        %1443 = vmatmul.mubr.f32.gmra.mrb[0].mxu0 %v558
        %v1444 = vpop.f32.mrb[0].mxu0
        %v1445 = vadd.f32 0.0, %v1444
        %v1446 = vpop.f32.mrb[0].mxu0
        %v1447 = vadd.f32 0.0, %v1446
        %1448 = vmatprep.mubr.f32.mxu0 0.0
        %1449 = vmatmul.mubr.f32.gmra.mrb[0].mxu0 %v561
        %v1450 = vpop.f32.mrb[0].mxu0
        %v1451 = vadd.f32 0.0, %v1450
        %v1452 = vpop.f32.mrb[0].mxu0
        %v1453 = vadd.f32 0.0, %v1452
        %1454 = vmatprep.mubr.f32.mxu0 0.0
        %1455 = vmatmul.mubr.f32.gmra.mrb[0].mxu0 %v564
        %v1456 = vpop.f32.mrb[0].mxu0
        %v1457 = vadd.f32 0.0, %v1456
        %v1458 = vpop.f32.mrb[0].mxu0
        %v1459 = vadd.f32 0.0, %v1458
        %1460 = vmatprep.mubr.f32.mxu0 0.0
        %1461 = vmatmul.mubr.f32.gmra.mrb[0].mxu0 %v567
        %v1462 = vpop.f32.mrb[0].mxu0
        %v1463 = vadd.f32 0.0, %v1462
        %v1464 = vpop.f32.mrb[0].mxu0
        %v1465 = vadd.f32 0.0, %v1464
        %1466 = vdwg.mxu0
        %v1467 = vld [vmem:[%s287] sm:$0xff]
        %v1468 = vld [vmem:[%s287 + $0x8] sm:$0xff]
        %v1469 = vld [vmem:[%s287 + $0x10] sm:$0xff]
        %v1470 = vld [vmem:[%s287 + $0x18] sm:$0xff]
        %v1471 = vld [vmem:[%s287 + $0x20] sm:$0xff]
        %v1472 = vld [vmem:[%s287 + $0x28] sm:$0xff]
        %v1473 = vld [vmem:[%s287 + $0x30] sm:$0xff]
        %v1474 = vld [vmem:[%s287 + $0x38] sm:$0xff]
        %v1475 = vld [vmem:[%s287 + $0x40] sm:$0xff]
        %v1476 = vld [vmem:[%s287 + $0x48] sm:$0xff]
        %v1477 = vld [vmem:[%s287 + $0x50] sm:$0xff]
        %v1478 = vld [vmem:[%s287 + $0x58] sm:$0xff]
        %v1479 = vld [vmem:[%s287 + $0x60] sm:$0xff]
        %v1480 = vld [vmem:[%s287 + $0x68] sm:$0xff]
        %v1481 = vld [vmem:[%s287 + $0x70] sm:$0xff]
        %v1482 = vld [vmem:[%s287 + $0x78] sm:$0xff]
        %v1483 = vld [vmem:[%s287 + $0x80] sm:$0xff]
        %v1484 = vld [vmem:[%s287 + $0x88] sm:$0xff]
        %v1485 = vld [vmem:[%s287 + $0x90] sm:$0xff]
        %v1486 = vld [vmem:[%s287 + $0x98] sm:$0xff]
        %v1487 = vld [vmem:[%s287 + $0xa0] sm:$0xff]
        %v1488 = vld [vmem:[%s287 + $0xa8] sm:$0xff]
        %v1489 = vld [vmem:[%s287 + $0xb0] sm:$0xff]
        %v1490 = vld [vmem:[%s287 + $0xb8] sm:$0xff]
        %v1491 = vld [vmem:[%s287 + $0xc0] sm:$0xff]
        %v1492 = vld [vmem:[%s287 + $0xc8] sm:$0xff]
        %v1493 = vld [vmem:[%s287 + $0xd0] sm:$0xff]
        %v1494 = vld [vmem:[%s287 + $0xd8] sm:$0xff]
        %v1495 = vld [vmem:[%s287 + $0xe0] sm:$0xff]
        %v1496 = vld [vmem:[%s287 + $0xe8] sm:$0xff]
        %v1497 = vld [vmem:[%s287 + $0xf0] sm:$0xff]
        %v1498 = vld [vmem:[%s287 + $0xf8] sm:$0xff]
        %v1499 = vld [vmem:[%s287 + $0x100] sm:$0xff]
        %v1500 = vld [vmem:[%s287 + $0x108] sm:$0xff]
        %v1501 = vld [vmem:[%s287 + $0x110] sm:$0xff]
        %v1502 = vld [vmem:[%s287 + $0x118] sm:$0xff]
        %v1503 = vld [vmem:[%s287 + $0x120] sm:$0xff]
        %v1504 = vld [vmem:[%s287 + $0x128] sm:$0xff]
        %v1505 = vld [vmem:[%s287 + $0x130] sm:$0xff]
        %v1506 = vld [vmem:[%s287 + $0x138] sm:$0xff]
        %v1507 = vld [vmem:[%s287 + $0x140] sm:$0xff]
        %v1508 = vld [vmem:[%s287 + $0x148] sm:$0xff]
        %v1509 = vld [vmem:[%s287 + $0x150] sm:$0xff]
        %v1510 = vld [vmem:[%s287 + $0x158] sm:$0xff]
        %v1511 = vld [vmem:[%s287 + $0x160] sm:$0xff]
        %v1512 = vld [vmem:[%s287 + $0x168] sm:$0xff]
        %v1513 = vld [vmem:[%s287 + $0x170] sm:$0xff]
        %v1514 = vld [vmem:[%s287 + $0x178] sm:$0xff]
        %v1515 = vld [vmem:[%s287 + $0x180] sm:$0xff]
        %v1516 = vld [vmem:[%s287 + $0x188] sm:$0xff]
        %v1517 = vld [vmem:[%s287 + $0x190] sm:$0xff]
        %v1518 = vld [vmem:[%s287 + $0x198] sm:$0xff]
        %v1519 = vld [vmem:[%s287 + $0x1a0] sm:$0xff]
        %v1520 = vld [vmem:[%s287 + $0x1a8] sm:$0xff]
        %v1521 = vld [vmem:[%s287 + $0x1b0] sm:$0xff]
        %v1522 = vld [vmem:[%s287 + $0x1b8] sm:$0xff]
        %v1523 = vld [vmem:[%s287 + $0x1c0] sm:$0xff]
        %v1524 = vld [vmem:[%s287 + $0x1c8] sm:$0xff]
        %v1525 = vld [vmem:[%s287 + $0x1d0] sm:$0xff]
        %v1526 = vld [vmem:[%s287 + $0x1d8] sm:$0xff]
        %v1527 = vld [vmem:[%s287 + $0x1e0] sm:$0xff]
        %v1528 = vld [vmem:[%s287 + $0x1e8] sm:$0xff]
        %v1529 = vld [vmem:[%s287 + $0x1f0] sm:$0xff]
        %v1530 = vld [vmem:[%s287 + $0x1f8] sm:$0xff]
        %1532 = vset.pattern.permute.xlu0 0
        %1533 = vperm.xlu0 %1532, %v1467
        %v1534 = vpop.permute.xlu0 %1533
        %1537 = vset.pattern.permute.xlu0 0
        %1538 = vperm.xlu0 %1537, %v1468
        %v1539 = vpop.permute.xlu0 %1538
        %1542 = vset.pattern.permute.xlu0 0
        %1543 = vperm.xlu0 %1542, %v1469
        %v1544 = vpop.permute.xlu0 %1543
        %1547 = vset.pattern.permute.xlu0 0
        %1548 = vperm.xlu0 %1547, %v1470
        %v1549 = vpop.permute.xlu0 %1548
        %1552 = vset.pattern.permute.xlu0 0
        %1553 = vperm.xlu0 %1552, %v1471
        %v1554 = vpop.permute.xlu0 %1553
        %1557 = vset.pattern.permute.xlu0 0
        %1558 = vperm.xlu0 %1557, %v1472
        %v1559 = vpop.permute.xlu0 %1558
        %1562 = vset.pattern.permute.xlu0 0
        %1563 = vperm.xlu0 %1562, %v1473
        %v1564 = vpop.permute.xlu0 %1563
        %1567 = vset.pattern.permute.xlu0 0
        %1568 = vperm.xlu0 %1567, %v1474
        %v1569 = vpop.permute.xlu0 %1568
        %1572 = vset.pattern.permute.xlu0 0
        %1573 = vperm.xlu0 %1572, %v1475
        %v1574 = vpop.permute.xlu0 %1573
        %1577 = vset.pattern.permute.xlu0 0
        %1578 = vperm.xlu0 %1577, %v1476
        %v1579 = vpop.permute.xlu0 %1578
        %1582 = vset.pattern.permute.xlu0 0
        %1583 = vperm.xlu0 %1582, %v1477
        %v1584 = vpop.permute.xlu0 %1583
        %1587 = vset.pattern.permute.xlu0 0
        %1588 = vperm.xlu0 %1587, %v1478
        %v1589 = vpop.permute.xlu0 %1588
        %1592 = vset.pattern.permute.xlu0 0
        %1593 = vperm.xlu0 %1592, %v1479
        %v1594 = vpop.permute.xlu0 %1593
        %1597 = vset.pattern.permute.xlu0 0
        %1598 = vperm.xlu0 %1597, %v1480
        %v1599 = vpop.permute.xlu0 %1598
        %1602 = vset.pattern.permute.xlu0 0
        %1603 = vperm.xlu0 %1602, %v1481
        %v1604 = vpop.permute.xlu0 %1603
        %1607 = vset.pattern.permute.xlu0 0
        %1608 = vperm.xlu0 %1607, %v1482
        %v1609 = vpop.permute.xlu0 %1608
        %1612 = vset.pattern.permute.xlu0 0
        %1613 = vperm.xlu0 %1612, %v1483
        %v1614 = vpop.permute.xlu0 %1613
        %1617 = vset.pattern.permute.xlu0 0
        %1618 = vperm.xlu0 %1617, %v1484
        %v1619 = vpop.permute.xlu0 %1618
        %1622 = vset.pattern.permute.xlu0 0
        %1623 = vperm.xlu0 %1622, %v1485
        %v1624 = vpop.permute.xlu0 %1623
        %1627 = vset.pattern.permute.xlu0 0
        %1628 = vperm.xlu0 %1627, %v1486
        %v1629 = vpop.permute.xlu0 %1628
        %1632 = vset.pattern.permute.xlu0 0
        %1633 = vperm.xlu0 %1632, %v1487
        %v1634 = vpop.permute.xlu0 %1633
        %1637 = vset.pattern.permute.xlu0 0
        %1638 = vperm.xlu0 %1637, %v1488
        %v1639 = vpop.permute.xlu0 %1638
        %1642 = vset.pattern.permute.xlu0 0
        %1643 = vperm.xlu0 %1642, %v1489
        %v1644 = vpop.permute.xlu0 %1643
        %1647 = vset.pattern.permute.xlu0 0
        %1648 = vperm.xlu0 %1647, %v1490
        %v1649 = vpop.permute.xlu0 %1648
        %1652 = vset.pattern.permute.xlu0 0
        %1653 = vperm.xlu0 %1652, %v1491
        %v1654 = vpop.permute.xlu0 %1653
        %1657 = vset.pattern.permute.xlu0 0
        %1658 = vperm.xlu0 %1657, %v1492
        %v1659 = vpop.permute.xlu0 %1658
        %1662 = vset.pattern.permute.xlu0 0
        %1663 = vperm.xlu0 %1662, %v1493
        %v1664 = vpop.permute.xlu0 %1663
        %1667 = vset.pattern.permute.xlu0 0
        %1668 = vperm.xlu0 %1667, %v1494
        %v1669 = vpop.permute.xlu0 %1668
        %1672 = vset.pattern.permute.xlu0 0
        %1673 = vperm.xlu0 %1672, %v1495
        %v1674 = vpop.permute.xlu0 %1673
        %1677 = vset.pattern.permute.xlu0 0
        %1678 = vperm.xlu0 %1677, %v1496
        %v1679 = vpop.permute.xlu0 %1678
        %1682 = vset.pattern.permute.xlu0 0
        %1683 = vperm.xlu0 %1682, %v1497
        %v1684 = vpop.permute.xlu0 %1683
        %1687 = vset.pattern.permute.xlu0 0
        %1688 = vperm.xlu0 %1687, %v1498
        %v1689 = vpop.permute.xlu0 %1688
        %1692 = vset.pattern.permute.xlu0 0
        %1693 = vperm.xlu0 %1692, %v1499
        %v1694 = vpop.permute.xlu0 %1693
        %1697 = vset.pattern.permute.xlu0 0
        %1698 = vperm.xlu0 %1697, %v1500
        %v1699 = vpop.permute.xlu0 %1698
        %1702 = vset.pattern.permute.xlu0 0
        %1703 = vperm.xlu0 %1702, %v1501
        %v1704 = vpop.permute.xlu0 %1703
        %1707 = vset.pattern.permute.xlu0 0
        %1708 = vperm.xlu0 %1707, %v1502
        %v1709 = vpop.permute.xlu0 %1708
        %1712 = vset.pattern.permute.xlu0 0
        %1713 = vperm.xlu0 %1712, %v1503
        %v1714 = vpop.permute.xlu0 %1713
        %1717 = vset.pattern.permute.xlu0 0
        %1718 = vperm.xlu0 %1717, %v1504
        %v1719 = vpop.permute.xlu0 %1718
        %1722 = vset.pattern.permute.xlu0 0
        %1723 = vperm.xlu0 %1722, %v1505
        %v1724 = vpop.permute.xlu0 %1723
        %1727 = vset.pattern.permute.xlu0 0
        %1728 = vperm.xlu0 %1727, %v1506
        %v1729 = vpop.permute.xlu0 %1728
        %1732 = vset.pattern.permute.xlu0 0
        %1733 = vperm.xlu0 %1732, %v1507
        %v1734 = vpop.permute.xlu0 %1733
        %1737 = vset.pattern.permute.xlu0 0
        %1738 = vperm.xlu0 %1737, %v1508
        %v1739 = vpop.permute.xlu0 %1738
        %1742 = vset.pattern.permute.xlu0 0
        %1743 = vperm.xlu0 %1742, %v1509
        %v1744 = vpop.permute.xlu0 %1743
        %1747 = vset.pattern.permute.xlu0 0
        %1748 = vperm.xlu0 %1747, %v1510
        %v1749 = vpop.permute.xlu0 %1748
        %1752 = vset.pattern.permute.xlu0 0
        %1753 = vperm.xlu0 %1752, %v1511
        %v1754 = vpop.permute.xlu0 %1753
        %1757 = vset.pattern.permute.xlu0 0
        %1758 = vperm.xlu0 %1757, %v1512
        %v1759 = vpop.permute.xlu0 %1758
        %1762 = vset.pattern.permute.xlu0 0
        %1763 = vperm.xlu0 %1762, %v1513
        %v1764 = vpop.permute.xlu0 %1763
        %1767 = vset.pattern.permute.xlu0 0
        %1768 = vperm.xlu0 %1767, %v1514
        %v1769 = vpop.permute.xlu0 %1768
        %1772 = vset.pattern.permute.xlu0 0
        %1773 = vperm.xlu0 %1772, %v1515
        %v1774 = vpop.permute.xlu0 %1773
        %1777 = vset.pattern.permute.xlu0 0
        %1778 = vperm.xlu0 %1777, %v1516
        %v1779 = vpop.permute.xlu0 %1778
        %1782 = vset.pattern.permute.xlu0 0
        %1783 = vperm.xlu0 %1782, %v1517
        %v1784 = vpop.permute.xlu0 %1783
        %1787 = vset.pattern.permute.xlu0 0
        %1788 = vperm.xlu0 %1787, %v1518
        %v1789 = vpop.permute.xlu0 %1788
        %1792 = vset.pattern.permute.xlu0 0
        %1793 = vperm.xlu0 %1792, %v1519
        %v1794 = vpop.permute.xlu0 %1793
        %1797 = vset.pattern.permute.xlu0 0
        %1798 = vperm.xlu0 %1797, %v1520
        %v1799 = vpop.permute.xlu0 %1798
        %1802 = vset.pattern.permute.xlu0 0
        %1803 = vperm.xlu0 %1802, %v1521
        %v1804 = vpop.permute.xlu0 %1803
        %1807 = vset.pattern.permute.xlu0 0
        %1808 = vperm.xlu0 %1807, %v1522
        %v1809 = vpop.permute.xlu0 %1808
        %1812 = vset.pattern.permute.xlu0 0
        %1813 = vperm.xlu0 %1812, %v1523
        %v1814 = vpop.permute.xlu0 %1813
        %1817 = vset.pattern.permute.xlu0 0
        %1818 = vperm.xlu0 %1817, %v1524
        %v1819 = vpop.permute.xlu0 %1818
        %1822 = vset.pattern.permute.xlu0 0
        %1823 = vperm.xlu0 %1822, %v1525
        %v1824 = vpop.permute.xlu0 %1823
        %1827 = vset.pattern.permute.xlu0 0
        %1828 = vperm.xlu0 %1827, %v1526
        %v1829 = vpop.permute.xlu0 %1828
        %1832 = vset.pattern.permute.xlu0 0
        %1833 = vperm.xlu0 %1832, %v1527
        %v1834 = vpop.permute.xlu0 %1833
        %1837 = vset.pattern.permute.xlu0 0
        %1838 = vperm.xlu0 %1837, %v1528
        %v1839 = vpop.permute.xlu0 %1838
        %1842 = vset.pattern.permute.xlu0 0
        %1843 = vperm.xlu0 %1842, %v1529
        %v1844 = vpop.permute.xlu0 %1843
        %1847 = vset.pattern.permute.xlu0 0
        %1848 = vperm.xlu0 %1847, %v1530
        %v1849 = vpop.permute.xlu0 %1848
        %v1851 = vsub.f32 %v636, %v1534
        %v1852 = vsub.f32 %v638, %v1534
        %v1853 = vsub.f32 %v1085, %v1534
        %v1854 = vsub.f32 %v1087, %v1534
        %v1855 = vsub.f32 %v642, %v1539
        %v1856 = vsub.f32 %v644, %v1539
        %v1857 = vsub.f32 %v1091, %v1539
        %v1858 = vsub.f32 %v1093, %v1539
        %v1859 = vsub.f32 %v648, %v1544
        %v1860 = vsub.f32 %v650, %v1544
        %v1861 = vsub.f32 %v1097, %v1544
        %v1862 = vsub.f32 %v1099, %v1544
        %v1863 = vsub.f32 %v654, %v1549
        %v1864 = vsub.f32 %v656, %v1549
        %v1865 = vsub.f32 %v1103, %v1549
        %v1866 = vsub.f32 %v1105, %v1549
        %v1867 = vsub.f32 %v660, %v1554
        %v1868 = vsub.f32 %v662, %v1554
        %v1869 = vsub.f32 %v1109, %v1554
        %v1870 = vsub.f32 %v1111, %v1554
        %v1871 = vsub.f32 %v666, %v1559
        %v1872 = vsub.f32 %v668, %v1559
        %v1873 = vsub.f32 %v1115, %v1559
        %v1874 = vsub.f32 %v1117, %v1559
        %v1875 = vsub.f32 %v672, %v1564
        %v1876 = vsub.f32 %v674, %v1564
        %v1877 = vsub.f32 %v1121, %v1564
        %v1878 = vsub.f32 %v1123, %v1564
        %v1879 = vsub.f32 %v678, %v1569
        %v1880 = vsub.f32 %v680, %v1569
        %v1881 = vsub.f32 %v1127, %v1569
        %v1882 = vsub.f32 %v1129, %v1569
        %v1883 = vsub.f32 %v684, %v1574
        %v1884 = vsub.f32 %v686, %v1574
        %v1885 = vsub.f32 %v1133, %v1574
        %v1886 = vsub.f32 %v1135, %v1574
        %v1887 = vsub.f32 %v690, %v1579
        %v1888 = vsub.f32 %v692, %v1579
        %v1889 = vsub.f32 %v1139, %v1579
        %v1890 = vsub.f32 %v1141, %v1579
        %v1891 = vsub.f32 %v696, %v1584
        %v1892 = vsub.f32 %v698, %v1584
        %v1893 = vsub.f32 %v1145, %v1584
        %v1894 = vsub.f32 %v1147, %v1584
        %v1895 = vsub.f32 %v702, %v1589
        %v1896 = vsub.f32 %v704, %v1589
        %v1897 = vsub.f32 %v1151, %v1589
        %v1898 = vsub.f32 %v1153, %v1589
        %v1899 = vsub.f32 %v708, %v1594
        %v1900 = vsub.f32 %v710, %v1594
        %v1901 = vsub.f32 %v1157, %v1594
        %v1902 = vsub.f32 %v1159, %v1594
        %v1903 = vsub.f32 %v714, %v1599
        %v1904 = vsub.f32 %v716, %v1599
        %v1905 = vsub.f32 %v1163, %v1599
        %v1906 = vsub.f32 %v1165, %v1599
        %v1907 = vsub.f32 %v720, %v1604
        %v1908 = vsub.f32 %v722, %v1604
        %v1909 = vsub.f32 %v1169, %v1604
        %v1910 = vsub.f32 %v1171, %v1604
        %v1911 = vsub.f32 %v726, %v1609
        %v1912 = vsub.f32 %v728, %v1609
        %v1913 = vsub.f32 %v1175, %v1609
        %v1914 = vsub.f32 %v1177, %v1609
        %v1915 = vsub.f32 %v732, %v1614
        %v1916 = vsub.f32 %v734, %v1614
        %v1917 = vsub.f32 %v1181, %v1614
        %v1918 = vsub.f32 %v1183, %v1614
        %v1919 = vsub.f32 %v738, %v1619
        %v1920 = vsub.f32 %v740, %v1619
        %v1921 = vsub.f32 %v1187, %v1619
        %v1922 = vsub.f32 %v1189, %v1619
        %v1923 = vsub.f32 %v744, %v1624
        %v1924 = vsub.f32 %v746, %v1624
        %v1925 = vsub.f32 %v1193, %v1624
        %v1926 = vsub.f32 %v1195, %v1624
        %v1927 = vsub.f32 %v750, %v1629
        %v1928 = vsub.f32 %v752, %v1629
        %v1929 = vsub.f32 %v1199, %v1629
        %v1930 = vsub.f32 %v1201, %v1629
        %v1931 = vsub.f32 %v756, %v1634
        %v1932 = vsub.f32 %v758, %v1634
        %v1933 = vsub.f32 %v1205, %v1634
        %v1934 = vsub.f32 %v1207, %v1634
        %v1935 = vsub.f32 %v762, %v1639
        %v1936 = vsub.f32 %v764, %v1639
        %v1937 = vsub.f32 %v1211, %v1639
        %v1938 = vsub.f32 %v1213, %v1639
        %v1939 = vsub.f32 %v768, %v1644
        %v1940 = vsub.f32 %v770, %v1644
        %v1941 = vsub.f32 %v1217, %v1644
        %v1942 = vsub.f32 %v1219, %v1644
        %v1943 = vsub.f32 %v774, %v1649
        %v1944 = vsub.f32 %v776, %v1649
        %v1945 = vsub.f32 %v1223, %v1649
        %v1946 = vsub.f32 %v1225, %v1649
        %v1947 = vsub.f32 %v780, %v1654
        %v1948 = vsub.f32 %v782, %v1654
        %v1949 = vsub.f32 %v1229, %v1654
        %v1950 = vsub.f32 %v1231, %v1654
        %v1951 = vsub.f32 %v786, %v1659
        %v1952 = vsub.f32 %v788, %v1659
        %v1953 = vsub.f32 %v1235, %v1659
        %v1954 = vsub.f32 %v1237, %v1659
        %v1955 = vsub.f32 %v792, %v1664
        %v1956 = vsub.f32 %v794, %v1664
        %v1957 = vsub.f32 %v1241, %v1664
        %v1958 = vsub.f32 %v1243, %v1664
        %v1959 = vsub.f32 %v798, %v1669
        %v1960 = vsub.f32 %v800, %v1669
        %v1961 = vsub.f32 %v1247, %v1669
        %v1962 = vsub.f32 %v1249, %v1669
        %v1963 = vsub.f32 %v804, %v1674
        %v1964 = vsub.f32 %v806, %v1674
        %v1965 = vsub.f32 %v1253, %v1674
        %v1966 = vsub.f32 %v1255, %v1674
        %v1967 = vsub.f32 %v810, %v1679
        %v1968 = vsub.f32 %v812, %v1679
        %v1969 = vsub.f32 %v1259, %v1679
        %v1970 = vsub.f32 %v1261, %v1679
        %v1971 = vsub.f32 %v816, %v1684
        %v1972 = vsub.f32 %v818, %v1684
        %v1973 = vsub.f32 %v1265, %v1684
        %v1974 = vsub.f32 %v1267, %v1684
        %v1975 = vsub.f32 %v822, %v1689
        %v1976 = vsub.f32 %v824, %v1689
        %v1977 = vsub.f32 %v1271, %v1689
        %v1978 = vsub.f32 %v1273, %v1689
        %v1979 = vsub.f32 %v828, %v1694
        %v1980 = vsub.f32 %v830, %v1694
        %v1981 = vsub.f32 %v1277, %v1694
        %v1982 = vsub.f32 %v1279, %v1694
        %v1983 = vsub.f32 %v834, %v1699
        %v1984 = vsub.f32 %v836, %v1699
        %v1985 = vsub.f32 %v1283, %v1699
        %v1986 = vsub.f32 %v1285, %v1699
        %v1987 = vsub.f32 %v840, %v1704
        %v1988 = vsub.f32 %v842, %v1704
        %v1989 = vsub.f32 %v1289, %v1704
        %v1990 = vsub.f32 %v1291, %v1704
        %v1991 = vsub.f32 %v846, %v1709
        %v1992 = vsub.f32 %v848, %v1709
        %v1993 = vsub.f32 %v1295, %v1709
        %v1994 = vsub.f32 %v1297, %v1709
        %v1995 = vsub.f32 %v852, %v1714
        %v1996 = vsub.f32 %v854, %v1714
        %v1997 = vsub.f32 %v1301, %v1714
        %v1998 = vsub.f32 %v1303, %v1714
        %v1999 = vsub.f32 %v858, %v1719
        %v2000 = vsub.f32 %v860, %v1719
        %v2001 = vsub.f32 %v1307, %v1719
        %v2002 = vsub.f32 %v1309, %v1719
        %v2003 = vsub.f32 %v864, %v1724
        %v2004 = vsub.f32 %v866, %v1724
        %v2005 = vsub.f32 %v1313, %v1724
        %v2006 = vsub.f32 %v1315, %v1724
        %v2007 = vsub.f32 %v870, %v1729
        %v2008 = vsub.f32 %v872, %v1729
        %v2009 = vsub.f32 %v1319, %v1729
        %v2010 = vsub.f32 %v1321, %v1729
        %v2011 = vsub.f32 %v876, %v1734
        %v2012 = vsub.f32 %v878, %v1734
        %v2013 = vsub.f32 %v1325, %v1734
        %v2014 = vsub.f32 %v1327, %v1734
        %v2015 = vsub.f32 %v882, %v1739
        %v2016 = vsub.f32 %v884, %v1739
        %v2017 = vsub.f32 %v1331, %v1739
        %v2018 = vsub.f32 %v1333, %v1739
        %v2019 = vsub.f32 %v888, %v1744
        %v2020 = vsub.f32 %v890, %v1744
        %v2021 = vsub.f32 %v1337, %v1744
        %v2022 = vsub.f32 %v1339, %v1744
        %v2023 = vsub.f32 %v894, %v1749
        %v2024 = vsub.f32 %v896, %v1749
        %v2025 = vsub.f32 %v1343, %v1749
        %v2026 = vsub.f32 %v1345, %v1749
        %v2027 = vsub.f32 %v900, %v1754
        %v2028 = vsub.f32 %v902, %v1754
        %v2029 = vsub.f32 %v1349, %v1754
        %v2030 = vsub.f32 %v1351, %v1754
        %v2031 = vsub.f32 %v906, %v1759
        %v2032 = vsub.f32 %v908, %v1759
        %v2033 = vsub.f32 %v1355, %v1759
        %v2034 = vsub.f32 %v1357, %v1759
        %v2035 = vsub.f32 %v912, %v1764
        %v2036 = vsub.f32 %v914, %v1764
        %v2037 = vsub.f32 %v1361, %v1764
        %v2038 = vsub.f32 %v1363, %v1764
        %v2039 = vsub.f32 %v918, %v1769
        %v2040 = vsub.f32 %v920, %v1769
        %v2041 = vsub.f32 %v1367, %v1769
        %v2042 = vsub.f32 %v1369, %v1769
        %v2043 = vsub.f32 %v924, %v1774
        %v2044 = vsub.f32 %v926, %v1774
        %v2045 = vsub.f32 %v1373, %v1774
        %v2046 = vsub.f32 %v1375, %v1774
        %v2047 = vsub.f32 %v930, %v1779
        %v2048 = vsub.f32 %v932, %v1779
        %v2049 = vsub.f32 %v1379, %v1779
        %v2050 = vsub.f32 %v1381, %v1779
        %v2051 = vsub.f32 %v936, %v1784
        %v2052 = vsub.f32 %v938, %v1784
        %v2053 = vsub.f32 %v1385, %v1784
        %v2054 = vsub.f32 %v1387, %v1784
        %v2055 = vsub.f32 %v942, %v1789
        %v2056 = vsub.f32 %v944, %v1789
        %v2057 = vsub.f32 %v1391, %v1789
        %v2058 = vsub.f32 %v1393, %v1789
        %v2059 = vsub.f32 %v948, %v1794
        %v2060 = vsub.f32 %v950, %v1794
        %v2061 = vsub.f32 %v1397, %v1794
        %v2062 = vsub.f32 %v1399, %v1794
        %v2063 = vsub.f32 %v954, %v1799
        %v2064 = vsub.f32 %v956, %v1799
        %v2065 = vsub.f32 %v1403, %v1799
        %v2066 = vsub.f32 %v1405, %v1799
        %v2067 = vsub.f32 %v960, %v1804
        %v2068 = vsub.f32 %v962, %v1804
        %v2069 = vsub.f32 %v1409, %v1804
        %v2070 = vsub.f32 %v1411, %v1804
        %v2071 = vsub.f32 %v966, %v1809
        %v2072 = vsub.f32 %v968, %v1809
        %v2073 = vsub.f32 %v1415, %v1809
        %v2074 = vsub.f32 %v1417, %v1809
        %v2075 = vsub.f32 %v972, %v1814
        %v2076 = vsub.f32 %v974, %v1814
        %v2077 = vsub.f32 %v1421, %v1814
        %v2078 = vsub.f32 %v1423, %v1814
        %v2079 = vsub.f32 %v978, %v1819
        %v2080 = vsub.f32 %v980, %v1819
        %v2081 = vsub.f32 %v1427, %v1819
        %v2082 = vsub.f32 %v1429, %v1819
        %v2083 = vsub.f32 %v984, %v1824
        %v2084 = vsub.f32 %v986, %v1824
        %v2085 = vsub.f32 %v1433, %v1824
        %v2086 = vsub.f32 %v1435, %v1824
        %v2087 = vsub.f32 %v990, %v1829
        %v2088 = vsub.f32 %v992, %v1829
        %v2089 = vsub.f32 %v1439, %v1829
        %v2090 = vsub.f32 %v1441, %v1829
        %v2091 = vsub.f32 %v996, %v1834
        %v2092 = vsub.f32 %v998, %v1834
        %v2093 = vsub.f32 %v1445, %v1834
        %v2094 = vsub.f32 %v1447, %v1834
        %v2095 = vsub.f32 %v1002, %v1839
        %v2096 = vsub.f32 %v1004, %v1839
        %v2097 = vsub.f32 %v1451, %v1839
        %v2098 = vsub.f32 %v1453, %v1839
        %v2099 = vsub.f32 %v1008, %v1844
        %v2100 = vsub.f32 %v1010, %v1844
        %v2101 = vsub.f32 %v1457, %v1844
        %v2102 = vsub.f32 %v1459, %v1844
        %v2103 = vsub.f32 %v1014, %v1849
        %v2104 = vsub.f32 %v1016, %v1849
        %v2105 = vsub.f32 %v1463, %v1849
        %v2106 = vsub.f32 %v1465, %v1849
        %v2107 = vld [vmem:[%s292] sm:$0xf]
        %v2109 = vlaneseq
        %v2110 = vshrl.u32 %v2109, 7
        %v2111 = vsub.s32 0, %v2110
        %v2112 = vrot.slane %v2107, %v2111
        %v2113 = vlaneseq
        %v2114 = vshrl.u32 %v2113, 7
        %v2115 = vsub.s32 1, %v2114
        %v2116 = vrot.slane %v2107, %v2115
        %v2117 = vlaneseq
        %v2118 = vshrl.u32 %v2117, 7
        %v2119 = vsub.s32 2, %v2118
        %v2120 = vrot.slane %v2107, %v2119
        %v2121 = vlaneseq
        %v2122 = vshrl.u32 %v2121, 7
        %v2123 = vsub.s32 3, %v2122
        %v2124 = vrot.slane %v2107, %v2123
        %v2129 = vsub.f32 %v1851, %v2112
        %v2130 = vsub.f32 %v1852, %v2116
        %v2131 = vsub.f32 %v1853, %v2120
        %v2132 = vsub.f32 %v1854, %v2124
        %v2133 = vsub.f32 %v1855, %v2112
        %v2134 = vsub.f32 %v1856, %v2116
        %v2135 = vsub.f32 %v1857, %v2120
        %v2136 = vsub.f32 %v1858, %v2124
        %v2137 = vsub.f32 %v1859, %v2112
        %v2138 = vsub.f32 %v1860, %v2116
        %v2139 = vsub.f32 %v1861, %v2120
        %v2140 = vsub.f32 %v1862, %v2124
        %v2141 = vsub.f32 %v1863, %v2112
        %v2142 = vsub.f32 %v1864, %v2116
        %v2143 = vsub.f32 %v1865, %v2120
        %v2144 = vsub.f32 %v1866, %v2124
        %v2145 = vsub.f32 %v1867, %v2112
        %v2146 = vsub.f32 %v1868, %v2116
        %v2147 = vsub.f32 %v1869, %v2120
        %v2148 = vsub.f32 %v1870, %v2124
        %v2149 = vsub.f32 %v1871, %v2112
        %v2150 = vsub.f32 %v1872, %v2116
        %v2151 = vsub.f32 %v1873, %v2120
        %v2152 = vsub.f32 %v1874, %v2124
        %v2153 = vsub.f32 %v1875, %v2112
        %v2154 = vsub.f32 %v1876, %v2116
        %v2155 = vsub.f32 %v1877, %v2120
        %v2156 = vsub.f32 %v1878, %v2124
        %v2157 = vsub.f32 %v1879, %v2112
        %v2158 = vsub.f32 %v1880, %v2116
        %v2159 = vsub.f32 %v1881, %v2120
        %v2160 = vsub.f32 %v1882, %v2124
        %v2161 = vsub.f32 %v1883, %v2112
        %v2162 = vsub.f32 %v1884, %v2116
        %v2163 = vsub.f32 %v1885, %v2120
        %v2164 = vsub.f32 %v1886, %v2124
        %v2165 = vsub.f32 %v1887, %v2112
        %v2166 = vsub.f32 %v1888, %v2116
        %v2167 = vsub.f32 %v1889, %v2120
        %v2168 = vsub.f32 %v1890, %v2124
        %v2169 = vsub.f32 %v1891, %v2112
        %v2170 = vsub.f32 %v1892, %v2116
        %v2171 = vsub.f32 %v1893, %v2120
        %v2172 = vsub.f32 %v1894, %v2124
        %v2173 = vsub.f32 %v1895, %v2112
        %v2174 = vsub.f32 %v1896, %v2116
        %v2175 = vsub.f32 %v1897, %v2120
        %v2176 = vsub.f32 %v1898, %v2124
        %v2177 = vsub.f32 %v1899, %v2112
        %v2178 = vsub.f32 %v1900, %v2116
        %v2179 = vsub.f32 %v1901, %v2120
        %v2180 = vsub.f32 %v1902, %v2124
        %v2181 = vsub.f32 %v1903, %v2112
        %v2182 = vsub.f32 %v1904, %v2116
        %v2183 = vsub.f32 %v1905, %v2120
        %v2184 = vsub.f32 %v1906, %v2124
        %v2185 = vsub.f32 %v1907, %v2112
        %v2186 = vsub.f32 %v1908, %v2116
        %v2187 = vsub.f32 %v1909, %v2120
        %v2188 = vsub.f32 %v1910, %v2124
        %v2189 = vsub.f32 %v1911, %v2112
        %v2190 = vsub.f32 %v1912, %v2116
        %v2191 = vsub.f32 %v1913, %v2120
        %v2192 = vsub.f32 %v1914, %v2124
        %v2193 = vsub.f32 %v1915, %v2112
        %v2194 = vsub.f32 %v1916, %v2116
        %v2195 = vsub.f32 %v1917, %v2120
        %v2196 = vsub.f32 %v1918, %v2124
        %v2197 = vsub.f32 %v1919, %v2112
        %v2198 = vsub.f32 %v1920, %v2116
        %v2199 = vsub.f32 %v1921, %v2120
        %v2200 = vsub.f32 %v1922, %v2124
        %v2201 = vsub.f32 %v1923, %v2112
        %v2202 = vsub.f32 %v1924, %v2116
        %v2203 = vsub.f32 %v1925, %v2120
        %v2204 = vsub.f32 %v1926, %v2124
        %v2205 = vsub.f32 %v1927, %v2112
        %v2206 = vsub.f32 %v1928, %v2116
        %v2207 = vsub.f32 %v1929, %v2120
        %v2208 = vsub.f32 %v1930, %v2124
        %v2209 = vsub.f32 %v1931, %v2112
        %v2210 = vsub.f32 %v1932, %v2116
        %v2211 = vsub.f32 %v1933, %v2120
        %v2212 = vsub.f32 %v1934, %v2124
        %v2213 = vsub.f32 %v1935, %v2112
        %v2214 = vsub.f32 %v1936, %v2116
        %v2215 = vsub.f32 %v1937, %v2120
        %v2216 = vsub.f32 %v1938, %v2124
        %v2217 = vsub.f32 %v1939, %v2112
        %v2218 = vsub.f32 %v1940, %v2116
        %v2219 = vsub.f32 %v1941, %v2120
        %v2220 = vsub.f32 %v1942, %v2124
        %v2221 = vsub.f32 %v1943, %v2112
        %v2222 = vsub.f32 %v1944, %v2116
        %v2223 = vsub.f32 %v1945, %v2120
        %v2224 = vsub.f32 %v1946, %v2124
        %v2225 = vsub.f32 %v1947, %v2112
        %v2226 = vsub.f32 %v1948, %v2116
        %v2227 = vsub.f32 %v1949, %v2120
        %v2228 = vsub.f32 %v1950, %v2124
        %v2229 = vsub.f32 %v1951, %v2112
        %v2230 = vsub.f32 %v1952, %v2116
        %v2231 = vsub.f32 %v1953, %v2120
        %v2232 = vsub.f32 %v1954, %v2124
        %v2233 = vsub.f32 %v1955, %v2112
        %v2234 = vsub.f32 %v1956, %v2116
        %v2235 = vsub.f32 %v1957, %v2120
        %v2236 = vsub.f32 %v1958, %v2124
        %v2237 = vsub.f32 %v1959, %v2112
        %v2238 = vsub.f32 %v1960, %v2116
        %v2239 = vsub.f32 %v1961, %v2120
        %v2240 = vsub.f32 %v1962, %v2124
        %v2241 = vsub.f32 %v1963, %v2112
        %v2242 = vsub.f32 %v1964, %v2116
        %v2243 = vsub.f32 %v1965, %v2120
        %v2244 = vsub.f32 %v1966, %v2124
        %v2245 = vsub.f32 %v1967, %v2112
        %v2246 = vsub.f32 %v1968, %v2116
        %v2247 = vsub.f32 %v1969, %v2120
        %v2248 = vsub.f32 %v1970, %v2124
        %v2249 = vsub.f32 %v1971, %v2112
        %v2250 = vsub.f32 %v1972, %v2116
        %v2251 = vsub.f32 %v1973, %v2120
        %v2252 = vsub.f32 %v1974, %v2124
        %v2253 = vsub.f32 %v1975, %v2112
        %v2254 = vsub.f32 %v1976, %v2116
        %v2255 = vsub.f32 %v1977, %v2120
        %v2256 = vsub.f32 %v1978, %v2124
        %v2257 = vsub.f32 %v1979, %v2112
        %v2258 = vsub.f32 %v1980, %v2116
        %v2259 = vsub.f32 %v1981, %v2120
        %v2260 = vsub.f32 %v1982, %v2124
        %v2261 = vsub.f32 %v1983, %v2112
        %v2262 = vsub.f32 %v1984, %v2116
        %v2263 = vsub.f32 %v1985, %v2120
        %v2264 = vsub.f32 %v1986, %v2124
        %v2265 = vsub.f32 %v1987, %v2112
        %v2266 = vsub.f32 %v1988, %v2116
        %v2267 = vsub.f32 %v1989, %v2120
        %v2268 = vsub.f32 %v1990, %v2124
        %v2269 = vsub.f32 %v1991, %v2112
        %v2270 = vsub.f32 %v1992, %v2116
        %v2271 = vsub.f32 %v1993, %v2120
        %v2272 = vsub.f32 %v1994, %v2124
        %v2273 = vsub.f32 %v1995, %v2112
        %v2274 = vsub.f32 %v1996, %v2116
        %v2275 = vsub.f32 %v1997, %v2120
        %v2276 = vsub.f32 %v1998, %v2124
        %v2277 = vsub.f32 %v1999, %v2112
        %v2278 = vsub.f32 %v2000, %v2116
        %v2279 = vsub.f32 %v2001, %v2120
        %v2280 = vsub.f32 %v2002, %v2124
        %v2281 = vsub.f32 %v2003, %v2112
        %v2282 = vsub.f32 %v2004, %v2116
        %v2283 = vsub.f32 %v2005, %v2120
        %v2284 = vsub.f32 %v2006, %v2124
        %v2285 = vsub.f32 %v2007, %v2112
        %v2286 = vsub.f32 %v2008, %v2116
        %v2287 = vsub.f32 %v2009, %v2120
        %v2288 = vsub.f32 %v2010, %v2124
        %v2289 = vsub.f32 %v2011, %v2112
        %v2290 = vsub.f32 %v2012, %v2116
        %v2291 = vsub.f32 %v2013, %v2120
        %v2292 = vsub.f32 %v2014, %v2124
        %v2293 = vsub.f32 %v2015, %v2112
        %v2294 = vsub.f32 %v2016, %v2116
        %v2295 = vsub.f32 %v2017, %v2120
        %v2296 = vsub.f32 %v2018, %v2124
        %v2297 = vsub.f32 %v2019, %v2112
        %v2298 = vsub.f32 %v2020, %v2116
        %v2299 = vsub.f32 %v2021, %v2120
        %v2300 = vsub.f32 %v2022, %v2124
        %v2301 = vsub.f32 %v2023, %v2112
        %v2302 = vsub.f32 %v2024, %v2116
        %v2303 = vsub.f32 %v2025, %v2120
        %v2304 = vsub.f32 %v2026, %v2124
        %v2305 = vsub.f32 %v2027, %v2112
        %v2306 = vsub.f32 %v2028, %v2116
        %v2307 = vsub.f32 %v2029, %v2120
        %v2308 = vsub.f32 %v2030, %v2124
        %v2309 = vsub.f32 %v2031, %v2112
        %v2310 = vsub.f32 %v2032, %v2116
        %v2311 = vsub.f32 %v2033, %v2120
        %v2312 = vsub.f32 %v2034, %v2124
        %v2313 = vsub.f32 %v2035, %v2112
        %v2314 = vsub.f32 %v2036, %v2116
        %v2315 = vsub.f32 %v2037, %v2120
        %v2316 = vsub.f32 %v2038, %v2124
        %v2317 = vsub.f32 %v2039, %v2112
        %v2318 = vsub.f32 %v2040, %v2116
        %v2319 = vsub.f32 %v2041, %v2120
        %v2320 = vsub.f32 %v2042, %v2124
        %v2321 = vsub.f32 %v2043, %v2112
        %v2322 = vsub.f32 %v2044, %v2116
        %v2323 = vsub.f32 %v2045, %v2120
        %v2324 = vsub.f32 %v2046, %v2124
        %v2325 = vsub.f32 %v2047, %v2112
        %v2326 = vsub.f32 %v2048, %v2116
        %v2327 = vsub.f32 %v2049, %v2120
        %v2328 = vsub.f32 %v2050, %v2124
        %v2329 = vsub.f32 %v2051, %v2112
        %v2330 = vsub.f32 %v2052, %v2116
        %v2331 = vsub.f32 %v2053, %v2120
        %v2332 = vsub.f32 %v2054, %v2124
        %v2333 = vsub.f32 %v2055, %v2112
        %v2334 = vsub.f32 %v2056, %v2116
        %v2335 = vsub.f32 %v2057, %v2120
        %v2336 = vsub.f32 %v2058, %v2124
        %v2337 = vsub.f32 %v2059, %v2112
        %v2338 = vsub.f32 %v2060, %v2116
        %v2339 = vsub.f32 %v2061, %v2120
        %v2340 = vsub.f32 %v2062, %v2124
        %v2341 = vsub.f32 %v2063, %v2112
        %v2342 = vsub.f32 %v2064, %v2116
        %v2343 = vsub.f32 %v2065, %v2120
        %v2344 = vsub.f32 %v2066, %v2124
        %v2345 = vsub.f32 %v2067, %v2112
        %v2346 = vsub.f32 %v2068, %v2116
        %v2347 = vsub.f32 %v2069, %v2120
        %v2348 = vsub.f32 %v2070, %v2124
        %v2349 = vsub.f32 %v2071, %v2112
        %v2350 = vsub.f32 %v2072, %v2116
        %v2351 = vsub.f32 %v2073, %v2120
        %v2352 = vsub.f32 %v2074, %v2124
        %v2353 = vsub.f32 %v2075, %v2112
        %v2354 = vsub.f32 %v2076, %v2116
        %v2355 = vsub.f32 %v2077, %v2120
        %v2356 = vsub.f32 %v2078, %v2124
        %v2357 = vsub.f32 %v2079, %v2112
        %v2358 = vsub.f32 %v2080, %v2116
        %v2359 = vsub.f32 %v2081, %v2120
        %v2360 = vsub.f32 %v2082, %v2124
        %v2361 = vsub.f32 %v2083, %v2112
        %v2362 = vsub.f32 %v2084, %v2116
        %v2363 = vsub.f32 %v2085, %v2120
        %v2364 = vsub.f32 %v2086, %v2124
        %v2365 = vsub.f32 %v2087, %v2112
        %v2366 = vsub.f32 %v2088, %v2116
        %v2367 = vsub.f32 %v2089, %v2120
        %v2368 = vsub.f32 %v2090, %v2124
        %v2369 = vsub.f32 %v2091, %v2112
        %v2370 = vsub.f32 %v2092, %v2116
        %v2371 = vsub.f32 %v2093, %v2120
        %v2372 = vsub.f32 %v2094, %v2124
        %v2373 = vsub.f32 %v2095, %v2112
        %v2374 = vsub.f32 %v2096, %v2116
        %v2375 = vsub.f32 %v2097, %v2120
        %v2376 = vsub.f32 %v2098, %v2124
        %v2377 = vsub.f32 %v2099, %v2112
        %v2378 = vsub.f32 %v2100, %v2116
        %v2379 = vsub.f32 %v2101, %v2120
        %v2380 = vsub.f32 %v2102, %v2124
        %v2381 = vsub.f32 %v2103, %v2112
        %v2382 = vsub.f32 %v2104, %v2116
        %v2383 = vsub.f32 %v2105, %v2120
        %v2384 = vsub.f32 %v2106, %v2124
        %v2385 = vmin.f32 %v2129, 0.0
        %v2386 = vmin.f32 %v2130, 0.0
        %v2387 = vmin.f32 %v2131, 0.0
        %v2388 = vmin.f32 %v2132, 0.0
        %v2389 = vmin.f32 %v2133, 0.0
        %v2390 = vmin.f32 %v2134, 0.0
        %v2391 = vmin.f32 %v2135, 0.0
        %v2392 = vmin.f32 %v2136, 0.0
        %v2393 = vmin.f32 %v2137, 0.0
        %v2394 = vmin.f32 %v2138, 0.0
        %v2395 = vmin.f32 %v2139, 0.0
        %v2396 = vmin.f32 %v2140, 0.0
        %v2397 = vmin.f32 %v2141, 0.0
        %v2398 = vmin.f32 %v2142, 0.0
        %v2399 = vmin.f32 %v2143, 0.0
        %v2400 = vmin.f32 %v2144, 0.0
        %v2401 = vmin.f32 %v2145, 0.0
        %v2402 = vmin.f32 %v2146, 0.0
        %v2403 = vmin.f32 %v2147, 0.0
        %v2404 = vmin.f32 %v2148, 0.0
        %v2405 = vmin.f32 %v2149, 0.0
        %v2406 = vmin.f32 %v2150, 0.0
        %v2407 = vmin.f32 %v2151, 0.0
        %v2408 = vmin.f32 %v2152, 0.0
        %v2409 = vmin.f32 %v2153, 0.0
        %v2410 = vmin.f32 %v2154, 0.0
        %v2411 = vmin.f32 %v2155, 0.0
        %v2412 = vmin.f32 %v2156, 0.0
        %v2413 = vmin.f32 %v2157, 0.0
        %v2414 = vmin.f32 %v2158, 0.0
        %v2415 = vmin.f32 %v2159, 0.0
        %v2416 = vmin.f32 %v2160, 0.0
        %v2417 = vmin.f32 %v2161, 0.0
        %v2418 = vmin.f32 %v2162, 0.0
        %v2419 = vmin.f32 %v2163, 0.0
        %v2420 = vmin.f32 %v2164, 0.0
        %v2421 = vmin.f32 %v2165, 0.0
        %v2422 = vmin.f32 %v2166, 0.0
        %v2423 = vmin.f32 %v2167, 0.0
        %v2424 = vmin.f32 %v2168, 0.0
        %v2425 = vmin.f32 %v2169, 0.0
        %v2426 = vmin.f32 %v2170, 0.0
        %v2427 = vmin.f32 %v2171, 0.0
        %v2428 = vmin.f32 %v2172, 0.0
        %v2429 = vmin.f32 %v2173, 0.0
        %v2430 = vmin.f32 %v2174, 0.0
        %v2431 = vmin.f32 %v2175, 0.0
        %v2432 = vmin.f32 %v2176, 0.0
        %v2433 = vmin.f32 %v2177, 0.0
        %v2434 = vmin.f32 %v2178, 0.0
        %v2435 = vmin.f32 %v2179, 0.0
        %v2436 = vmin.f32 %v2180, 0.0
        %v2437 = vmin.f32 %v2181, 0.0
        %v2438 = vmin.f32 %v2182, 0.0
        %v2439 = vmin.f32 %v2183, 0.0
        %v2440 = vmin.f32 %v2184, 0.0
        %v2441 = vmin.f32 %v2185, 0.0
        %v2442 = vmin.f32 %v2186, 0.0
        %v2443 = vmin.f32 %v2187, 0.0
        %v2444 = vmin.f32 %v2188, 0.0
        %v2445 = vmin.f32 %v2189, 0.0
        %v2446 = vmin.f32 %v2190, 0.0
        %v2447 = vmin.f32 %v2191, 0.0
        %v2448 = vmin.f32 %v2192, 0.0
        %v2449 = vmin.f32 %v2193, 0.0
        %v2450 = vmin.f32 %v2194, 0.0
        %v2451 = vmin.f32 %v2195, 0.0
        %v2452 = vmin.f32 %v2196, 0.0
        %v2453 = vmin.f32 %v2197, 0.0
        %v2454 = vmin.f32 %v2198, 0.0
        %v2455 = vmin.f32 %v2199, 0.0
        %v2456 = vmin.f32 %v2200, 0.0
        %v2457 = vmin.f32 %v2201, 0.0
        %v2458 = vmin.f32 %v2202, 0.0
        %v2459 = vmin.f32 %v2203, 0.0
        %v2460 = vmin.f32 %v2204, 0.0
        %v2461 = vmin.f32 %v2205, 0.0
        %v2462 = vmin.f32 %v2206, 0.0
        %v2463 = vmin.f32 %v2207, 0.0
        %v2464 = vmin.f32 %v2208, 0.0
        %v2465 = vmin.f32 %v2209, 0.0
        %v2466 = vmin.f32 %v2210, 0.0
        %v2467 = vmin.f32 %v2211, 0.0
        %v2468 = vmin.f32 %v2212, 0.0
        %v2469 = vmin.f32 %v2213, 0.0
        %v2470 = vmin.f32 %v2214, 0.0
        %v2471 = vmin.f32 %v2215, 0.0
        %v2472 = vmin.f32 %v2216, 0.0
        %v2473 = vmin.f32 %v2217, 0.0
        %v2474 = vmin.f32 %v2218, 0.0
        %v2475 = vmin.f32 %v2219, 0.0
        %v2476 = vmin.f32 %v2220, 0.0
        %v2477 = vmin.f32 %v2221, 0.0
        %v2478 = vmin.f32 %v2222, 0.0
        %v2479 = vmin.f32 %v2223, 0.0
        %v2480 = vmin.f32 %v2224, 0.0
        %v2481 = vmin.f32 %v2225, 0.0
        %v2482 = vmin.f32 %v2226, 0.0
        %v2483 = vmin.f32 %v2227, 0.0
        %v2484 = vmin.f32 %v2228, 0.0
        %v2485 = vmin.f32 %v2229, 0.0
        %v2486 = vmin.f32 %v2230, 0.0
        %v2487 = vmin.f32 %v2231, 0.0
        %v2488 = vmin.f32 %v2232, 0.0
        %v2489 = vmin.f32 %v2233, 0.0
        %v2490 = vmin.f32 %v2234, 0.0
        %v2491 = vmin.f32 %v2235, 0.0
        %v2492 = vmin.f32 %v2236, 0.0
        %v2493 = vmin.f32 %v2237, 0.0
        %v2494 = vmin.f32 %v2238, 0.0
        %v2495 = vmin.f32 %v2239, 0.0
        %v2496 = vmin.f32 %v2240, 0.0
        %v2497 = vmin.f32 %v2241, 0.0
        %v2498 = vmin.f32 %v2242, 0.0
        %v2499 = vmin.f32 %v2243, 0.0
        %v2500 = vmin.f32 %v2244, 0.0
        %v2501 = vmin.f32 %v2245, 0.0
        %v2502 = vmin.f32 %v2246, 0.0
        %v2503 = vmin.f32 %v2247, 0.0
        %v2504 = vmin.f32 %v2248, 0.0
        %v2505 = vmin.f32 %v2249, 0.0
        %v2506 = vmin.f32 %v2250, 0.0
        %v2507 = vmin.f32 %v2251, 0.0
        %v2508 = vmin.f32 %v2252, 0.0
        %v2509 = vmin.f32 %v2253, 0.0
        %v2510 = vmin.f32 %v2254, 0.0
        %v2511 = vmin.f32 %v2255, 0.0
        %v2512 = vmin.f32 %v2256, 0.0
        %v2513 = vmin.f32 %v2257, 0.0
        %v2514 = vmin.f32 %v2258, 0.0
        %v2515 = vmin.f32 %v2259, 0.0
        %v2516 = vmin.f32 %v2260, 0.0
        %v2517 = vmin.f32 %v2261, 0.0
        %v2518 = vmin.f32 %v2262, 0.0
        %v2519 = vmin.f32 %v2263, 0.0
        %v2520 = vmin.f32 %v2264, 0.0
        %v2521 = vmin.f32 %v2265, 0.0
        %v2522 = vmin.f32 %v2266, 0.0
        %v2523 = vmin.f32 %v2267, 0.0
        %v2524 = vmin.f32 %v2268, 0.0
        %v2525 = vmin.f32 %v2269, 0.0
        %v2526 = vmin.f32 %v2270, 0.0
        %v2527 = vmin.f32 %v2271, 0.0
        %v2528 = vmin.f32 %v2272, 0.0
        %v2529 = vmin.f32 %v2273, 0.0
        %v2530 = vmin.f32 %v2274, 0.0
        %v2531 = vmin.f32 %v2275, 0.0
        %v2532 = vmin.f32 %v2276, 0.0
        %v2533 = vmin.f32 %v2277, 0.0
        %v2534 = vmin.f32 %v2278, 0.0
        %v2535 = vmin.f32 %v2279, 0.0
        %v2536 = vmin.f32 %v2280, 0.0
        %v2537 = vmin.f32 %v2281, 0.0
        %v2538 = vmin.f32 %v2282, 0.0
        %v2539 = vmin.f32 %v2283, 0.0
        %v2540 = vmin.f32 %v2284, 0.0
        %v2541 = vmin.f32 %v2285, 0.0
        %v2542 = vmin.f32 %v2286, 0.0
        %v2543 = vmin.f32 %v2287, 0.0
        %v2544 = vmin.f32 %v2288, 0.0
        %v2545 = vmin.f32 %v2289, 0.0
        %v2546 = vmin.f32 %v2290, 0.0
        %v2547 = vmin.f32 %v2291, 0.0
        %v2548 = vmin.f32 %v2292, 0.0
        %v2549 = vmin.f32 %v2293, 0.0
        %v2550 = vmin.f32 %v2294, 0.0
        %v2551 = vmin.f32 %v2295, 0.0
        %v2552 = vmin.f32 %v2296, 0.0
        %v2553 = vmin.f32 %v2297, 0.0
        %v2554 = vmin.f32 %v2298, 0.0
        %v2555 = vmin.f32 %v2299, 0.0
        %v2556 = vmin.f32 %v2300, 0.0
        %v2557 = vmin.f32 %v2301, 0.0
        %v2558 = vmin.f32 %v2302, 0.0
        %v2559 = vmin.f32 %v2303, 0.0
        %v2560 = vmin.f32 %v2304, 0.0
        %v2561 = vmin.f32 %v2305, 0.0
        %v2562 = vmin.f32 %v2306, 0.0
        %v2563 = vmin.f32 %v2307, 0.0
        %v2564 = vmin.f32 %v2308, 0.0
        %v2565 = vmin.f32 %v2309, 0.0
        %v2566 = vmin.f32 %v2310, 0.0
        %v2567 = vmin.f32 %v2311, 0.0
        %v2568 = vmin.f32 %v2312, 0.0
        %v2569 = vmin.f32 %v2313, 0.0
        %v2570 = vmin.f32 %v2314, 0.0
        %v2571 = vmin.f32 %v2315, 0.0
        %v2572 = vmin.f32 %v2316, 0.0
        %v2573 = vmin.f32 %v2317, 0.0
        %v2574 = vmin.f32 %v2318, 0.0
        %v2575 = vmin.f32 %v2319, 0.0
        %v2576 = vmin.f32 %v2320, 0.0
        %v2577 = vmin.f32 %v2321, 0.0
        %v2578 = vmin.f32 %v2322, 0.0
        %v2579 = vmin.f32 %v2323, 0.0
        %v2580 = vmin.f32 %v2324, 0.0
        %v2581 = vmin.f32 %v2325, 0.0
        %v2582 = vmin.f32 %v2326, 0.0
        %v2583 = vmin.f32 %v2327, 0.0
        %v2584 = vmin.f32 %v2328, 0.0
        %v2585 = vmin.f32 %v2329, 0.0
        %v2586 = vmin.f32 %v2330, 0.0
        %v2587 = vmin.f32 %v2331, 0.0
        %v2588 = vmin.f32 %v2332, 0.0
        %v2589 = vmin.f32 %v2333, 0.0
        %v2590 = vmin.f32 %v2334, 0.0
        %v2591 = vmin.f32 %v2335, 0.0
        %v2592 = vmin.f32 %v2336, 0.0
        %v2593 = vmin.f32 %v2337, 0.0
        %v2594 = vmin.f32 %v2338, 0.0
        %v2595 = vmin.f32 %v2339, 0.0
        %v2596 = vmin.f32 %v2340, 0.0
        %v2597 = vmin.f32 %v2341, 0.0
        %v2598 = vmin.f32 %v2342, 0.0
        %v2599 = vmin.f32 %v2343, 0.0
        %v2600 = vmin.f32 %v2344, 0.0
        %v2601 = vmin.f32 %v2345, 0.0
        %v2602 = vmin.f32 %v2346, 0.0
        %v2603 = vmin.f32 %v2347, 0.0
        %v2604 = vmin.f32 %v2348, 0.0
        %v2605 = vmin.f32 %v2349, 0.0
        %v2606 = vmin.f32 %v2350, 0.0
        %v2607 = vmin.f32 %v2351, 0.0
        %v2608 = vmin.f32 %v2352, 0.0
        %v2609 = vmin.f32 %v2353, 0.0
        %v2610 = vmin.f32 %v2354, 0.0
        %v2611 = vmin.f32 %v2355, 0.0
        %v2612 = vmin.f32 %v2356, 0.0
        %v2613 = vmin.f32 %v2357, 0.0
        %v2614 = vmin.f32 %v2358, 0.0
        %v2615 = vmin.f32 %v2359, 0.0
        %v2616 = vmin.f32 %v2360, 0.0
        %v2617 = vmin.f32 %v2361, 0.0
        %v2618 = vmin.f32 %v2362, 0.0
        %v2619 = vmin.f32 %v2363, 0.0
        %v2620 = vmin.f32 %v2364, 0.0
        %v2621 = vmin.f32 %v2365, 0.0
        %v2622 = vmin.f32 %v2366, 0.0
        %v2623 = vmin.f32 %v2367, 0.0
        %v2624 = vmin.f32 %v2368, 0.0
        %v2625 = vmin.f32 %v2369, 0.0
        %v2626 = vmin.f32 %v2370, 0.0
        %v2627 = vmin.f32 %v2371, 0.0
        %v2628 = vmin.f32 %v2372, 0.0
        %v2629 = vmin.f32 %v2373, 0.0
        %v2630 = vmin.f32 %v2374, 0.0
        %v2631 = vmin.f32 %v2375, 0.0
        %v2632 = vmin.f32 %v2376, 0.0
        %v2633 = vmin.f32 %v2377, 0.0
        %v2634 = vmin.f32 %v2378, 0.0
        %v2635 = vmin.f32 %v2379, 0.0
        %v2636 = vmin.f32 %v2380, 0.0
        %v2637 = vmin.f32 %v2381, 0.0
        %v2638 = vmin.f32 %v2382, 0.0
        %v2639 = vmin.f32 %v2383, 0.0
        %v2640 = vmin.f32 %v2384, 0.0
        %v2641 = vmul.f32 %v2385, 1.442695
        %v2642 = vpow.pop %v2641
        %v2643 = vmul.f32 %v2386, 1.442695
        %v2644 = vpow.pop %v2643
        %v2645 = vmul.f32 %v2387, 1.442695
        %v2646 = vpow.pop %v2645
        %v2647 = vmul.f32 %v2388, 1.442695
        %v2648 = vpow.pop %v2647
        %v2649 = vmul.f32 %v2389, 1.442695
        %v2650 = vpow.pop %v2649
        %v2651 = vmul.f32 %v2390, 1.442695
        %v2652 = vpow.pop %v2651
        %v2653 = vmul.f32 %v2391, 1.442695
        %v2654 = vpow.pop %v2653
        %v2655 = vmul.f32 %v2392, 1.442695
        %v2656 = vpow.pop %v2655
        %v2657 = vmul.f32 %v2393, 1.442695
        %v2658 = vpow.pop %v2657
        %v2659 = vmul.f32 %v2394, 1.442695
        %v2660 = vpow.pop %v2659
        %v2661 = vmul.f32 %v2395, 1.442695
        %v2662 = vpow.pop %v2661
        %v2663 = vmul.f32 %v2396, 1.442695
        %v2664 = vpow.pop %v2663
        %v2665 = vmul.f32 %v2397, 1.442695
        %v2666 = vpow.pop %v2665
        %v2667 = vmul.f32 %v2398, 1.442695
        %v2668 = vpow.pop %v2667
        %v2669 = vmul.f32 %v2399, 1.442695
        %v2670 = vpow.pop %v2669
        %v2671 = vmul.f32 %v2400, 1.442695
        %v2672 = vpow.pop %v2671
        %v2673 = vmul.f32 %v2401, 1.442695
        %v2674 = vpow.pop %v2673
        %v2675 = vmul.f32 %v2402, 1.442695
        %v2676 = vpow.pop %v2675
        %v2677 = vmul.f32 %v2403, 1.442695
        %v2678 = vpow.pop %v2677
        %v2679 = vmul.f32 %v2404, 1.442695
        %v2680 = vpow.pop %v2679
        %v2681 = vmul.f32 %v2405, 1.442695
        %v2682 = vpow.pop %v2681
        %v2683 = vmul.f32 %v2406, 1.442695
        %v2684 = vpow.pop %v2683
        %v2685 = vmul.f32 %v2407, 1.442695
        %v2686 = vpow.pop %v2685
        %v2687 = vmul.f32 %v2408, 1.442695
        %v2688 = vpow.pop %v2687
        %v2689 = vmul.f32 %v2409, 1.442695
        %v2690 = vpow.pop %v2689
        %v2691 = vmul.f32 %v2410, 1.442695
        %v2692 = vpow.pop %v2691
        %v2693 = vmul.f32 %v2411, 1.442695
        %v2694 = vpow.pop %v2693
        %v2695 = vmul.f32 %v2412, 1.442695
        %v2696 = vpow.pop %v2695
        %v2697 = vmul.f32 %v2413, 1.442695
        %v2698 = vpow.pop %v2697
        %v2699 = vmul.f32 %v2414, 1.442695
        %v2700 = vpow.pop %v2699
        %v2701 = vmul.f32 %v2415, 1.442695
        %v2702 = vpow.pop %v2701
        %v2703 = vmul.f32 %v2416, 1.442695
        %v2704 = vpow.pop %v2703
        %v2705 = vmul.f32 %v2417, 1.442695
        %v2706 = vpow.pop %v2705
        %v2707 = vmul.f32 %v2418, 1.442695
        %v2708 = vpow.pop %v2707
        %v2709 = vmul.f32 %v2419, 1.442695
        %v2710 = vpow.pop %v2709
        %v2711 = vmul.f32 %v2420, 1.442695
        %v2712 = vpow.pop %v2711
        %v2713 = vmul.f32 %v2421, 1.442695
        %v2714 = vpow.pop %v2713
        %v2715 = vmul.f32 %v2422, 1.442695
        %v2716 = vpow.pop %v2715
        %v2717 = vmul.f32 %v2423, 1.442695
        %v2718 = vpow.pop %v2717
        %v2719 = vmul.f32 %v2424, 1.442695
        %v2720 = vpow.pop %v2719
        %v2721 = vmul.f32 %v2425, 1.442695
        %v2722 = vpow.pop %v2721
        %v2723 = vmul.f32 %v2426, 1.442695
        %v2724 = vpow.pop %v2723
        %v2725 = vmul.f32 %v2427, 1.442695
        %v2726 = vpow.pop %v2725
        %v2727 = vmul.f32 %v2428, 1.442695
        %v2728 = vpow.pop %v2727
        %v2729 = vmul.f32 %v2429, 1.442695
        %v2730 = vpow.pop %v2729
        %v2731 = vmul.f32 %v2430, 1.442695
        %v2732 = vpow.pop %v2731
        %v2733 = vmul.f32 %v2431, 1.442695
        %v2734 = vpow.pop %v2733
        %v2735 = vmul.f32 %v2432, 1.442695
        %v2736 = vpow.pop %v2735
        %v2737 = vmul.f32 %v2433, 1.442695
        %v2738 = vpow.pop %v2737
        %v2739 = vmul.f32 %v2434, 1.442695
        %v2740 = vpow.pop %v2739
        %v2741 = vmul.f32 %v2435, 1.442695
        %v2742 = vpow.pop %v2741
        %v2743 = vmul.f32 %v2436, 1.442695
        %v2744 = vpow.pop %v2743
        %v2745 = vmul.f32 %v2437, 1.442695
        %v2746 = vpow.pop %v2745
        %v2747 = vmul.f32 %v2438, 1.442695
        %v2748 = vpow.pop %v2747
        %v2749 = vmul.f32 %v2439, 1.442695
        %v2750 = vpow.pop %v2749
        %v2751 = vmul.f32 %v2440, 1.442695
        %v2752 = vpow.pop %v2751
        %v2753 = vmul.f32 %v2441, 1.442695
        %v2754 = vpow.pop %v2753
        %v2755 = vmul.f32 %v2442, 1.442695
        %v2756 = vpow.pop %v2755
        %v2757 = vmul.f32 %v2443, 1.442695
        %v2758 = vpow.pop %v2757
        %v2759 = vmul.f32 %v2444, 1.442695
        %v2760 = vpow.pop %v2759
        %v2761 = vmul.f32 %v2445, 1.442695
        %v2762 = vpow.pop %v2761
        %v2763 = vmul.f32 %v2446, 1.442695
        %v2764 = vpow.pop %v2763
        %v2765 = vmul.f32 %v2447, 1.442695
        %v2766 = vpow.pop %v2765
        %v2767 = vmul.f32 %v2448, 1.442695
        %v2768 = vpow.pop %v2767
        %v2769 = vmul.f32 %v2449, 1.442695
        %v2770 = vpow.pop %v2769
        %v2771 = vmul.f32 %v2450, 1.442695
        %v2772 = vpow.pop %v2771
        %v2773 = vmul.f32 %v2451, 1.442695
        %v2774 = vpow.pop %v2773
        %v2775 = vmul.f32 %v2452, 1.442695
        %v2776 = vpow.pop %v2775
        %v2777 = vmul.f32 %v2453, 1.442695
        %v2778 = vpow.pop %v2777
        %v2779 = vmul.f32 %v2454, 1.442695
        %v2780 = vpow.pop %v2779
        %v2781 = vmul.f32 %v2455, 1.442695
        %v2782 = vpow.pop %v2781
        %v2783 = vmul.f32 %v2456, 1.442695
        %v2784 = vpow.pop %v2783
        %v2785 = vmul.f32 %v2457, 1.442695
        %v2786 = vpow.pop %v2785
        %v2787 = vmul.f32 %v2458, 1.442695
        %v2788 = vpow.pop %v2787
        %v2789 = vmul.f32 %v2459, 1.442695
        %v2790 = vpow.pop %v2789
        %v2791 = vmul.f32 %v2460, 1.442695
        %v2792 = vpow.pop %v2791
        %v2793 = vmul.f32 %v2461, 1.442695
        %v2794 = vpow.pop %v2793
        %v2795 = vmul.f32 %v2462, 1.442695
        %v2796 = vpow.pop %v2795
        %v2797 = vmul.f32 %v2463, 1.442695
        %v2798 = vpow.pop %v2797
        %v2799 = vmul.f32 %v2464, 1.442695
        %v2800 = vpow.pop %v2799
        %v2801 = vmul.f32 %v2465, 1.442695
        %v2802 = vpow.pop %v2801
        %v2803 = vmul.f32 %v2466, 1.442695
        %v2804 = vpow.pop %v2803
        %v2805 = vmul.f32 %v2467, 1.442695
        %v2806 = vpow.pop %v2805
        %v2807 = vmul.f32 %v2468, 1.442695
        %v2808 = vpow.pop %v2807
        %v2809 = vmul.f32 %v2469, 1.442695
        %v2810 = vpow.pop %v2809
        %v2811 = vmul.f32 %v2470, 1.442695
        %v2812 = vpow.pop %v2811
        %v2813 = vmul.f32 %v2471, 1.442695
        %v2814 = vpow.pop %v2813
        %v2815 = vmul.f32 %v2472, 1.442695
        %v2816 = vpow.pop %v2815
        %v2817 = vmul.f32 %v2473, 1.442695
        %v2818 = vpow.pop %v2817
        %v2819 = vmul.f32 %v2474, 1.442695
        %v2820 = vpow.pop %v2819
        %v2821 = vmul.f32 %v2475, 1.442695
        %v2822 = vpow.pop %v2821
        %v2823 = vmul.f32 %v2476, 1.442695
        %v2824 = vpow.pop %v2823
        %v2825 = vmul.f32 %v2477, 1.442695
        %v2826 = vpow.pop %v2825
        %v2827 = vmul.f32 %v2478, 1.442695
        %v2828 = vpow.pop %v2827
        %v2829 = vmul.f32 %v2479, 1.442695
        %v2830 = vpow.pop %v2829
        %v2831 = vmul.f32 %v2480, 1.442695
        %v2832 = vpow.pop %v2831
        %v2833 = vmul.f32 %v2481, 1.442695
        %v2834 = vpow.pop %v2833
        %v2835 = vmul.f32 %v2482, 1.442695
        %v2836 = vpow.pop %v2835
        %v2837 = vmul.f32 %v2483, 1.442695
        %v2838 = vpow.pop %v2837
        %v2839 = vmul.f32 %v2484, 1.442695
        %v2840 = vpow.pop %v2839
        %v2841 = vmul.f32 %v2485, 1.442695
        %v2842 = vpow.pop %v2841
        %v2843 = vmul.f32 %v2486, 1.442695
        %v2844 = vpow.pop %v2843
        %v2845 = vmul.f32 %v2487, 1.442695
        %v2846 = vpow.pop %v2845
        %v2847 = vmul.f32 %v2488, 1.442695
        %v2848 = vpow.pop %v2847
        %v2849 = vmul.f32 %v2489, 1.442695
        %v2850 = vpow.pop %v2849
        %v2851 = vmul.f32 %v2490, 1.442695
        %v2852 = vpow.pop %v2851
        %v2853 = vmul.f32 %v2491, 1.442695
        %v2854 = vpow.pop %v2853
        %v2855 = vmul.f32 %v2492, 1.442695
        %v2856 = vpow.pop %v2855
        %v2857 = vmul.f32 %v2493, 1.442695
        %v2858 = vpow.pop %v2857
        %v2859 = vmul.f32 %v2494, 1.442695
        %v2860 = vpow.pop %v2859
        %v2861 = vmul.f32 %v2495, 1.442695
        %v2862 = vpow.pop %v2861
        %v2863 = vmul.f32 %v2496, 1.442695
        %v2864 = vpow.pop %v2863
        %v2865 = vmul.f32 %v2497, 1.442695
        %v2866 = vpow.pop %v2865
        %v2867 = vmul.f32 %v2498, 1.442695
        %v2868 = vpow.pop %v2867
        %v2869 = vmul.f32 %v2499, 1.442695
        %v2870 = vpow.pop %v2869
        %v2871 = vmul.f32 %v2500, 1.442695
        %v2872 = vpow.pop %v2871
        %v2873 = vmul.f32 %v2501, 1.442695
        %v2874 = vpow.pop %v2873
        %v2875 = vmul.f32 %v2502, 1.442695
        %v2876 = vpow.pop %v2875
        %v2877 = vmul.f32 %v2503, 1.442695
        %v2878 = vpow.pop %v2877
        %v2879 = vmul.f32 %v2504, 1.442695
        %v2880 = vpow.pop %v2879
        %v2881 = vmul.f32 %v2505, 1.442695
        %v2882 = vpow.pop %v2881
        %v2883 = vmul.f32 %v2506, 1.442695
        %v2884 = vpow.pop %v2883
        %v2885 = vmul.f32 %v2507, 1.442695
        %v2886 = vpow.pop %v2885
        %v2887 = vmul.f32 %v2508, 1.442695
        %v2888 = vpow.pop %v2887
        %v2889 = vmul.f32 %v2509, 1.442695
        %v2890 = vpow.pop %v2889
        %v2891 = vmul.f32 %v2510, 1.442695
        %v2892 = vpow.pop %v2891
        %v2893 = vmul.f32 %v2511, 1.442695
        %v2894 = vpow.pop %v2893
        %v2895 = vmul.f32 %v2512, 1.442695
        %v2896 = vpow.pop %v2895
        %v2897 = vmul.f32 %v2513, 1.442695
        %v2898 = vpow.pop %v2897
        %v2899 = vmul.f32 %v2514, 1.442695
        %v2900 = vpow.pop %v2899
        %v2901 = vmul.f32 %v2515, 1.442695
        %v2902 = vpow.pop %v2901
        %v2903 = vmul.f32 %v2516, 1.442695
        %v2904 = vpow.pop %v2903
        %v2905 = vmul.f32 %v2517, 1.442695
        %v2906 = vpow.pop %v2905
        %v2907 = vmul.f32 %v2518, 1.442695
        %v2908 = vpow.pop %v2907
        %v2909 = vmul.f32 %v2519, 1.442695
        %v2910 = vpow.pop %v2909
        %v2911 = vmul.f32 %v2520, 1.442695
        %v2912 = vpow.pop %v2911
        %v2913 = vmul.f32 %v2521, 1.442695
        %v2914 = vpow.pop %v2913
        %v2915 = vmul.f32 %v2522, 1.442695
        %v2916 = vpow.pop %v2915
        %v2917 = vmul.f32 %v2523, 1.442695
        %v2918 = vpow.pop %v2917
        %v2919 = vmul.f32 %v2524, 1.442695
        %v2920 = vpow.pop %v2919
        %v2921 = vmul.f32 %v2525, 1.442695
        %v2922 = vpow.pop %v2921
        %v2923 = vmul.f32 %v2526, 1.442695
        %v2924 = vpow.pop %v2923
        %v2925 = vmul.f32 %v2527, 1.442695
        %v2926 = vpow.pop %v2925
        %v2927 = vmul.f32 %v2528, 1.442695
        %v2928 = vpow.pop %v2927
        %v2929 = vmul.f32 %v2529, 1.442695
        %v2930 = vpow.pop %v2929
        %v2931 = vmul.f32 %v2530, 1.442695
        %v2932 = vpow.pop %v2931
        %v2933 = vmul.f32 %v2531, 1.442695
        %v2934 = vpow.pop %v2933
        %v2935 = vmul.f32 %v2532, 1.442695
        %v2936 = vpow.pop %v2935
        %v2937 = vmul.f32 %v2533, 1.442695
        %v2938 = vpow.pop %v2937
        %v2939 = vmul.f32 %v2534, 1.442695
        %v2940 = vpow.pop %v2939
        %v2941 = vmul.f32 %v2535, 1.442695
        %v2942 = vpow.pop %v2941
        %v2943 = vmul.f32 %v2536, 1.442695
        %v2944 = vpow.pop %v2943
        %v2945 = vmul.f32 %v2537, 1.442695
        %v2946 = vpow.pop %v2945
        %v2947 = vmul.f32 %v2538, 1.442695
        %v2948 = vpow.pop %v2947
        %v2949 = vmul.f32 %v2539, 1.442695
        %v2950 = vpow.pop %v2949
        %v2951 = vmul.f32 %v2540, 1.442695
        %v2952 = vpow.pop %v2951
        %v2953 = vmul.f32 %v2541, 1.442695
        %v2954 = vpow.pop %v2953
        %v2955 = vmul.f32 %v2542, 1.442695
        %v2956 = vpow.pop %v2955
        %v2957 = vmul.f32 %v2543, 1.442695
        %v2958 = vpow.pop %v2957
        %v2959 = vmul.f32 %v2544, 1.442695
        %v2960 = vpow.pop %v2959
        %v2961 = vmul.f32 %v2545, 1.442695
        %v2962 = vpow.pop %v2961
        %v2963 = vmul.f32 %v2546, 1.442695
        %v2964 = vpow.pop %v2963
        %v2965 = vmul.f32 %v2547, 1.442695
        %v2966 = vpow.pop %v2965
        %v2967 = vmul.f32 %v2548, 1.442695
        %v2968 = vpow.pop %v2967
        %v2969 = vmul.f32 %v2549, 1.442695
        %v2970 = vpow.pop %v2969
        %v2971 = vmul.f32 %v2550, 1.442695
        %v2972 = vpow.pop %v2971
        %v2973 = vmul.f32 %v2551, 1.442695
        %v2974 = vpow.pop %v2973
        %v2975 = vmul.f32 %v2552, 1.442695
        %v2976 = vpow.pop %v2975
        %v2977 = vmul.f32 %v2553, 1.442695
        %v2978 = vpow.pop %v2977
        %v2979 = vmul.f32 %v2554, 1.442695
        %v2980 = vpow.pop %v2979
        %v2981 = vmul.f32 %v2555, 1.442695
        %v2982 = vpow.pop %v2981
        %v2983 = vmul.f32 %v2556, 1.442695
        %v2984 = vpow.pop %v2983
        %v2985 = vmul.f32 %v2557, 1.442695
        %v2986 = vpow.pop %v2985
        %v2987 = vmul.f32 %v2558, 1.442695
        %v2988 = vpow.pop %v2987
        %v2989 = vmul.f32 %v2559, 1.442695
        %v2990 = vpow.pop %v2989
        %v2991 = vmul.f32 %v2560, 1.442695
        %v2992 = vpow.pop %v2991
        %v2993 = vmul.f32 %v2561, 1.442695
        %v2994 = vpow.pop %v2993
        %v2995 = vmul.f32 %v2562, 1.442695
        %v2996 = vpow.pop %v2995
        %v2997 = vmul.f32 %v2563, 1.442695
        %v2998 = vpow.pop %v2997
        %v2999 = vmul.f32 %v2564, 1.442695
        %v3000 = vpow.pop %v2999
        %v3001 = vmul.f32 %v2565, 1.442695
        %v3002 = vpow.pop %v3001
        %v3003 = vmul.f32 %v2566, 1.442695
        %v3004 = vpow.pop %v3003
        %v3005 = vmul.f32 %v2567, 1.442695
        %v3006 = vpow.pop %v3005
        %v3007 = vmul.f32 %v2568, 1.442695
        %v3008 = vpow.pop %v3007
        %v3009 = vmul.f32 %v2569, 1.442695
        %v3010 = vpow.pop %v3009
        %v3011 = vmul.f32 %v2570, 1.442695
        %v3012 = vpow.pop %v3011
        %v3013 = vmul.f32 %v2571, 1.442695
        %v3014 = vpow.pop %v3013
        %v3015 = vmul.f32 %v2572, 1.442695
        %v3016 = vpow.pop %v3015
        %v3017 = vmul.f32 %v2573, 1.442695
        %v3018 = vpow.pop %v3017
        %v3019 = vmul.f32 %v2574, 1.442695
        %v3020 = vpow.pop %v3019
        %v3021 = vmul.f32 %v2575, 1.442695
        %v3022 = vpow.pop %v3021
        %v3023 = vmul.f32 %v2576, 1.442695
        %v3024 = vpow.pop %v3023
        %v3025 = vmul.f32 %v2577, 1.442695
        %v3026 = vpow.pop %v3025
        %v3027 = vmul.f32 %v2578, 1.442695
        %v3028 = vpow.pop %v3027
        %v3029 = vmul.f32 %v2579, 1.442695
        %v3030 = vpow.pop %v3029
        %v3031 = vmul.f32 %v2580, 1.442695
        %v3032 = vpow.pop %v3031
        %v3033 = vmul.f32 %v2581, 1.442695
        %v3034 = vpow.pop %v3033
        %v3035 = vmul.f32 %v2582, 1.442695
        %v3036 = vpow.pop %v3035
        %v3037 = vmul.f32 %v2583, 1.442695
        %v3038 = vpow.pop %v3037
        %v3039 = vmul.f32 %v2584, 1.442695
        %v3040 = vpow.pop %v3039
        %v3041 = vmul.f32 %v2585, 1.442695
        %v3042 = vpow.pop %v3041
        %v3043 = vmul.f32 %v2586, 1.442695
        %v3044 = vpow.pop %v3043
        %v3045 = vmul.f32 %v2587, 1.442695
        %v3046 = vpow.pop %v3045
        %v3047 = vmul.f32 %v2588, 1.442695
        %v3048 = vpow.pop %v3047
        %v3049 = vmul.f32 %v2589, 1.442695
        %v3050 = vpow.pop %v3049
        %v3051 = vmul.f32 %v2590, 1.442695
        %v3052 = vpow.pop %v3051
        %v3053 = vmul.f32 %v2591, 1.442695
        %v3054 = vpow.pop %v3053
        %v3055 = vmul.f32 %v2592, 1.442695
        %v3056 = vpow.pop %v3055
        %v3057 = vmul.f32 %v2593, 1.442695
        %v3058 = vpow.pop %v3057
        %v3059 = vmul.f32 %v2594, 1.442695
        %v3060 = vpow.pop %v3059
        %v3061 = vmul.f32 %v2595, 1.442695
        %v3062 = vpow.pop %v3061
        %v3063 = vmul.f32 %v2596, 1.442695
        %v3064 = vpow.pop %v3063
        %v3065 = vmul.f32 %v2597, 1.442695
        %v3066 = vpow.pop %v3065
        %v3067 = vmul.f32 %v2598, 1.442695
        %v3068 = vpow.pop %v3067
        %v3069 = vmul.f32 %v2599, 1.442695
        %v3070 = vpow.pop %v3069
        %v3071 = vmul.f32 %v2600, 1.442695
        %v3072 = vpow.pop %v3071
        %v3073 = vmul.f32 %v2601, 1.442695
        %v3074 = vpow.pop %v3073
        %v3075 = vmul.f32 %v2602, 1.442695
        %v3076 = vpow.pop %v3075
        %v3077 = vmul.f32 %v2603, 1.442695
        %v3078 = vpow.pop %v3077
        %v3079 = vmul.f32 %v2604, 1.442695
        %v3080 = vpow.pop %v3079
        %v3081 = vmul.f32 %v2605, 1.442695
        %v3082 = vpow.pop %v3081
        %v3083 = vmul.f32 %v2606, 1.442695
        %v3084 = vpow.pop %v3083
        %v3085 = vmul.f32 %v2607, 1.442695
        %v3086 = vpow.pop %v3085
        %v3087 = vmul.f32 %v2608, 1.442695
        %v3088 = vpow.pop %v3087
        %v3089 = vmul.f32 %v2609, 1.442695
        %v3090 = vpow.pop %v3089
        %v3091 = vmul.f32 %v2610, 1.442695
        %v3092 = vpow.pop %v3091
        %v3093 = vmul.f32 %v2611, 1.442695
        %v3094 = vpow.pop %v3093
        %v3095 = vmul.f32 %v2612, 1.442695
        %v3096 = vpow.pop %v3095
        %v3097 = vmul.f32 %v2613, 1.442695
        %v3098 = vpow.pop %v3097
        %v3099 = vmul.f32 %v2614, 1.442695
        %v3100 = vpow.pop %v3099
        %v3101 = vmul.f32 %v2615, 1.442695
        %v3102 = vpow.pop %v3101
        %v3103 = vmul.f32 %v2616, 1.442695
        %v3104 = vpow.pop %v3103
        %v3105 = vmul.f32 %v2617, 1.442695
        %v3106 = vpow.pop %v3105
        %v3107 = vmul.f32 %v2618, 1.442695
        %v3108 = vpow.pop %v3107
        %v3109 = vmul.f32 %v2619, 1.442695
        %v3110 = vpow.pop %v3109
        %v3111 = vmul.f32 %v2620, 1.442695
        %v3112 = vpow.pop %v3111
        %v3113 = vmul.f32 %v2621, 1.442695
        %v3114 = vpow.pop %v3113
        %v3115 = vmul.f32 %v2622, 1.442695
        %v3116 = vpow.pop %v3115
        %v3117 = vmul.f32 %v2623, 1.442695
        %v3118 = vpow.pop %v3117
        %v3119 = vmul.f32 %v2624, 1.442695
        %v3120 = vpow.pop %v3119
        %v3121 = vmul.f32 %v2625, 1.442695
        %v3122 = vpow.pop %v3121
        %v3123 = vmul.f32 %v2626, 1.442695
        %v3124 = vpow.pop %v3123
        %v3125 = vmul.f32 %v2627, 1.442695
        %v3126 = vpow.pop %v3125
        %v3127 = vmul.f32 %v2628, 1.442695
        %v3128 = vpow.pop %v3127
        %v3129 = vmul.f32 %v2629, 1.442695
        %v3130 = vpow.pop %v3129
        %v3131 = vmul.f32 %v2630, 1.442695
        %v3132 = vpow.pop %v3131
        %v3133 = vmul.f32 %v2631, 1.442695
        %v3134 = vpow.pop %v3133
        %v3135 = vmul.f32 %v2632, 1.442695
        %v3136 = vpow.pop %v3135
        %v3137 = vmul.f32 %v2633, 1.442695
        %v3138 = vpow.pop %v3137
        %v3139 = vmul.f32 %v2634, 1.442695
        %v3140 = vpow.pop %v3139
        %v3141 = vmul.f32 %v2635, 1.442695
        %v3142 = vpow.pop %v3141
        %v3143 = vmul.f32 %v2636, 1.442695
        %v3144 = vpow.pop %v3143
        %v3145 = vmul.f32 %v2637, 1.442695
        %v3146 = vpow.pop %v3145
        %v3147 = vmul.f32 %v2638, 1.442695
        %v3148 = vpow.pop %v3147
        %v3149 = vmul.f32 %v2639, 1.442695
        %v3150 = vpow.pop %v3149
        %v3151 = vmul.f32 %v2640, 1.442695
        %v3152 = vpow.pop %v3151
        %3153 = vst [vmem:[%s275] sm:$0xff] %v2642
        %3154 = vst [vmem:[%s275 + $0x8] sm:$0xff] %v2644
        %3155 = vst [vmem:[%s275 + $0x10] sm:$0xff] %v2646
        %3156 = vst [vmem:[%s275 + $0x18] sm:$0xff] %v2648
        %3157 = vst [vmem:[%s275 + $0x20] sm:$0xff] %v2650
        %3158 = vst [vmem:[%s275 + $0x28] sm:$0xff] %v2652
        %3159 = vst [vmem:[%s275 + $0x30] sm:$0xff] %v2654
        %3160 = vst [vmem:[%s275 + $0x38] sm:$0xff] %v2656
        %3161 = vst [vmem:[%s275 + $0x40] sm:$0xff] %v2658
        %3162 = vst [vmem:[%s275 + $0x48] sm:$0xff] %v2660
        %3163 = vst [vmem:[%s275 + $0x50] sm:$0xff] %v2662
        %3164 = vst [vmem:[%s275 + $0x58] sm:$0xff] %v2664
        %3165 = vst [vmem:[%s275 + $0x60] sm:$0xff] %v2666
        %3166 = vst [vmem:[%s275 + $0x68] sm:$0xff] %v2668
        %3167 = vst [vmem:[%s275 + $0x70] sm:$0xff] %v2670
        %3168 = vst [vmem:[%s275 + $0x78] sm:$0xff] %v2672
        %3169 = vst [vmem:[%s275 + $0x80] sm:$0xff] %v2674
        %3170 = vst [vmem:[%s275 + $0x88] sm:$0xff] %v2676
        %3171 = vst [vmem:[%s275 + $0x90] sm:$0xff] %v2678
        %3172 = vst [vmem:[%s275 + $0x98] sm:$0xff] %v2680
        %3173 = vst [vmem:[%s275 + $0xa0] sm:$0xff] %v2682
        %3174 = vst [vmem:[%s275 + $0xa8] sm:$0xff] %v2684
        %3175 = vst [vmem:[%s275 + $0xb0] sm:$0xff] %v2686
        %3176 = vst [vmem:[%s275 + $0xb8] sm:$0xff] %v2688
        %3177 = vst [vmem:[%s275 + $0xc0] sm:$0xff] %v2690
        %3178 = vst [vmem:[%s275 + $0xc8] sm:$0xff] %v2692
        %3179 = vst [vmem:[%s275 + $0xd0] sm:$0xff] %v2694
        %3180 = vst [vmem:[%s275 + $0xd8] sm:$0xff] %v2696
        %3181 = vst [vmem:[%s275 + $0xe0] sm:$0xff] %v2698
        %3182 = vst [vmem:[%s275 + $0xe8] sm:$0xff] %v2700
        %3183 = vst [vmem:[%s275 + $0xf0] sm:$0xff] %v2702
        %3184 = vst [vmem:[%s275 + $0xf8] sm:$0xff] %v2704
        %3185 = vst [vmem:[%s275 + $0x100] sm:$0xff] %v2706
        %3186 = vst [vmem:[%s275 + $0x108] sm:$0xff] %v2708
        %3187 = vst [vmem:[%s275 + $0x110] sm:$0xff] %v2710
        %3188 = vst [vmem:[%s275 + $0x118] sm:$0xff] %v2712
        %3189 = vst [vmem:[%s275 + $0x120] sm:$0xff] %v2714
        %3190 = vst [vmem:[%s275 + $0x128] sm:$0xff] %v2716
        %3191 = vst [vmem:[%s275 + $0x130] sm:$0xff] %v2718
        %3192 = vst [vmem:[%s275 + $0x138] sm:$0xff] %v2720
        %3193 = vst [vmem:[%s275 + $0x140] sm:$0xff] %v2722
        %3194 = vst [vmem:[%s275 + $0x148] sm:$0xff] %v2724
        %3195 = vst [vmem:[%s275 + $0x150] sm:$0xff] %v2726
        %3196 = vst [vmem:[%s275 + $0x158] sm:$0xff] %v2728
        %3197 = vst [vmem:[%s275 + $0x160] sm:$0xff] %v2730
        %3198 = vst [vmem:[%s275 + $0x168] sm:$0xff] %v2732
        %3199 = vst [vmem:[%s275 + $0x170] sm:$0xff] %v2734
        %3200 = vst [vmem:[%s275 + $0x178] sm:$0xff] %v2736
        %3201 = vst [vmem:[%s275 + $0x180] sm:$0xff] %v2738
        %3202 = vst [vmem:[%s275 + $0x188] sm:$0xff] %v2740
        %3203 = vst [vmem:[%s275 + $0x190] sm:$0xff] %v2742
        %3204 = vst [vmem:[%s275 + $0x198] sm:$0xff] %v2744
        %3205 = vst [vmem:[%s275 + $0x1a0] sm:$0xff] %v2746
        %3206 = vst [vmem:[%s275 + $0x1a8] sm:$0xff] %v2748
        %3207 = vst [vmem:[%s275 + $0x1b0] sm:$0xff] %v2750
        %3208 = vst [vmem:[%s275 + $0x1b8] sm:$0xff] %v2752
        %3209 = vst [vmem:[%s275 + $0x1c0] sm:$0xff] %v2754
        %3210 = vst [vmem:[%s275 + $0x1c8] sm:$0xff] %v2756
        %3211 = vst [vmem:[%s275 + $0x1d0] sm:$0xff] %v2758
        %3212 = vst [vmem:[%s275 + $0x1d8] sm:$0xff] %v2760
        %3213 = vst [vmem:[%s275 + $0x1e0] sm:$0xff] %v2762
        %3214 = vst [vmem:[%s275 + $0x1e8] sm:$0xff] %v2764
        %3215 = vst [vmem:[%s275 + $0x1f0] sm:$0xff] %v2766
        %3216 = vst [vmem:[%s275 + $0x1f8] sm:$0xff] %v2768
        %3217 = vst [vmem:[%s275 + $0x200] sm:$0xff] %v2770
        %3218 = vst [vmem:[%s275 + $0x208] sm:$0xff] %v2772
        %3219 = vst [vmem:[%s275 + $0x210] sm:$0xff] %v2774
        %3220 = vst [vmem:[%s275 + $0x218] sm:$0xff] %v2776
        %3221 = vst [vmem:[%s275 + $0x220] sm:$0xff] %v2778
        %3222 = vst [vmem:[%s275 + $0x228] sm:$0xff] %v2780
        %3223 = vst [vmem:[%s275 + $0x230] sm:$0xff] %v2782
        %3224 = vst [vmem:[%s275 + $0x238] sm:$0xff] %v2784
        %3225 = vst [vmem:[%s275 + $0x240] sm:$0xff] %v2786
        %3226 = vst [vmem:[%s275 + $0x248] sm:$0xff] %v2788
        %3227 = vst [vmem:[%s275 + $0x250] sm:$0xff] %v2790
        %3228 = vst [vmem:[%s275 + $0x258] sm:$0xff] %v2792
        %3229 = vst [vmem:[%s275 + $0x260] sm:$0xff] %v2794
        %3230 = vst [vmem:[%s275 + $0x268] sm:$0xff] %v2796
        %3231 = vst [vmem:[%s275 + $0x270] sm:$0xff] %v2798
        %3232 = vst [vmem:[%s275 + $0x278] sm:$0xff] %v2800
        %3233 = vst [vmem:[%s275 + $0x280] sm:$0xff] %v2802
        %3234 = vst [vmem:[%s275 + $0x288] sm:$0xff] %v2804
        %3235 = vst [vmem:[%s275 + $0x290] sm:$0xff] %v2806
        %3236 = vst [vmem:[%s275 + $0x298] sm:$0xff] %v2808
        %3237 = vst [vmem:[%s275 + $0x2a0] sm:$0xff] %v2810
        %3238 = vst [vmem:[%s275 + $0x2a8] sm:$0xff] %v2812
        %3239 = vst [vmem:[%s275 + $0x2b0] sm:$0xff] %v2814
        %3240 = vst [vmem:[%s275 + $0x2b8] sm:$0xff] %v2816
        %3241 = vst [vmem:[%s275 + $0x2c0] sm:$0xff] %v2818
        %3242 = vst [vmem:[%s275 + $0x2c8] sm:$0xff] %v2820
        %3243 = vst [vmem:[%s275 + $0x2d0] sm:$0xff] %v2822
        %3244 = vst [vmem:[%s275 + $0x2d8] sm:$0xff] %v2824
        %3245 = vst [vmem:[%s275 + $0x2e0] sm:$0xff] %v2826
        %3246 = vst [vmem:[%s275 + $0x2e8] sm:$0xff] %v2828
        %3247 = vst [vmem:[%s275 + $0x2f0] sm:$0xff] %v2830
        %3248 = vst [vmem:[%s275 + $0x2f8] sm:$0xff] %v2832
        %3249 = vst [vmem:[%s275 + $0x300] sm:$0xff] %v2834
        %3250 = vst [vmem:[%s275 + $0x308] sm:$0xff] %v2836
        %3251 = vst [vmem:[%s275 + $0x310] sm:$0xff] %v2838
        %3252 = vst [vmem:[%s275 + $0x318] sm:$0xff] %v2840
        %3253 = vst [vmem:[%s275 + $0x320] sm:$0xff] %v2842
        %3254 = vst [vmem:[%s275 + $0x328] sm:$0xff] %v2844
        %3255 = vst [vmem:[%s275 + $0x330] sm:$0xff] %v2846
        %3256 = vst [vmem:[%s275 + $0x338] sm:$0xff] %v2848
        %3257 = vst [vmem:[%s275 + $0x340] sm:$0xff] %v2850
        %3258 = vst [vmem:[%s275 + $0x348] sm:$0xff] %v2852
        %3259 = vst [vmem:[%s275 + $0x350] sm:$0xff] %v2854
        %3260 = vst [vmem:[%s275 + $0x358] sm:$0xff] %v2856
        %3261 = vst [vmem:[%s275 + $0x360] sm:$0xff] %v2858
        %3262 = vst [vmem:[%s275 + $0x368] sm:$0xff] %v2860
        %3263 = vst [vmem:[%s275 + $0x370] sm:$0xff] %v2862
        %3264 = vst [vmem:[%s275 + $0x378] sm:$0xff] %v2864
        %3265 = vst [vmem:[%s275 + $0x380] sm:$0xff] %v2866
        %3266 = vst [vmem:[%s275 + $0x388] sm:$0xff] %v2868
        %3267 = vst [vmem:[%s275 + $0x390] sm:$0xff] %v2870
        %3268 = vst [vmem:[%s275 + $0x398] sm:$0xff] %v2872
        %3269 = vst [vmem:[%s275 + $0x3a0] sm:$0xff] %v2874
        %3270 = vst [vmem:[%s275 + $0x3a8] sm:$0xff] %v2876
        %3271 = vst [vmem:[%s275 + $0x3b0] sm:$0xff] %v2878
        %3272 = vst [vmem:[%s275 + $0x3b8] sm:$0xff] %v2880
        %3273 = vst [vmem:[%s275 + $0x3c0] sm:$0xff] %v2882
        %3274 = vst [vmem:[%s275 + $0x3c8] sm:$0xff] %v2884
        %3275 = vst [vmem:[%s275 + $0x3d0] sm:$0xff] %v2886
        %3276 = vst [vmem:[%s275 + $0x3d8] sm:$0xff] %v2888
        %3277 = vst [vmem:[%s275 + $0x3e0] sm:$0xff] %v2890
        %3278 = vst [vmem:[%s275 + $0x3e8] sm:$0xff] %v2892
        %3279 = vst [vmem:[%s275 + $0x3f0] sm:$0xff] %v2894
        %3280 = vst [vmem:[%s275 + $0x3f8] sm:$0xff] %v2896
        %3281 = vst [vmem:[%s275 + $0x400] sm:$0xff] %v2898
        %3282 = vst [vmem:[%s275 + $0x408] sm:$0xff] %v2900
        %3283 = vst [vmem:[%s275 + $0x410] sm:$0xff] %v2902
        %3284 = vst [vmem:[%s275 + $0x418] sm:$0xff] %v2904
        %3285 = vst [vmem:[%s275 + $0x420] sm:$0xff] %v2906
        %3286 = vst [vmem:[%s275 + $0x428] sm:$0xff] %v2908
        %3287 = vst [vmem:[%s275 + $0x430] sm:$0xff] %v2910
        %3288 = vst [vmem:[%s275 + $0x438] sm:$0xff] %v2912
        %3289 = vst [vmem:[%s275 + $0x440] sm:$0xff] %v2914
        %3290 = vst [vmem:[%s275 + $0x448] sm:$0xff] %v2916
        %3291 = vst [vmem:[%s275 + $0x450] sm:$0xff] %v2918
        %3292 = vst [vmem:[%s275 + $0x458] sm:$0xff] %v2920
        %3293 = vst [vmem:[%s275 + $0x460] sm:$0xff] %v2922
        %3294 = vst [vmem:[%s275 + $0x468] sm:$0xff] %v2924
        %3295 = vst [vmem:[%s275 + $0x470] sm:$0xff] %v2926
        %3296 = vst [vmem:[%s275 + $0x478] sm:$0xff] %v2928
        %3297 = vst [vmem:[%s275 + $0x480] sm:$0xff] %v2930
        %3298 = vst [vmem:[%s275 + $0x488] sm:$0xff] %v2932
        %3299 = vst [vmem:[%s275 + $0x490] sm:$0xff] %v2934
        %3300 = vst [vmem:[%s275 + $0x498] sm:$0xff] %v2936
        %3301 = vst [vmem:[%s275 + $0x4a0] sm:$0xff] %v2938
        %3302 = vst [vmem:[%s275 + $0x4a8] sm:$0xff] %v2940
        %3303 = vst [vmem:[%s275 + $0x4b0] sm:$0xff] %v2942
        %3304 = vst [vmem:[%s275 + $0x4b8] sm:$0xff] %v2944
        %3305 = vst [vmem:[%s275 + $0x4c0] sm:$0xff] %v2946
        %3306 = vst [vmem:[%s275 + $0x4c8] sm:$0xff] %v2948
        %3307 = vst [vmem:[%s275 + $0x4d0] sm:$0xff] %v2950
        %3308 = vst [vmem:[%s275 + $0x4d8] sm:$0xff] %v2952
        %3309 = vst [vmem:[%s275 + $0x4e0] sm:$0xff] %v2954
        %3310 = vst [vmem:[%s275 + $0x4e8] sm:$0xff] %v2956
        %3311 = vst [vmem:[%s275 + $0x4f0] sm:$0xff] %v2958
        %3312 = vst [vmem:[%s275 + $0x4f8] sm:$0xff] %v2960
        %3313 = vst [vmem:[%s275 + $0x500] sm:$0xff] %v2962
        %3314 = vst [vmem:[%s275 + $0x508] sm:$0xff] %v2964
        %3315 = vst [vmem:[%s275 + $0x510] sm:$0xff] %v2966
        %3316 = vst [vmem:[%s275 + $0x518] sm:$0xff] %v2968
        %3317 = vst [vmem:[%s275 + $0x520] sm:$0xff] %v2970
        %3318 = vst [vmem:[%s275 + $0x528] sm:$0xff] %v2972
        %3319 = vst [vmem:[%s275 + $0x530] sm:$0xff] %v2974
        %3320 = vst [vmem:[%s275 + $0x538] sm:$0xff] %v2976
        %3321 = vst [vmem:[%s275 + $0x540] sm:$0xff] %v2978
        %3322 = vst [vmem:[%s275 + $0x548] sm:$0xff] %v2980
        %3323 = vst [vmem:[%s275 + $0x550] sm:$0xff] %v2982
        %3324 = vst [vmem:[%s275 + $0x558] sm:$0xff] %v2984
        %3325 = vst [vmem:[%s275 + $0x560] sm:$0xff] %v2986
        %3326 = vst [vmem:[%s275 + $0x568] sm:$0xff] %v2988
        %3327 = vst [vmem:[%s275 + $0x570] sm:$0xff] %v2990
        %3328 = vst [vmem:[%s275 + $0x578] sm:$0xff] %v2992
        %3329 = vst [vmem:[%s275 + $0x580] sm:$0xff] %v2994
        %3330 = vst [vmem:[%s275 + $0x588] sm:$0xff] %v2996
        %3331 = vst [vmem:[%s275 + $0x590] sm:$0xff] %v2998
        %3332 = vst [vmem:[%s275 + $0x598] sm:$0xff] %v3000
        %3333 = vst [vmem:[%s275 + $0x5a0] sm:$0xff] %v3002
        %3334 = vst [vmem:[%s275 + $0x5a8] sm:$0xff] %v3004
        %3335 = vst [vmem:[%s275 + $0x5b0] sm:$0xff] %v3006
        %3336 = vst [vmem:[%s275 + $0x5b8] sm:$0xff] %v3008
        %3337 = vst [vmem:[%s275 + $0x5c0] sm:$0xff] %v3010
        %3338 = vst [vmem:[%s275 + $0x5c8] sm:$0xff] %v3012
        %3339 = vst [vmem:[%s275 + $0x5d0] sm:$0xff] %v3014
        %3340 = vst [vmem:[%s275 + $0x5d8] sm:$0xff] %v3016
        %3341 = vst [vmem:[%s275 + $0x5e0] sm:$0xff] %v3018
        %3342 = vst [vmem:[%s275 + $0x5e8] sm:$0xff] %v3020
        %3343 = vst [vmem:[%s275 + $0x5f0] sm:$0xff] %v3022
        %3344 = vst [vmem:[%s275 + $0x5f8] sm:$0xff] %v3024
        %3345 = vst [vmem:[%s275 + $0x600] sm:$0xff] %v3026
        %3346 = vst [vmem:[%s275 + $0x608] sm:$0xff] %v3028
        %3347 = vst [vmem:[%s275 + $0x610] sm:$0xff] %v3030
        %3348 = vst [vmem:[%s275 + $0x618] sm:$0xff] %v3032
        %3349 = vst [vmem:[%s275 + $0x620] sm:$0xff] %v3034
        %3350 = vst [vmem:[%s275 + $0x628] sm:$0xff] %v3036
        %3351 = vst [vmem:[%s275 + $0x630] sm:$0xff] %v3038
        %3352 = vst [vmem:[%s275 + $0x638] sm:$0xff] %v3040
        %3353 = vst [vmem:[%s275 + $0x640] sm:$0xff] %v3042
        %3354 = vst [vmem:[%s275 + $0x648] sm:$0xff] %v3044
        %3355 = vst [vmem:[%s275 + $0x650] sm:$0xff] %v3046
        %3356 = vst [vmem:[%s275 + $0x658] sm:$0xff] %v3048
        %3357 = vst [vmem:[%s275 + $0x660] sm:$0xff] %v3050
        %3358 = vst [vmem:[%s275 + $0x668] sm:$0xff] %v3052
        %3359 = vst [vmem:[%s275 + $0x670] sm:$0xff] %v3054
        %3360 = vst [vmem:[%s275 + $0x678] sm:$0xff] %v3056
        %3361 = vst [vmem:[%s275 + $0x680] sm:$0xff] %v3058
        %3362 = vst [vmem:[%s275 + $0x688] sm:$0xff] %v3060
        %3363 = vst [vmem:[%s275 + $0x690] sm:$0xff] %v3062
        %3364 = vst [vmem:[%s275 + $0x698] sm:$0xff] %v3064
        %3365 = vst [vmem:[%s275 + $0x6a0] sm:$0xff] %v3066
        %3366 = vst [vmem:[%s275 + $0x6a8] sm:$0xff] %v3068
        %3367 = vst [vmem:[%s275 + $0x6b0] sm:$0xff] %v3070
        %3368 = vst [vmem:[%s275 + $0x6b8] sm:$0xff] %v3072
        %3369 = vst [vmem:[%s275 + $0x6c0] sm:$0xff] %v3074
        %3370 = vst [vmem:[%s275 + $0x6c8] sm:$0xff] %v3076
        %3371 = vst [vmem:[%s275 + $0x6d0] sm:$0xff] %v3078
        %3372 = vst [vmem:[%s275 + $0x6d8] sm:$0xff] %v3080
        %3373 = vst [vmem:[%s275 + $0x6e0] sm:$0xff] %v3082
        %3374 = vst [vmem:[%s275 + $0x6e8] sm:$0xff] %v3084
        %3375 = vst [vmem:[%s275 + $0x6f0] sm:$0xff] %v3086
        %3376 = vst [vmem:[%s275 + $0x6f8] sm:$0xff] %v3088
        %3377 = vst [vmem:[%s275 + $0x700] sm:$0xff] %v3090
        %3378 = vst [vmem:[%s275 + $0x708] sm:$0xff] %v3092
        %3379 = vst [vmem:[%s275 + $0x710] sm:$0xff] %v3094
        %3380 = vst [vmem:[%s275 + $0x718] sm:$0xff] %v3096
        %3381 = vst [vmem:[%s275 + $0x720] sm:$0xff] %v3098
        %3382 = vst [vmem:[%s275 + $0x728] sm:$0xff] %v3100
        %3383 = vst [vmem:[%s275 + $0x730] sm:$0xff] %v3102
        %3384 = vst [vmem:[%s275 + $0x738] sm:$0xff] %v3104
        %3385 = vst [vmem:[%s275 + $0x740] sm:$0xff] %v3106
        %3386 = vst [vmem:[%s275 + $0x748] sm:$0xff] %v3108
        %3387 = vst [vmem:[%s275 + $0x750] sm:$0xff] %v3110
        %3388 = vst [vmem:[%s275 + $0x758] sm:$0xff] %v3112
        %3389 = vst [vmem:[%s275 + $0x760] sm:$0xff] %v3114
        %3390 = vst [vmem:[%s275 + $0x768] sm:$0xff] %v3116
        %3391 = vst [vmem:[%s275 + $0x770] sm:$0xff] %v3118
        %3392 = vst [vmem:[%s275 + $0x778] sm:$0xff] %v3120
        %3393 = vst [vmem:[%s275 + $0x780] sm:$0xff] %v3122
        %3394 = vst [vmem:[%s275 + $0x788] sm:$0xff] %v3124
        %3395 = vst [vmem:[%s275 + $0x790] sm:$0xff] %v3126
        %3396 = vst [vmem:[%s275 + $0x798] sm:$0xff] %v3128
        %3397 = vst [vmem:[%s275 + $0x7a0] sm:$0xff] %v3130
        %3398 = vst [vmem:[%s275 + $0x7a8] sm:$0xff] %v3132
        %3399 = vst [vmem:[%s275 + $0x7b0] sm:$0xff] %v3134
        %3400 = vst [vmem:[%s275 + $0x7b8] sm:$0xff] %v3136
        %3401 = vst [vmem:[%s275 + $0x7c0] sm:$0xff] %v3138
        %3402 = vst [vmem:[%s275 + $0x7c8] sm:$0xff] %v3140
        %3403 = vst [vmem:[%s275 + $0x7d0] sm:$0xff] %v3142
        %3404 = vst [vmem:[%s275 + $0x7d8] sm:$0xff] %v3144
        %3405 = vst [vmem:[%s275 + $0x7e0] sm:$0xff] %v3146
        %3406 = vst [vmem:[%s275 + $0x7e8] sm:$0xff] %v3148
        %3407 = vst [vmem:[%s275 + $0x7f0] sm:$0xff] %v3150
        %3408 = vst [vmem:[%s275 + $0x7f8] sm:$0xff] %v3152
        %s3409 = sand.u32 %s147, 1
        %s3410 = scalar_lea.sflag [#allocation4], %s3409
        %s3411 = sand.u32 %s147, 1
        %s3412 = smul.addr %s3411, 2048
        %s3413 = scalar_lea.vmem [#allocation5], %s3412
        // Predicated region
        $region41: #{matern_gram.1} parent=35 // pred_check
          %p3414 = pneg %p157
        $region42: #{matern_gram.1} parent=35 // pred_check_branch
          %3416 = sbr.rel (%p3414) target = $region44
        $region43: #{matern_gram.1} parent=35 // pred_region
          %s3417 = smul.u32 64, %s25
          %s3418 = smul.u32 4, %s26
          %s3420 = ssub.s32 32768, 32768
          %3421 = vsyncadd %s3410, %s3420
          %s3422 = smul.addr %s3417, 8
          %s3423 = sadd.s32 %s3418, %s3422
          %s3424 = smul.addr %s3423, 128
          %s3425 = scalar_lea.hbm %s4, %s3424
          %s3426 = sshll.u32 %s3413, 4
          %s3427 = int_to_ptr.vmem [resolvable:$true] %s3426
          %3432 = dma.vmem_to_hbm [thread:$0]  %s3427, 32768, %s3425, %s3410, 512, 1024, 32
        $region44: #{matern_gram.1} parent=35 // pred_fallthru
          _
      $region36: #{matern_gram.1} parent=5 // pred_fallthru
        _
      %p3433 = scmp.le.s32.totalorder 2, %s16
      // Predicated region
      $region45: #{matern_gram.1} parent=5 // pred_check
        %p3434 = pneg %p3433
      $region46: #{matern_gram.1} parent=5 // pred_check_branch
        %3436 = sbr.rel (%p3434) target = $region48
      $region47: #{matern_gram.1} parent=5 // pred_region
        %s3437 = ssub.s32 %s16, 2
        // Predicated region
        $region49: #{matern_gram.1} parent=47 // pred_check
          %p3438 = pneg %p163
        $region50: #{matern_gram.1} parent=47 // pred_check_branch
          %3440 = sbr.rel (%p3438) target = $region52
        $region51: #{matern_gram.1} parent=47 // pred_region
          %s3441 = sand.u32 %s148, 1
          %s3442 = scalar_lea.sflag [#allocation4], %s3441
          %s3443 = sand.u32 %s148, 1
          %s3444 = smul.addr %s3443, 2048
          %s3445 = scalar_lea.vmem [#allocation5], %s3444
          %3446 = dma.done %s3442, 32768
        $region52: #{matern_gram.1} parent=47 // pred_fallthru
          _
      $region48: #{matern_gram.1} parent=5 // pred_fallthru
        _
    $region6: #{matern_gram.1} parent=1 // loop_footer
      %s20 = sadd.s32 1, %s16
    $region7: #{matern_gram.1} parent=1 // loop_footer_branch
      %15 = sbr.rel target = $region3
    $region8: #{matern_gram.1} parent=1 // loop_exit
      _
    %3447 = vsyncpa [#allocation3], 1
    %s3448 = scalar_lea.sflag [#allocation3], 1
    %3449 = vsyncpa %s3448, 1
    %3450 = vsyncpa [#allocation4], 1
    %s3451 = scalar_lea.sflag [#allocation4], 1
    %3452 = vsyncpa %s3451, 1

</llo_original>
